<compile_context>
chip_gen: v7x
topology: tpu7x:2x2x1
jax: 0.10.0
libtpu: 0.0.40
codegen_flags: <defaults>
</compile_context>

<pallas_src>
import functools

import jax
import jax.numpy as jnp
from jax.experimental import pallas as pl
from jax.experimental.pallas import tpu as pltpu


def _round_up(x, m):
    return ((x + m - 1) // m) * m


def pure_gnn_kernel(
    x_ref,          # [G*Np, NDp]     f32   node features, G graphs stacked
    gather_oh_ref,  # [2*G*Ep, G*Np]  bf16  rows [:G*Ep]=src one-hot, rest dst
    scatter_t_ref,  # [G*Np, G*Ep]    bf16  pre-transposed dst one-hot
    w_ref,          # [NDp + L*2H, H] f32   packed: embedding weight + GNN layers
    b_ref,          # [1 + L, H]      f32   packed: embedding bias + GNN biases
    embeds_ref,     # out: [G*Np, H]  f32
    *,
    num_layers: int,
    hidden: int,
    node_dim_pad: int,
    ge_pad: int,    # G * Ep  (graphs-per-step * padded edge count)
):
    f32 = jnp.float32
    bf16 = jnp.bfloat16
    H = hidden

    # node_embedding: Linear -> ReLU (Dropout is identity at inference)
    h = jnp.maximum(
        jnp.dot(x_ref[...], w_ref[:node_dim_pad, :], preferred_element_type=f32)
        + b_ref[0:1, :],
        0.0,
    )                                                      # [G*Np, H] f32

    # one-hot operands are loop-invariant: load once, keep in vregs/VMEM.
    gather_oh = gather_oh_ref[...]                         # [2*G*Ep, G*Np] bf16
    scatter_t = scatter_t_ref[...]                         # [G*Np, G*Ep]   bf16

    # GNN message-passing layers (unrolled: num_layers is static)
    for i in range(num_layers):
        base = node_dim_pad + i * 2 * H
        w_top = w_ref[base:base + H, :]                    # [H, H]
        w_bot = w_ref[base + H:base + 2 * H, :]            # [H, H]
        b_i = b_ref[1 + i:2 + i, :]                        # [1, H]

        # fused gather of h[src] and h[dst] for every graph in the block
        # (block-diagonal one-hot keeps graphs independent).
        gathered = jnp.dot(gather_oh, h.astype(bf16),
                           preferred_element_type=f32)     # [2*G*Ep, H]
        src_h = gathered[:ge_pad, :]                       # [G*Ep, H]
        dst_h = gathered[ge_pad:, :]                       # [G*Ep, H]

        # cat([h_src, h_dst]) @ W  ==  h_src @ W_top + h_dst @ W_bot
        msg = jnp.maximum(
            jnp.dot(src_h, w_top, preferred_element_type=f32)
            + jnp.dot(dst_h, w_bot, preferred_element_type=f32)
            + b_i,
            0.0,
        )                                                  # [G*Ep, H]

        # scatter-add into destination nodes (pre-transposed one-hot ->
        # plain last-dim contraction, no in-loop relayout) + residual.
        h = h + jnp.dot(scatter_t, msg.astype(bf16),
                        preferred_element_type=f32)        # [G*Np, H]

    embeds_ref[...] = h


def pure_gnn_forward(node_features, edge_index, params, *, num_layers, hidden,
                     graphs_per_step=None):
    """Batched forward.

    node_features: [B, N, node_dim] f32; edge_index: [B, 2, E] int32.
    Returns (pred [B, 1], embeds [B, N, hidden]); each graph matches
    PureGNN.forward on that graph.
    """
    (w_emb, b_emb, w_gnn, b_gnn, w_p1, b_p1, w_p2, b_p2) = params
    b_graphs, n, node_dim = node_features.shape
    e = edge_index.shape[-1]
    assert hidden % 8 == 0, "hidden must be sublane-aligned for packed weights"

    f32 = jnp.float32
    bf16 = jnp.bfloat16

    n_pad = _round_up(n, 8)
    nd_pad = _round_up(node_dim, 8)
    e_pad = max(16, _round_up(e, 16))

    if graphs_per_step is None:
        # aim for a lane-dense (>=128 wide) stacked node axis per grid step,
        # but keep >=2 grid steps when there are >=2 graphs so both v7x
        # TensorCores get work ("parallel" is a no-op on single-TC v5e/v6e).
        graphs_per_step = max(1, min(b_graphs, pl.cdiv(128, n_pad)))
        if b_graphs >= 2:
            graphs_per_step = max(1, min(graphs_per_step, b_graphs // 2))
    gps = graphs_per_step

    pad_graphs = (-b_graphs) % gps
    b_total = b_graphs + pad_graphs
    num_steps = b_total // gps

    # --- pad / stack node features (padded nodes/graphs are zero, inert) ----
    x = node_features.astype(f32)
    x = jnp.pad(x, ((0, pad_graphs), (0, n_pad - n), (0, nd_pad - node_dim)))
    x_flat = x.reshape(num_steps * gps * n_pad, nd_pad)

    # --- edge indices -> block-diagonal one-hot operands --------------------
    src = edge_index[:, 0, :]
    dst = edge_index[:, 1, :]
    if pad_graphs:
        fill = jnp.full((pad_graphs, e), -1, edge_index.dtype)
        src = jnp.concatenate([src, fill], axis=0)
        dst = jnp.concatenate([dst, fill], axis=0)
    if e_pad > e:
        fill = jnp.full((b_total, e_pad - e), -1, edge_index.dtype)
        src = jnp.concatenate([src, fill], axis=-1)
        dst = jnp.concatenate([dst, fill], axis=-1)

    offs = ((jnp.arange(b_total) % gps) * n_pad).astype(src.dtype)[:, None]

    def _globalize(idx):
        valid = (idx >= 0) & (idx < n)        # invalid/padded -> all-zero one-hot
        return jnp.where(valid, idx + offs, -1)

    src_g = _globalize(src).reshape(num_steps, gps * e_pad)
    dst_g = _globalize(dst).reshape(num_steps, gps * e_pad)

    # one-hot values are exactly 0/1 -> bf16 is lossless and halves DMA bytes
    gather_idx = jnp.concatenate([src_g, dst_g], axis=1)        # [S, 2*G*Ep]
    gather_oh = jax.nn.one_hot(gather_idx, gps * n_pad, dtype=bf16)
    gather_oh = gather_oh.reshape(num_steps * 2 * gps * e_pad, gps * n_pad)

    # pre-transposed dst one-hot (built once by XLA, never re-laid-out in-loop)
    dst_oh = jax.nn.one_hot(dst_g, gps * n_pad, dtype=bf16)     # [S, G*Ep, G*Np]
    scatter_t = jnp.swapaxes(dst_oh, 1, 2).reshape(
        num_steps * gps * n_pad, gps * e_pad)

    # --- consolidate the small weights into two packed operands -------------
    w_emb_p = jnp.pad(w_emb.astype(f32), ((0, nd_pad - node_dim), (0, 0)))
    w_pack = jnp.concatenate(
        [w_emb_p, w_gnn.astype(f32).reshape(num_layers * 2 * hidden, hidden)],
        axis=0)                                                 # [NDp+L*2H, H]
    b_pack = jnp.concatenate([b_emb.astype(f32), b_gnn.astype(f32)], axis=0)

    kernel = functools.partial(
        pure_gnn_kernel,
        num_layers=num_layers,
        hidden=hidden,
        node_dim_pad=nd_pad,
        ge_pad=gps * e_pad,
    )

    grid_spec = pltpu.PrefetchScalarGridSpec(
        num_scalar_prefetch=0,
        grid=(num_steps,),
        in_specs=[
            pl.BlockSpec((gps * n_pad, nd_pad), lambda s: (s, 0)),
            pl.BlockSpec((2 * gps * e_pad, gps * n_pad), lambda s: (s, 0)),
            pl.BlockSpec((gps * n_pad, gps * e_pad), lambda s: (s, 0)),
            pl.BlockSpec(w_pack.shape, lambda s: (0, 0)),
            pl.BlockSpec(b_pack.shape, lambda s: (0, 0)),
        ],
        out_specs=pl.BlockSpec((gps * n_pad, hidden), lambda s: (s, 0)),
    )

    embeds_flat = pl.pallas_call(
        kernel,
        out_shape=jax.ShapeDtypeStruct((num_steps * gps * n_pad, hidden), f32),
        grid_spec=grid_spec,
        compiler_params=pltpu.CompilerParams(
            dimension_semantics=("parallel",),   # graph-step axis -> both TCs on v7x
            # blocks here are well under 1 MiB; explicit limit keeps us inside
            # the v7x 64 MiB (32 MiB scoped) budget as graph sizes grow.
            vmem_limit_bytes=32 * 1024 * 1024,
        ),
    )(x_flat, gather_oh, scatter_t, w_pack, b_pack)

    embeds = embeds_flat.reshape(b_total, n_pad, hidden)[:b_graphs, :n, :]

    # Tiny predictor head stays in XLA on the returned embeds: avoids a
    # (1,1,1) scalar output pipeline and an in-kernel cross-sublane mean.
    q = embeds[:, 0, :]                          # [B, H]
    mean_h = jnp.mean(embeds, axis=1)            # [B, H]  (true N, no pad rows)
    cat = jnp.concatenate([q, mean_h], axis=-1)  # [B, 2H]
    p1 = jax.nn.relu(cat @ w_p1 + b_p1[0])
    pred = p1 @ w_p2 + b_p2[0]                   # [B, 1]
    return pred, embeds


def reference_forward(node_features, edge_index, params, *, num_layers):
    """Pure-JAX single-graph reference mirroring the PyTorch loop semantics."""
    (w_emb, b_emb, w_gnn, b_gnn, w_p1, b_p1, w_p2, b_p2) = params
    src, dst = edge_index[0], edge_index[1]
    h = jax.nn.relu(node_features @ w_emb + b_emb[0])
    for i in range(num_layers):
        cat = jnp.concatenate([h[src], h[dst]], axis=-1)
        msg = jax.nn.relu(cat @ w_gnn[i] + b_gnn[i])
        messages = jnp.zeros_like(h).at[dst].add(msg)
        h = h + messages
    cat2 = jnp.concatenate([h[0], h.mean(axis=0)], axis=0)
    p1 = jax.nn.relu(cat2 @ w_p1 + b_p1[0])
    pred = p1 @ w_p2 + b_p2[0]
    return pred, h


if __name__ == "__main__":
    NODE_DIM = 8
    HIDDEN = 32
    NUM_LAYERS = 3
    N_NODES = 16
    N_EDGES = 24
    N_GRAPHS = 16   # default batching: 8 graphs per grid step -> 2 parallel steps

    key = jax.random.PRNGKey(0)
    keys = jax.random.split(key, 12)

    node_features = jax.random.normal(
        keys[0], (N_GRAPHS, N_NODES, NODE_DIM), jnp.float32
    )
    src = jax.random.randint(keys[1], (N_GRAPHS, N_EDGES), 0, N_NODES, jnp.int32)
    dst = jax.random.randint(keys[2], (N_GRAPHS, N_EDGES), 0, N_NODES, jnp.int32)
    edge_index = jnp.stack([src, dst], axis=1)                 # [B, 2, E]

    # Deterministic synthetic parameters (pre-transposed to [in, out]).
    s = 0.1
    w_emb = s * jax.random.normal(keys[3], (NODE_DIM, HIDDEN), jnp.float32)
    b_emb = s * jax.random.normal(keys[4], (1, HIDDEN), jnp.float32)
    w_gnn = s * jax.random.normal(keys[5], (NUM_LAYERS, 2 * HIDDEN, HIDDEN), jnp.float32)
    b_gnn = s * jax.random.normal(keys[6], (NUM_LAYERS, HIDDEN), jnp.float32)
    w_p1 = s * jax.random.normal(keys[7], (2 * HIDDEN, HIDDEN), jnp.float32)
    b_p1 = s * jax.random.normal(keys[8], (1, HIDDEN), jnp.float32)
    w_p2 = s * jax.random.normal(keys[9], (HIDDEN, 1), jnp.float32)
    b_p2 = s * jax.random.normal(keys[10], (1, 1), jnp.float32)
    params = (w_emb, b_emb, w_gnn, b_gnn, w_p1, b_p1, w_p2, b_p2)

    pred, embeds = pure_gnn_forward(
        node_features, edge_index, params, num_layers=NUM_LAYERS, hidden=HIDDEN
    )
    jax.block_until_ready((pred, embeds))

    assert pred.shape == (N_GRAPHS, 1)
    assert embeds.shape == (N_GRAPHS, N_NODES, HIDDEN)

    # bf16 gather/scatter operands -> slightly looser tolerance than pure f32.
    for g in range(N_GRAPHS):
        ref_pred, ref_embeds = reference_forward(
            node_features[g], edge_index[g], params, num_layers=NUM_LAYERS
        )
        assert jnp.allclose(pred[g], ref_pred, atol=5e-2, rtol=5e-2), (
            g, pred[g], ref_pred)
        assert jnp.allclose(embeds[g], ref_embeds, atol=5e-2, rtol=5e-2), g

    print("KERNEL_OK")
</pallas_src>

<mosaic_0001>
module attributes {stable_mosaic.version = 11 : i64} {
  func.func @pure_gnn_kernel(%arg0: i32, %arg1: memref<128x8xf32, #tpu.memory_space<vmem>>, %arg2: memref<512x128xbf16, #tpu.memory_space<vmem>>, %arg3: memref<128x256xbf16, #tpu.memory_space<vmem>>, %arg4: memref<200x32xf32, #tpu.memory_space<vmem>>, %arg5: memref<4x32xf32, #tpu.memory_space<vmem>>, %arg6: memref<128x32xf32, #tpu.memory_space<vmem>>) attributes {dimension_semantics = [#tpu.dimension_semantics<parallel>], iteration_bounds = array<i64: 2>, scalar_prefetch = 0 : i64, scratch_operands = 0 : i64, tpu.core_type = #tpu.core_type<tc>, window_params = [{transform_indices = @transform_0, window_bounds = array<i64: 128, 8>}, {transform_indices = @transform_1, window_bounds = array<i64: 512, 128>}, {transform_indices = @transform_2, window_bounds = array<i64: 128, 256>}, {pipeline_mode = #tpu.pipeline_mode<synchronous>, transform_indices = @transform_3, window_bounds = array<i64: 200, 32>}, {pipeline_mode = #tpu.pipeline_mode<synchronous>, transform_indices = @transform_4, window_bounds = array<i64: 4, 32>}, {transform_indices = @transform_5, window_bounds = array<i64: 128, 32>}]} {
    %c0 = arith.constant 0 : index
    %c0_0 = arith.constant 0 : index
    %0 = vector.load %arg1[%c0, %c0_0] : memref<128x8xf32, #tpu.memory_space<vmem>>, vector<128x8xf32>
    %c0_1 = arith.constant 0 : index
    %c0_2 = arith.constant 0 : index
    %1 = vector.load %arg4[%c0_1, %c0_2] : memref<200x32xf32, #tpu.memory_space<vmem>>, vector<8x32xf32>
    %cst = arith.constant dense<0.000000e+00> : vector<128x32xf32>
    %2 = tpu.matmul %0, %1, %cst {dimension_numbers = #tpu.dot_dimension_numbers<[1], [0], [0], [1], [0, 0, 1, 1], [], []>} : vector<128x8xf32>, vector<8x32xf32>, vector<128x32xf32> -> vector<128x32xf32>
    %c0_3 = arith.constant 0 : index
    %c0_4 = arith.constant 0 : index
    %3 = vector.load %arg5[%c0_3, %c0_4] : memref<4x32xf32, #tpu.memory_space<vmem>>, vector<1x32xf32>
    %4 = vector.broadcast %3 : vector<1x32xf32> to vector<128x32xf32>
    %5 = arith.addf %2, %4 : vector<128x32xf32>
    %cst_5 = arith.constant 0.000000e+00 : f32
    %6 = vector.broadcast %cst_5 : f32 to vector<128x32xf32>
    %7 = arith.maximumf %5, %6 : vector<128x32xf32>
    %c0_6 = arith.constant 0 : index
    %c0_7 = arith.constant 0 : index
    %8 = vector.load %arg2[%c0_6, %c0_7] : memref<512x128xbf16, #tpu.memory_space<vmem>>, vector<512x128xbf16>
    %c0_8 = arith.constant 0 : index
    %c0_9 = arith.constant 0 : index
    %9 = vector.load %arg3[%c0_8, %c0_9] : memref<128x256xbf16, #tpu.memory_space<vmem>>, vector<128x256xbf16>
    %c8 = arith.constant 8 : index
    %c0_10 = arith.constant 0 : index
    %10 = vector.load %arg4[%c8, %c0_10] : memref<200x32xf32, #tpu.memory_space<vmem>>, vector<32x32xf32>
    %c40 = arith.constant 40 : index
    %c0_11 = arith.constant 0 : index
    %11 = vector.load %arg4[%c40, %c0_11] : memref<200x32xf32, #tpu.memory_space<vmem>>, vector<32x32xf32>
    %c1 = arith.constant 1 : index
    %c0_12 = arith.constant 0 : index
    %12 = vector.load %arg5[%c1, %c0_12] : memref<4x32xf32, #tpu.memory_space<vmem>>, vector<1x32xf32>
    %13 = arith.truncf %7 : vector<128x32xf32> to vector<128x32xbf16>
    %cst_13 = arith.constant dense<0.000000e+00> : vector<512x32xf32>
    %14 = tpu.matmul %8, %13, %cst_13 {dimension_numbers = #tpu.dot_dimension_numbers<[1], [0], [0], [1], [0, 0, 1, 1], [], []>} : vector<512x128xbf16>, vector<128x32xbf16>, vector<512x32xf32> -> vector<512x32xf32>
    %15 = vector.extract_strided_slice %14 {offsets = [0, 0], sizes = [256, 32], strides = [1, 1]} : vector<512x32xf32> to vector<256x32xf32>
    %16 = vector.extract_strided_slice %14 {offsets = [256, 0], sizes = [256, 32], strides = [1, 1]} : vector<512x32xf32> to vector<256x32xf32>
    %cst_14 = arith.constant dense<0.000000e+00> : vector<256x32xf32>
    %17 = tpu.matmul %15, %10, %cst_14 {dimension_numbers = #tpu.dot_dimension_numbers<[1], [0], [0], [1], [0, 0, 1, 1], [], []>} : vector<256x32xf32>, vector<32x32xf32>, vector<256x32xf32> -> vector<256x32xf32>
    %cst_15 = arith.constant dense<0.000000e+00> : vector<256x32xf32>
    %18 = tpu.matmul %16, %11, %cst_15 {dimension_numbers = #tpu.dot_dimension_numbers<[1], [0], [0], [1], [0, 0, 1, 1], [], []>} : vector<256x32xf32>, vector<32x32xf32>, vector<256x32xf32> -> vector<256x32xf32>
    %19 = arith.addf %17, %18 : vector<256x32xf32>
    %20 = vector.broadcast %12 : vector<1x32xf32> to vector<256x32xf32>
    %21 = arith.addf %19, %20 : vector<256x32xf32>
    %cst_16 = arith.constant 0.000000e+00 : f32
    %22 = vector.broadcast %cst_16 : f32 to vector<256x32xf32>
    %23 = arith.maximumf %21, %22 : vector<256x32xf32>
    %24 = arith.truncf %23 : vector<256x32xf32> to vector<256x32xbf16>
    %cst_17 = arith.constant dense<0.000000e+00> : vector<128x32xf32>
    %25 = tpu.matmul %9, %24, %cst_17 {dimension_numbers = #tpu.dot_dimension_numbers<[1], [0], [0], [1], [0, 0, 1, 1], [], []>} : vector<128x256xbf16>, vector<256x32xbf16>, vector<128x32xf32> -> vector<128x32xf32>
    %26 = arith.addf %7, %25 : vector<128x32xf32>
    %c72 = arith.constant 72 : index
    %c0_18 = arith.constant 0 : index
    %27 = vector.load %arg4[%c72, %c0_18] : memref<200x32xf32, #tpu.memory_space<vmem>>, vector<32x32xf32>
    %c104 = arith.constant 104 : index
    %c0_19 = arith.constant 0 : index
    %28 = vector.load %arg4[%c104, %c0_19] : memref<200x32xf32, #tpu.memory_space<vmem>>, vector<32x32xf32>
    %c2 = arith.constant 2 : index
    %c0_20 = arith.constant 0 : index
    %29 = vector.load %arg5[%c2, %c0_20] : memref<4x32xf32, #tpu.memory_space<vmem>>, vector<1x32xf32>
    %30 = arith.truncf %26 : vector<128x32xf32> to vector<128x32xbf16>
    %cst_21 = arith.constant dense<0.000000e+00> : vector<512x32xf32>
    %31 = tpu.matmul %8, %30, %cst_21 {dimension_numbers = #tpu.dot_dimension_numbers<[1], [0], [0], [1], [0, 0, 1, 1], [], []>} : vector<512x128xbf16>, vector<128x32xbf16>, vector<512x32xf32> -> vector<512x32xf32>
    %32 = vector.extract_strided_slice %31 {offsets = [0, 0], sizes = [256, 32], strides = [1, 1]} : vector<512x32xf32> to vector<256x32xf32>
    %33 = vector.extract_strided_slice %31 {offsets = [256, 0], sizes = [256, 32], strides = [1, 1]} : vector<512x32xf32> to vector<256x32xf32>
    %cst_22 = arith.constant dense<0.000000e+00> : vector<256x32xf32>
    %34 = tpu.matmul %32, %27, %cst_22 {dimension_numbers = #tpu.dot_dimension_numbers<[1], [0], [0], [1], [0, 0, 1, 1], [], []>} : vector<256x32xf32>, vector<32x32xf32>, vector<256x32xf32> -> vector<256x32xf32>
    %cst_23 = arith.constant dense<0.000000e+00> : vector<256x32xf32>
    %35 = tpu.matmul %33, %28, %cst_23 {dimension_numbers = #tpu.dot_dimension_numbers<[1], [0], [0], [1], [0, 0, 1, 1], [], []>} : vector<256x32xf32>, vector<32x32xf32>, vector<256x32xf32> -> vector<256x32xf32>
    %36 = arith.addf %34, %35 : vector<256x32xf32>
    %37 = vector.broadcast %29 : vector<1x32xf32> to vector<256x32xf32>
    %38 = arith.addf %36, %37 : vector<256x32xf32>
    %cst_24 = arith.constant 0.000000e+00 : f32
    %39 = vector.broadcast %cst_24 : f32 to vector<256x32xf32>
    %40 = arith.maximumf %38, %39 : vector<256x32xf32>
    %41 = arith.truncf %40 : vector<256x32xf32> to vector<256x32xbf16>
    %cst_25 = arith.constant dense<0.000000e+00> : vector<128x32xf32>
    %42 = tpu.matmul %9, %41, %cst_25 {dimension_numbers = #tpu.dot_dimension_numbers<[1], [0], [0], [1], [0, 0, 1, 1], [], []>} : vector<128x256xbf16>, vector<256x32xbf16>, vector<128x32xf32> -> vector<128x32xf32>
    %43 = arith.addf %26, %42 : vector<128x32xf32>
    %c136 = arith.constant 136 : index
    %c0_26 = arith.constant 0 : index
    %44 = vector.load %arg4[%c136, %c0_26] : memref<200x32xf32, #tpu.memory_space<vmem>>, vector<32x32xf32>
    %c168 = arith.constant 168 : index
    %c0_27 = arith.constant 0 : index
    %45 = vector.load %arg4[%c168, %c0_27] : memref<200x32xf32, #tpu.memory_space<vmem>>, vector<32x32xf32>
    %c3 = arith.constant 3 : index
    %c0_28 = arith.constant 0 : index
    %46 = vector.load %arg5[%c3, %c0_28] : memref<4x32xf32, #tpu.memory_space<vmem>>, vector<1x32xf32>
    %47 = arith.truncf %43 : vector<128x32xf32> to vector<128x32xbf16>
    %cst_29 = arith.constant dense<0.000000e+00> : vector<512x32xf32>
    %48 = tpu.matmul %8, %47, %cst_29 {dimension_numbers = #tpu.dot_dimension_numbers<[1], [0], [0], [1], [0, 0, 1, 1], [], []>} : vector<512x128xbf16>, vector<128x32xbf16>, vector<512x32xf32> -> vector<512x32xf32>
    %49 = vector.extract_strided_slice %48 {offsets = [0, 0], sizes = [256, 32], strides = [1, 1]} : vector<512x32xf32> to vector<256x32xf32>
    %50 = vector.extract_strided_slice %48 {offsets = [256, 0], sizes = [256, 32], strides = [1, 1]} : vector<512x32xf32> to vector<256x32xf32>
    %cst_30 = arith.constant dense<0.000000e+00> : vector<256x32xf32>
    %51 = tpu.matmul %49, %44, %cst_30 {dimension_numbers = #tpu.dot_dimension_numbers<[1], [0], [0], [1], [0, 0, 1, 1], [], []>} : vector<256x32xf32>, vector<32x32xf32>, vector<256x32xf32> -> vector<256x32xf32>
    %cst_31 = arith.constant dense<0.000000e+00> : vector<256x32xf32>
    %52 = tpu.matmul %50, %45, %cst_31 {dimension_numbers = #tpu.dot_dimension_numbers<[1], [0], [0], [1], [0, 0, 1, 1], [], []>} : vector<256x32xf32>, vector<32x32xf32>, vector<256x32xf32> -> vector<256x32xf32>
    %53 = arith.addf %51, %52 : vector<256x32xf32>
    %54 = vector.broadcast %46 : vector<1x32xf32> to vector<256x32xf32>
    %55 = arith.addf %53, %54 : vector<256x32xf32>
    %cst_32 = arith.constant 0.000000e+00 : f32
    %56 = vector.broadcast %cst_32 : f32 to vector<256x32xf32>
    %57 = arith.maximumf %55, %56 : vector<256x32xf32>
    %58 = arith.truncf %57 : vector<256x32xf32> to vector<256x32xbf16>
    %cst_33 = arith.constant dense<0.000000e+00> : vector<128x32xf32>
    %59 = tpu.matmul %9, %58, %cst_33 {dimension_numbers = #tpu.dot_dimension_numbers<[1], [0], [0], [1], [0, 0, 1, 1], [], []>} : vector<128x256xbf16>, vector<256x32xbf16>, vector<128x32xf32> -> vector<128x32xf32>
    %60 = arith.addf %43, %59 : vector<128x32xf32>
    %c0_34 = arith.constant 0 : index
    %c0_35 = arith.constant 0 : index
    %61 = vector.load %arg6[%c0_34, %c0_35] : memref<128x32xf32, #tpu.memory_space<vmem>>, vector<128x32xf32>
    tpu.vector_store %arg6[%c0_34, %c0_35], %60 {strides = array<i32>} : memref<128x32xf32, #tpu.memory_space<vmem>>, vector<128x32xf32>,
    return
  }
  func.func @transform_0(%arg0: i32) -> (i32, i32) {
    %c0_i32 = arith.constant 0 : i32
    %c0_i32_0 = arith.constant 0 : i32
    return %arg0, %c0_i32 : i32, i32
  }
  func.func @transform_1(%arg0: i32) -> (i32, i32) {
    %c0_i32 = arith.constant 0 : i32
    %c0_i32_0 = arith.constant 0 : i32
    return %arg0, %c0_i32 : i32, i32
  }
  func.func @transform_2(%arg0: i32) -> (i32, i32) {
    %c0_i32 = arith.constant 0 : i32
    %c0_i32_0 = arith.constant 0 : i32
    return %arg0, %c0_i32 : i32, i32
  }
  func.func @transform_3(%arg0: i32) -> (i32, i32) {
    %c0_i32 = arith.constant 0 : i32
    %c0_i32_0 = arith.constant 0 : i32
    %c0_i32_1 = arith.constant 0 : i32
    return %c0_i32, %c0_i32_0 : i32, i32
  }
  func.func @transform_4(%arg0: i32) -> (i32, i32) {
    %c0_i32 = arith.constant 0 : i32
    %c0_i32_0 = arith.constant 0 : i32
    %c0_i32_1 = arith.constant 0 : i32
    return %c0_i32, %c0_i32_0 : i32, i32
  }
  func.func @transform_5(%arg0: i32) -> (i32, i32) {
    %c0_i32 = arith.constant 0 : i32
    %c0_i32_0 = arith.constant 0 : i32
    return %arg0, %c0_i32 : i32, i32
  }
}

</mosaic_0001>

<llo_original>
// kernel: tpu_custom_call.1
$region0: #{tpu_custom_call.1}
  #allocation0 [shape = 'u32[]', space=smem, size = 0x4, offset = 0x4, fixed_abs, tag = 'smem constant byte address 0x4 - core index']
  #allocation1 [shape = 'u32[144,128]{1,0:T(1,128)}', space=vmem, size = 0x12000, scoped, tag = 'internal scratch']
  %s0 = inlined_call_operand.vmem [shape: f32[256,8], index: 0, kind: input, shape index: {}]
  %s1 = inlined_call_operand.vmem [shape: bf16[1024,128], index: 1, kind: input, shape index: {}]
  %s2 = inlined_call_operand.hbm [shape: bf16[256,256], index: 2, kind: input, shape index: {}]
  %s3 = inlined_call_operand.vmem [shape: f32[200,32], index: 3, kind: input, shape index: {}]
  %s4 = inlined_call_operand.vmem [shape: f32[4,32], index: 4, kind: input, shape index: {}]
  %s5 = inlined_call_operand.vmem [shape: f32[256,32], index: 5, kind: output, shape index: {}]
  %s6 = sld [smem:[#allocation0]]
  $region57: #{tpu_custom_call.1} parent=0
    _
  %s8 = ssub.s32 1, %s6
  %s9 = scalar_select 0, %s8, %s6
  $region1: #{tpu_custom_call.1} parent=0
    #allocation2 [shape = 'u8[131072]{0}', space=vmem, size = 0x20000, scoped, tag = 'input window, operand 2']
    #allocation3 [shape = 's32[2]{0}', space=sflag, size = 0x8, scoped, tag = 'scoped memory for tpu_custom_call.1']
    %10 = vsyncpa [#allocation3], 0
    %s11 = scalar_lea.sflag [#allocation3], 1
    %12 = vsyncpa %s11, 0
    loop: start=0, step=1, limit=4
    $region2: #{tpu_custom_call.1} parent=1 // loop_pre_header
      _
    $region3: #{tpu_custom_call.1} parent=1 // loop_header
      %s14 = sphi 0, %s18
      %p15 = scmp.ge.s32.totalorder %s14, 4
      %s24 = sphi 0, %s26
      %s27 = sphi 0, %s24
      %s28 = sphi 0, %s27
      %s44 = sphi 0, %s28
      %s50 = sphi 0, %s52
      %s53 = sphi 0, %s50
      %s54 = sphi 0, %s53
      %s70 = sphi 0, %s54
      %s76 = sphi 0, %s78
      %s79 = sphi 0, %s76
      %s80 = sphi 0, %s79
      %s96 = sphi 0, %s80
      %s100 = sphi 0, %s100
      %s102 = sphi 0, %s100
      %s103 = sphi 0, %s102
      %s117 = sphi 0, %s103
      %s121 = sphi 0, %s121
      %s123 = sphi 0, %s121
      %s124 = sphi 0, %s123
      %s138 = sphi 0, %s124
      %s144 = sphi 0, %s146
      %s147 = sphi 0, %s144
      %s148 = sphi 0, %s147
      %s164 = sphi 0, %s148
    $region4: #{tpu_custom_call.1} parent=1 // loop_header_branch
      %17 = sbr.rel (%p15) target = $region8
    $region5: #{tpu_custom_call.1} parent=1 // loop_body
      %s19 = ssub.s32 %s14, 1
      %s20 = ssub.s32 %s14, 2
      %s21 = sadd.s32 %s14, 1
      %s22 = ssub.s32 %s14, %s21
      %p23 = scmp.eq.s32.totalorder %s22, 0
      %s25 = sadd.s32 %s24, 1
      %s26 = scalar_select %p23, %s24, %s25
      %p29 = pneg %p23
      %p30 = scmp.eq.s32.totalorder %s14, 1
      %p31 = por %p29, %p30
      %p32 = scmp.ne.s32.totalorder %s24, %s27
      %p33 = scmp.eq.s32.totalorder %s14, 0
      %p34 = por %p32, %p33
      %p35 = scmp.ne.s32.totalorder %s24, %s27
      %p36 = scmp.eq.s32.totalorder %s19, 1
      %p37 = por %p35, %p36
      %p38 = scmp.ne.s32.totalorder %s27, %s28
      %p39 = scmp.eq.s32.totalorder %s19, 0
      %p40 = por %p38, %p39
      %p41 = scmp.ne.s32.totalorder %s27, %s28
      %p42 = scmp.eq.s32.totalorder %s20, 1
      %p43 = por %p41, %p42
      %p45 = scmp.ne.s32.totalorder %s28, %s44
      %p46 = scmp.eq.s32.totalorder %s20, 0
      %p47 = por %p45, %p46
      %s48 = ssub.s32 %s14, %s21
      %p49 = scmp.eq.s32.totalorder %s48, 0
      %s51 = sadd.s32 %s50, 1
      %s52 = scalar_select %p49, %s50, %s51
      %p55 = pneg %p49
      %p56 = scmp.eq.s32.totalorder %s14, 1
      %p57 = por %p55, %p56
      %p58 = scmp.ne.s32.totalorder %s50, %s53
      %p59 = scmp.eq.s32.totalorder %s14, 0
      %p60 = por %p58, %p59
      %p61 = scmp.ne.s32.totalorder %s50, %s53
      %p62 = scmp.eq.s32.totalorder %s19, 1
      %p63 = por %p61, %p62
      %p64 = scmp.ne.s32.totalorder %s53, %s54
      %p65 = scmp.eq.s32.totalorder %s19, 0
      %p66 = por %p64, %p65
      %p67 = scmp.ne.s32.totalorder %s53, %s54
      %p68 = scmp.eq.s32.totalorder %s20, 1
      %p69 = por %p67, %p68
      %p71 = scmp.ne.s32.totalorder %s54, %s70
      %p72 = scmp.eq.s32.totalorder %s20, 0
      %p73 = por %p71, %p72
      %s74 = ssub.s32 %s14, %s21
      %p75 = scmp.eq.s32.totalorder %s74, 0
      %s77 = sadd.s32 %s76, 1
      %s78 = scalar_select %p75, %s76, %s77
      %p81 = pneg %p75
      %p82 = scmp.eq.s32.totalorder %s14, 1
      %p83 = por %p81, %p82
      %p84 = scmp.ne.s32.totalorder %s76, %s79
      %p85 = scmp.eq.s32.totalorder %s14, 0
      %p86 = por %p84, %p85
      %p87 = scmp.ne.s32.totalorder %s76, %s79
      %p88 = scmp.eq.s32.totalorder %s19, 1
      %p89 = por %p87, %p88
      %p90 = scmp.ne.s32.totalorder %s79, %s80
      %p91 = scmp.eq.s32.totalorder %s19, 0
      %p92 = por %p90, %p91
      %p93 = scmp.ne.s32.totalorder %s79, %s80
      %p94 = scmp.eq.s32.totalorder %s20, 1
      %p95 = por %p93, %p94
      %p97 = scmp.ne.s32.totalorder %s80, %s96
      %p98 = scmp.eq.s32.totalorder %s20, 0
      %p99 = por %p97, %p98
      %s101 = sadd.s32 %s100, 1
      %p104 = scmp.eq.s32.totalorder %s14, 1
      %p105 = scmp.ne.s32.totalorder %s100, %s102
      %p106 = scmp.eq.s32.totalorder %s14, 0
      %p107 = por %p105, %p106
      %p108 = scmp.ne.s32.totalorder %s100, %s102
      %p109 = scmp.eq.s32.totalorder %s19, 1
      %p110 = por %p108, %p109
      %p111 = scmp.ne.s32.totalorder %s102, %s103
      %p112 = scmp.eq.s32.totalorder %s19, 0
      %p113 = por %p111, %p112
      %p114 = scmp.ne.s32.totalorder %s102, %s103
      %p115 = scmp.eq.s32.totalorder %s20, 1
      %p116 = por %p114, %p115
      %p118 = scmp.ne.s32.totalorder %s103, %s117
      %p119 = scmp.eq.s32.totalorder %s20, 0
      %p120 = por %p118, %p119
      %s122 = sadd.s32 %s121, 1
      %p125 = scmp.eq.s32.totalorder %s14, 1
      %p126 = scmp.ne.s32.totalorder %s121, %s123
      %p127 = scmp.eq.s32.totalorder %s14, 0
      %p128 = por %p126, %p127
      %p129 = scmp.ne.s32.totalorder %s121, %s123
      %p130 = scmp.eq.s32.totalorder %s19, 1
      %p131 = por %p129, %p130
      %p132 = scmp.ne.s32.totalorder %s123, %s124
      %p133 = scmp.eq.s32.totalorder %s19, 0
      %p134 = por %p132, %p133
      %p135 = scmp.ne.s32.totalorder %s123, %s124
      %p136 = scmp.eq.s32.totalorder %s20, 1
      %p137 = por %p135, %p136
      %p139 = scmp.ne.s32.totalorder %s124, %s138
      %p140 = scmp.eq.s32.totalorder %s20, 0
      %p141 = por %p139, %p140
      %s142 = ssub.s32 %s14, %s21
      %p143 = scmp.eq.s32.totalorder %s142, 0
      %s145 = sadd.s32 %s144, 1
      %s146 = scalar_select %p143, %s144, %s145
      %p149 = pneg %p143
      %p150 = scmp.eq.s32.totalorder %s14, 1
      %p151 = por %p149, %p150
      %p152 = scmp.ne.s32.totalorder %s144, %s147
      %p153 = scmp.eq.s32.totalorder %s14, 0
      %p154 = por %p152, %p153
      %p155 = scmp.ne.s32.totalorder %s144, %s147
      %p156 = scmp.eq.s32.totalorder %s19, 1
      %p157 = por %p155, %p156
      %p158 = scmp.ne.s32.totalorder %s147, %s148
      %p159 = scmp.eq.s32.totalorder %s19, 0
      %p160 = por %p158, %p159
      %p161 = scmp.ne.s32.totalorder %s147, %s148
      %p162 = scmp.eq.s32.totalorder %s20, 1
      %p163 = por %p161, %p162
      %p165 = scmp.ne.s32.totalorder %s148, %s164
      %p166 = scmp.eq.s32.totalorder %s20, 0
      %p167 = por %p165, %p166
      %p168 = scmp.le.s32.totalorder 1, %s14
      %p169 = scmp.lt.s32.totalorder %s14, 3
      %p170 = pnand %p168, %p169
      %p171 = pneg %p170
      // Predicated region
      $region9: #{tpu_custom_call.1} parent=5 // pred_check
        _
      $region10: #{tpu_custom_call.1} parent=5 // pred_check_branch
        %173 = sbr.rel (%p170) target = $region12
      $region11: #{tpu_custom_call.1} parent=5 // pred_region
        %s174 = ssub.s32 %s14, 1
        // Predicated region
        $region13: #{tpu_custom_call.1} parent=11 // pred_check
          %p175 = pneg %p113
        $region14: #{tpu_custom_call.1} parent=11 // pred_check_branch
          %177 = sbr.rel (%p175) target = $region16
        $region15: #{tpu_custom_call.1} parent=11 // pred_region
          _
        $region16: #{tpu_custom_call.1} parent=11 // pred_fallthru
          _
        // Predicated region
        $region17: #{tpu_custom_call.1} parent=11 // pred_check
          %p178 = pneg %p134
        $region18: #{tpu_custom_call.1} parent=11 // pred_check_branch
          %180 = sbr.rel (%p178) target = $region20
        $region19: #{tpu_custom_call.1} parent=11 // pred_region
          _
        $region20: #{tpu_custom_call.1} parent=11 // pred_fallthru
          _
      $region12: #{tpu_custom_call.1} parent=5 // pred_fallthru
        _
      %p181 = scmp.lt.s32.totalorder %s14, 2
      // Predicated region
      $region21: #{tpu_custom_call.1} parent=5 // pred_check
        %p182 = pneg %p181
      $region22: #{tpu_custom_call.1} parent=5 // pred_check_branch
        %184 = sbr.rel (%p182) target = $region24
      $region23: #{tpu_custom_call.1} parent=5 // pred_region
        // Predicated region
        $region25: #{tpu_custom_call.1} parent=23 // pred_check
          %p185 = pneg %p34
        $region26: #{tpu_custom_call.1} parent=23 // pred_check_branch
          %187 = sbr.rel (%p185) target = $region28
        $region27: #{tpu_custom_call.1} parent=23 // pred_region
          %s188 = smul.u32 16, %s14
          %p189 = scmp.lt.s32.totalorder %s188, 31
          %s190 = scalar_select %p189, %s188, 31
          %s191 = smul.addr %s190, 8
          %s192 = scalar_lea.vmem %s0, %s191
          %s193 = smul.u32 16, %s14
        $region28: #{tpu_custom_call.1} parent=23 // pred_fallthru
          _
        // Predicated region
        $region29: #{tpu_custom_call.1} parent=23 // pred_check
          %p194 = pneg %p60
        $region30: #{tpu_custom_call.1} parent=23 // pred_check_branch
          %196 = sbr.rel (%p194) target = $region32
        $region31: #{tpu_custom_call.1} parent=23 // pred_region
          %s197 = smul.u32 64, %s14
          %p198 = scmp.lt.s32.totalorder %s197, 127
          %s199 = scalar_select %p198, %s197, 127
          %s200 = smul.addr %s199, 4
          %s201 = scalar_lea.vmem %s1, %s200
          %s202 = smul.u32 64, %s14
        $region32: #{tpu_custom_call.1} parent=23 // pred_fallthru
          _
        // Predicated region
        $region33: #{tpu_custom_call.1} parent=23 // pred_check
          %p203 = pneg %p86
        $region34: #{tpu_custom_call.1} parent=23 // pred_check_branch
          %205 = sbr.rel (%p203) target = $region36
        $region35: #{tpu_custom_call.1} parent=23 // pred_region
          %s206 = sand.u32 %s76, 1
          %s207 = scalar_lea.sflag [#allocation3], %s206
          %s208 = sand.u32 %s76, 1
          %s209 = smul.addr %s208, 128
          %s210 = scalar_lea.vmem [#allocation2], %s209
          %s211 = smul.u32 16, %s14
          %s213 = ssub.s32 2048, 2048
          %214 = vsyncadd %s207, %s213
          %s215 = smul.addr %s211, 2
          %s216 = smul.addr %s215, 64
          %s217 = scalar_lea.hbm %s2, %s216
          %s218 = sshll.u32 %s210, 4
          %s219 = int_to_ptr.vmem [resolvable:$true] %s218
          %224 = dma.hbm_to_vmem [thread:$0]  %s217, 2048, %s219, %s207, 128, 128, 8
        $region36: #{tpu_custom_call.1} parent=23 // pred_fallthru
          _
      $region24: #{tpu_custom_call.1} parent=5 // pred_fallthru
        _
      %p225 = scmp.le.s32.totalorder 1, %s14
      %p226 = scmp.lt.s32.totalorder %s14, 3
      %p227 = pnand %p225, %p226
      %p228 = pneg %p227
      // Predicated region
      $region37: #{tpu_custom_call.1} parent=5 // pred_check
        _
      $region38: #{tpu_custom_call.1} parent=5 // pred_check_branch
        %230 = sbr.rel (%p227) target = $region40
      $region39: #{tpu_custom_call.1} parent=5 // pred_region
        %s231 = ssub.s32 %s14, 1
        %s232 = sand.u32 %s79, 1
        %s233 = scalar_lea.sflag [#allocation3], %s232
        %s234 = sand.u32 %s79, 1
        %s235 = smul.addr %s234, 128
        %s236 = scalar_lea.vmem [#allocation2], %s235
        // Predicated region
        $region41: #{tpu_custom_call.1} parent=39 // pred_check
          %p237 = pneg %p92
        $region42: #{tpu_custom_call.1} parent=39 // pred_check_branch
          %239 = sbr.rel (%p237) target = $region44
        $region43: #{tpu_custom_call.1} parent=39 // pred_region
          %240 = dma.done %s233, 2048
        $region44: #{tpu_custom_call.1} parent=39 // pred_fallthru
          _
        %s241 = smul.u32 16, %s19
        %p242 = scmp.lt.s32.totalorder %s241, 31
        %s243 = scalar_select %p242, %s241, 31
        %s244 = smul.addr %s243, 8
        %s245 = scalar_lea.vmem %s0, %s244
        %p246 = pneg %p40
        %p247 = pneg %p37
        %s248 = smul.u32 64, %s19
        %p249 = scmp.lt.s32.totalorder %s248, 127
        %s250 = scalar_select %p249, %s248, 127
        %s251 = smul.addr %s250, 4
        %s252 = scalar_lea.vmem %s1, %s251
        %p253 = pneg %p66
        %p254 = pneg %p63
        %s255 = sand.u32 %s79, 1
        %s256 = scalar_lea.sflag [#allocation3], %s255
        %s257 = sand.u32 %s79, 1
        %s258 = smul.addr %s257, 128
        %s259 = scalar_lea.vmem [#allocation2], %s258
        %p260 = pneg %p92
        %p261 = pneg %p89
        %p262 = pneg %p113
        %p263 = pneg %p110
        %p264 = pneg %p134
        %p265 = pneg %p131
        %p266 = pneg %p160
        %p267 = pneg %p157
        %s268 = smul.u32 16, %s19
        %p269 = scmp.lt.s32.totalorder %s268, 31
        %s270 = scalar_select %p269, %s268, 31
        %s271 = smul.addr %s270, 8
        %s272 = scalar_lea.vmem %s5, %s271
        %s273 = smul.u32 16, %s19
        %p274 = scmp.lt.s32.totalorder %s273, 31
        %s275 = scalar_select %p274, %s273, 31
        %s276 = smul.addr %s275, 8
        %s277 = scalar_lea.vmem %s0, %s276
        %s278 = smul.u32 16, %s19
        %s279 = smul.u32 64, %s19
        %p280 = scmp.lt.s32.totalorder %s279, 127
        %s281 = scalar_select %p280, %s279, 127
        %s282 = smul.addr %s281, 4
        %s283 = scalar_lea.vmem %s1, %s282
        %s284 = smul.u32 64, %s19
        %s285 = smul.u32 16, %s19
        %s286 = smul.u32 16, %s19
        %p287 = scmp.lt.s32.totalorder %s286, 31
        %s288 = scalar_select %p287, %s286, 31
        %s289 = smul.addr %s288, 8
        %s290 = scalar_lea.vmem %s5, %s289
        %s291 = smul.u32 16, %s19
        %v293 = vld [vmem:[%s277] sm:$0xff]
        %v294 = vld [vmem:[%s277 + $0x8] sm:$0xff]
        %v295 = vld [vmem:[%s277 + $0x10] sm:$0xff]
        %v296 = vld [vmem:[%s277 + $0x18] sm:$0xff]
        %v297 = vld [vmem:[%s277 + $0x20] sm:$0xff]
        %v298 = vld [vmem:[%s277 + $0x28] sm:$0xff]
        %v299 = vld [vmem:[%s277 + $0x30] sm:$0xff]
        %v300 = vld [vmem:[%s277 + $0x38] sm:$0xff]
        %v301 = vld [vmem:[%s277 + $0x40] sm:$0xff]
        %v302 = vld [vmem:[%s277 + $0x48] sm:$0xff]
        %v303 = vld [vmem:[%s277 + $0x50] sm:$0xff]
        %v304 = vld [vmem:[%s277 + $0x58] sm:$0xff]
        %v305 = vld [vmem:[%s277 + $0x60] sm:$0xff]
        %v306 = vld [vmem:[%s277 + $0x68] sm:$0xff]
        %v307 = vld [vmem:[%s277 + $0x70] sm:$0xff]
        %v308 = vld [vmem:[%s277 + $0x78] sm:$0xff]
        %v309 = vld [vmem:[%s3] sm:$0xff]
        %v310 = vld [vmem:[%s4] sm:$0x1]
        %v311 = vlaneseq
        %v312 = vshrl.u32 %v311, 7
        %v313 = vsub.s32 0, %v312
        %v314 = vrot.slane %v310, %v313
        %vm315 = vcmask 64512
        %v317 = vsel %vm315, %v293, 0
        %v320 = vsel %vm315, %v294, 0
        %v323 = vsel %vm315, %v295, 0
        %v326 = vsel %vm315, %v296, 0
        %v329 = vsel %vm315, %v297, 0
        %v332 = vsel %vm315, %v298, 0
        %v335 = vsel %vm315, %v299, 0
        %v338 = vsel %vm315, %v300, 0
        %v341 = vsel %vm315, %v301, 0
        %v344 = vsel %vm315, %v302, 0
        %v347 = vsel %vm315, %v303, 0
        %v350 = vsel %vm315, %v304, 0
        %v353 = vsel %vm315, %v305, 0
        %v356 = vsel %vm315, %v306, 0
        %v359 = vsel %vm315, %v307, 0
        %v362 = vsel %vm315, %v308, 0
        %364 = vmatprep.subr.mxu0 0.0
        %365 = vmatpush1.msra.mxu0 %v309
        %366 = vmatprep.subr.mxu0 0.0
        %367 = vmatpush1.msra.mxu0 0.0
        %368 = vmatprep.subr.mxu0 0.0
        %369 = vmatpush1.msra.mxu0 0.0
        %370 = vmatprep.subr.mxu0 0.0
        %371 = vmatpush1.msra.mxu0 0.0
        %372 = vmatprep.subr.mxu0 0.0
        %373 = vmatpush1.msra.mxu0 0.0
        %374 = vmatprep.subr.mxu0 0.0
        %375 = vmatpush1.msra.mxu0 0.0
        %376 = vmatprep.subr.mxu0 0.0
        %377 = vmatpush1.msra.mxu0 0.0
        %378 = vmatprep.subr.mxu0 0.0
        %379 = vmatpush1.msra.mxu0 0.0
        %380 = vmatprep.subr.mxu0 0.0
        %381 = vmatpush1.msra.mxu0 0.0
        %382 = vmatprep.subr.mxu0 0.0
        %383 = vmatpush1.msra.mxu0 0.0
        %384 = vmatprep.subr.mxu0 0.0
        %385 = vmatpush1.msra.mxu0 0.0
        %386 = vmatprep.subr.mxu0 0.0
        %387 = vmatpush1.msra.mxu0 0.0
        %388 = vmatprep.subr.mxu0 0.0
        %389 = vmatpush1.msra.mxu0 0.0
        %390 = vmatprep.subr.mxu0 0.0
        %391 = vmatpush1.msra.mxu0 0.0
        %392 = vmatprep.subr.mxu0 0.0
        %393 = vmatpush1.msra.mxu0 0.0
        %394 = vmatprep.subr.mxu0 0.0
        %395 = vmatpush1.msra.mxu0 0.0
        %396 = vmatprep.subr.mxu0 0.0
        %397 = vmatpush1.msra.mxu0 0.0
        %398 = vmatprep.subr.mxu0 0.0
        %399 = vmatpush1.msra.mxu0 0.0
        %400 = vmatprep.subr.mxu0 0.0
        %401 = vmatpush1.msra.mxu0 0.0
        %402 = vmatprep.subr.mxu0 0.0
        %403 = vmatpush1.msra.mxu0 0.0
        %404 = vmatprep.subr.mxu0 0.0
        %405 = vmatpush1.msra.mxu0 0.0
        %406 = vmatprep.subr.mxu0 0.0
        %407 = vmatpush1.msra.mxu0 0.0
        %408 = vmatprep.subr.mxu0 0.0
        %409 = vmatpush1.msra.mxu0 0.0
        %410 = vmatprep.subr.mxu0 0.0
        %411 = vmatpush1.msra.mxu0 0.0
        %412 = vmatprep.subr.mxu0 0.0
        %413 = vmatpush1.msra.mxu0 0.0
        %414 = vmatprep.subr.mxu0 0.0
        %415 = vmatpush1.msra.mxu0 0.0
        %416 = vmatprep.subr.mxu0 0.0
        %417 = vmatpush1.msra.mxu0 0.0
        %418 = vmatprep.subr.mxu0 0.0
        %419 = vmatpush1.msra.mxu0 0.0
        %420 = vmatprep.subr.mxu0 0.0
        %421 = vmatpush1.msra.mxu0 0.0
        %422 = vmatprep.subr.mxu0 0.0
        %423 = vmatpush1.msra.mxu0 0.0
        %424 = vmatprep.subr.mxu0 0.0
        %425 = vmatpush1.msra.mxu0 0.0
        %426 = vmatprep.subr.mxu0 0.0
        %427 = vmatpush1.msra.mxu0 0.0
        %428 = vmatprep.mubr.f32.mxu0 0.0
        %429 = vmatmul.mubr.f32.gmra.mrb[0].mxu0 %v317
        %v430 = vpop.f32.mrb[0].mxu0
        %v431 = vadd.f32 %v314, %v430
        %v432 = vpop.f32.mrb[0].mxu0
        %433 = vmatprep.mubr.f32.mxu0 0.0
        %434 = vmatmul.mubr.f32.gmra.mrb[0].mxu0 %v320
        %v435 = vpop.f32.mrb[0].mxu0
        %v436 = vadd.f32 %v314, %v435
        %v437 = vpop.f32.mrb[0].mxu0
        %438 = vmatprep.mubr.f32.mxu0 0.0
        %439 = vmatmul.mubr.f32.gmra.mrb[0].mxu0 %v323
        %v440 = vpop.f32.mrb[0].mxu0
        %v441 = vadd.f32 %v314, %v440
        %v442 = vpop.f32.mrb[0].mxu0
        %443 = vmatprep.mubr.f32.mxu0 0.0
        %444 = vmatmul.mubr.f32.gmra.mrb[0].mxu0 %v326
        %v445 = vpop.f32.mrb[0].mxu0
        %v446 = vadd.f32 %v314, %v445
        %v447 = vpop.f32.mrb[0].mxu0
        %448 = vmatprep.mubr.f32.mxu0 0.0
        %449 = vmatmul.mubr.f32.gmra.mrb[0].mxu0 %v329
        %v450 = vpop.f32.mrb[0].mxu0
        %v451 = vadd.f32 %v314, %v450
        %v452 = vpop.f32.mrb[0].mxu0
        %453 = vmatprep.mubr.f32.mxu0 0.0
        %454 = vmatmul.mubr.f32.gmra.mrb[0].mxu0 %v332
        %v455 = vpop.f32.mrb[0].mxu0
        %v456 = vadd.f32 %v314, %v455
        %v457 = vpop.f32.mrb[0].mxu0
        %458 = vmatprep.mubr.f32.mxu0 0.0
        %459 = vmatmul.mubr.f32.gmra.mrb[0].mxu0 %v335
        %v460 = vpop.f32.mrb[0].mxu0
        %v461 = vadd.f32 %v314, %v460
        %v462 = vpop.f32.mrb[0].mxu0
        %463 = vmatprep.mubr.f32.mxu0 0.0
        %464 = vmatmul.mubr.f32.gmra.mrb[0].mxu0 %v338
        %v465 = vpop.f32.mrb[0].mxu0
        %v466 = vadd.f32 %v314, %v465
        %v467 = vpop.f32.mrb[0].mxu0
        %468 = vmatprep.mubr.f32.mxu0 0.0
        %469 = vmatmul.mubr.f32.gmra.mrb[0].mxu0 %v341
        %v470 = vpop.f32.mrb[0].mxu0
        %v471 = vadd.f32 %v314, %v470
        %v472 = vpop.f32.mrb[0].mxu0
        %473 = vmatprep.mubr.f32.mxu0 0.0
        %474 = vmatmul.mubr.f32.gmra.mrb[0].mxu0 %v344
        %v475 = vpop.f32.mrb[0].mxu0
        %v476 = vadd.f32 %v314, %v475
        %v477 = vpop.f32.mrb[0].mxu0
        %478 = vmatprep.mubr.f32.mxu0 0.0
        %479 = vmatmul.mubr.f32.gmra.mrb[0].mxu0 %v347
        %v480 = vpop.f32.mrb[0].mxu0
        %v481 = vadd.f32 %v314, %v480
        %v482 = vpop.f32.mrb[0].mxu0
        %483 = vmatprep.mubr.f32.mxu0 0.0
        %484 = vmatmul.mubr.f32.gmra.mrb[0].mxu0 %v350
        %v485 = vpop.f32.mrb[0].mxu0
        %v486 = vadd.f32 %v314, %v485
        %v487 = vpop.f32.mrb[0].mxu0
        %488 = vmatprep.mubr.f32.mxu0 0.0
        %489 = vmatmul.mubr.f32.gmra.mrb[0].mxu0 %v353
        %v490 = vpop.f32.mrb[0].mxu0
        %v491 = vadd.f32 %v314, %v490
        %v492 = vpop.f32.mrb[0].mxu0
        %493 = vmatprep.mubr.f32.mxu0 0.0
        %494 = vmatmul.mubr.f32.gmra.mrb[0].mxu0 %v356
        %v495 = vpop.f32.mrb[0].mxu0
        %v496 = vadd.f32 %v314, %v495
        %v497 = vpop.f32.mrb[0].mxu0
        %498 = vmatprep.mubr.f32.mxu0 0.0
        %499 = vmatmul.mubr.f32.gmra.mrb[0].mxu0 %v359
        %v500 = vpop.f32.mrb[0].mxu0
        %v501 = vadd.f32 %v314, %v500
        %v502 = vpop.f32.mrb[0].mxu0
        %503 = vmatprep.mubr.f32.mxu0 0.0
        %504 = vmatmul.mubr.f32.gmra.mrb[0].mxu0 %v362
        %v505 = vpop.f32.mrb[0].mxu0
        %v506 = vadd.f32 %v314, %v505
        %v507 = vpop.f32.mrb[0].mxu0
        %508 = vdwg.mxu0
        %v509 = vmax.f32 %v431, 0.0
        %v510 = vmax.f32 %v436, 0.0
        %v511 = vmax.f32 %v441, 0.0
        %v512 = vmax.f32 %v446, 0.0
        %v513 = vmax.f32 %v451, 0.0
        %v514 = vmax.f32 %v456, 0.0
        %v515 = vmax.f32 %v461, 0.0
        %v516 = vmax.f32 %v466, 0.0
        %v517 = vmax.f32 %v471, 0.0
        %v518 = vmax.f32 %v476, 0.0
        %v519 = vmax.f32 %v481, 0.0
        %v520 = vmax.f32 %v486, 0.0
        %v521 = vmax.f32 %v491, 0.0
        %v522 = vmax.f32 %v496, 0.0
        %v523 = vmax.f32 %v501, 0.0
        %v524 = vmax.f32 %v506, 0.0
        %v525 = vld [vmem:[%s283] sm:$0xf]
        %v526 = vld [vmem:[%s283 + $0x4] sm:$0xf]
        %v527 = vld [vmem:[%s283 + $0x8] sm:$0xf]
        %v528 = vld [vmem:[%s283 + $0xc] sm:$0xf]
        %v529 = vld [vmem:[%s283 + $0x10] sm:$0xf]
        %v530 = vld [vmem:[%s283 + $0x14] sm:$0xf]
        %v531 = vld [vmem:[%s283 + $0x18] sm:$0xf]
        %v532 = vld [vmem:[%s283 + $0x1c] sm:$0xf]
        %v533 = vld [vmem:[%s283 + $0x20] sm:$0xf]
        %v534 = vld [vmem:[%s283 + $0x24] sm:$0xf]
        %v535 = vld [vmem:[%s283 + $0x28] sm:$0xf]
        %v536 = vld [vmem:[%s283 + $0x2c] sm:$0xf]
        %v537 = vld [vmem:[%s283 + $0x30] sm:$0xf]
        %v538 = vld [vmem:[%s283 + $0x34] sm:$0xf]
        %v539 = vld [vmem:[%s283 + $0x38] sm:$0xf]
        %v540 = vld [vmem:[%s283 + $0x3c] sm:$0xf]
        %v541 = vld [vmem:[%s283 + $0x40] sm:$0xf]
        %v542 = vld [vmem:[%s283 + $0x44] sm:$0xf]
        %v543 = vld [vmem:[%s283 + $0x48] sm:$0xf]
        %v544 = vld [vmem:[%s283 + $0x4c] sm:$0xf]
        %v545 = vld [vmem:[%s283 + $0x50] sm:$0xf]
        %v546 = vld [vmem:[%s283 + $0x54] sm:$0xf]
        %v547 = vld [vmem:[%s283 + $0x58] sm:$0xf]
        %v548 = vld [vmem:[%s283 + $0x5c] sm:$0xf]
        %v549 = vld [vmem:[%s283 + $0x60] sm:$0xf]
        %v550 = vld [vmem:[%s283 + $0x64] sm:$0xf]
        %v551 = vld [vmem:[%s283 + $0x68] sm:$0xf]
        %v552 = vld [vmem:[%s283 + $0x6c] sm:$0xf]
        %v553 = vld [vmem:[%s283 + $0x70] sm:$0xf]
        %v554 = vld [vmem:[%s283 + $0x74] sm:$0xf]
        %v555 = vld [vmem:[%s283 + $0x78] sm:$0xf]
        %v556 = vld [vmem:[%s283 + $0x7c] sm:$0xf]
        %v557 = vld [vmem:[%s283 + $0x80] sm:$0xf]
        %v558 = vld [vmem:[%s283 + $0x84] sm:$0xf]
        %v559 = vld [vmem:[%s283 + $0x88] sm:$0xf]
        %v560 = vld [vmem:[%s283 + $0x8c] sm:$0xf]
        %v561 = vld [vmem:[%s283 + $0x90] sm:$0xf]
        %v562 = vld [vmem:[%s283 + $0x94] sm:$0xf]
        %v563 = vld [vmem:[%s283 + $0x98] sm:$0xf]
        %v564 = vld [vmem:[%s283 + $0x9c] sm:$0xf]
        %v565 = vld [vmem:[%s283 + $0xa0] sm:$0xf]
        %v566 = vld [vmem:[%s283 + $0xa4] sm:$0xf]
        %v567 = vld [vmem:[%s283 + $0xa8] sm:$0xf]
        %v568 = vld [vmem:[%s283 + $0xac] sm:$0xf]
        %v569 = vld [vmem:[%s283 + $0xb0] sm:$0xf]
        %v570 = vld [vmem:[%s283 + $0xb4] sm:$0xf]
        %v571 = vld [vmem:[%s283 + $0xb8] sm:$0xf]
        %v572 = vld [vmem:[%s283 + $0xbc] sm:$0xf]
        %v573 = vld [vmem:[%s283 + $0xc0] sm:$0xf]
        %v574 = vld [vmem:[%s283 + $0xc4] sm:$0xf]
        %v575 = vld [vmem:[%s283 + $0xc8] sm:$0xf]
        %v576 = vld [vmem:[%s283 + $0xcc] sm:$0xf]
        %v577 = vld [vmem:[%s283 + $0xd0] sm:$0xf]
        %v578 = vld [vmem:[%s283 + $0xd4] sm:$0xf]
        %v579 = vld [vmem:[%s283 + $0xd8] sm:$0xf]
        %v580 = vld [vmem:[%s283 + $0xdc] sm:$0xf]
        %v581 = vld [vmem:[%s283 + $0xe0] sm:$0xf]
        %v582 = vld [vmem:[%s283 + $0xe4] sm:$0xf]
        %v583 = vld [vmem:[%s283 + $0xe8] sm:$0xf]
        %v584 = vld [vmem:[%s283 + $0xec] sm:$0xf]
        %v585 = vld [vmem:[%s283 + $0xf0] sm:$0xf]
        %v586 = vld [vmem:[%s283 + $0xf4] sm:$0xf]
        %v587 = vld [vmem:[%s283 + $0xf8] sm:$0xf]
        %v588 = vld [vmem:[%s283 + $0xfc] sm:$0xf]
        %v589 = vld [vmem:[%s236] sm:$0xff]
        %v590 = vld [vmem:[%s236 + $0x8] sm:$0xff]
        %v591 = vld [vmem:[%s236 + $0x10] sm:$0xff]
        %v592 = vld [vmem:[%s236 + $0x18] sm:$0xff]
        %v593 = vld [vmem:[%s236 + $0x20] sm:$0xff]
        %v594 = vld [vmem:[%s236 + $0x28] sm:$0xff]
        %v595 = vld [vmem:[%s236 + $0x30] sm:$0xff]
        %v596 = vld [vmem:[%s236 + $0x38] sm:$0xff]
        %v597 = vld [vmem:[%s236 + $0x40] sm:$0xff]
        %v598 = vld [vmem:[%s236 + $0x48] sm:$0xff]
        %v599 = vld [vmem:[%s236 + $0x50] sm:$0xff]
        %v600 = vld [vmem:[%s236 + $0x58] sm:$0xff]
        %v601 = vld [vmem:[%s236 + $0x60] sm:$0xff]
        %v602 = vld [vmem:[%s236 + $0x68] sm:$0xff]
        %v603 = vld [vmem:[%s236 + $0x70] sm:$0xff]
        %v604 = vld [vmem:[%s236 + $0x78] sm:$0xff]
        %v605 = vld [vmem:[%s3 + $0x8] sm:$0xff]
        %v606 = vld [vmem:[%s3 + $0x10] sm:$0xff]
        %v607 = vld [vmem:[%s3 + $0x18] sm:$0xff]
        %v608 = vld [vmem:[%s3 + $0x20] sm:$0xff]
        %v609 = vld [vmem:[%s3 + $0x28] sm:$0xff]
        %v610 = vld [vmem:[%s3 + $0x30] sm:$0xff]
        %v611 = vld [vmem:[%s3 + $0x38] sm:$0xff]
        %v612 = vld [vmem:[%s3 + $0x40] sm:$0xff]
        %v613 = vld [vmem:[%s4 + $0x1] sm:$0x1]
        %v614 = vpack.c.bf16 %v510, %v509
        %v615 = vpack.c.bf16 %v512, %v511
        %v616 = vpack.c.bf16 %v514, %v513
        %v617 = vpack.c.bf16 %v516, %v515
        %v618 = vpack.c.bf16 %v518, %v517
        %v619 = vpack.c.bf16 %v520, %v519
        %v620 = vpack.c.bf16 %v522, %v521
        %v621 = vpack.c.bf16 %v524, %v523
        %v686 = vunpack.c.l.b16 %v525
        %v687 = vunpack.c.l.b16 %v526
        %v688 = vunpack.c.l.b16 %v527
        %v689 = vunpack.c.l.b16 %v528
        %v690 = vunpack.c.l.b16 %v529
        %v691 = vunpack.c.l.b16 %v530
        %v692 = vunpack.c.l.b16 %v531
        %v693 = vunpack.c.l.b16 %v532
        %v694 = vunpack.c.l.b16 %v533
        %v695 = vunpack.c.l.b16 %v534
        %v696 = vunpack.c.l.b16 %v535
        %v697 = vunpack.c.l.b16 %v536
        %v698 = vunpack.c.l.b16 %v537
        %v699 = vunpack.c.l.b16 %v538
        %v700 = vunpack.c.l.b16 %v539
        %v701 = vunpack.c.l.b16 %v540
        %v702 = vunpack.c.l.b16 %v541
        %v703 = vunpack.c.l.b16 %v542
        %v704 = vunpack.c.l.b16 %v543
        %v705 = vunpack.c.l.b16 %v544
        %v706 = vunpack.c.l.b16 %v545
        %v707 = vunpack.c.l.b16 %v546
        %v708 = vunpack.c.l.b16 %v547
        %v709 = vunpack.c.l.b16 %v548
        %v710 = vunpack.c.l.b16 %v549
        %v711 = vunpack.c.l.b16 %v550
        %v712 = vunpack.c.l.b16 %v551
        %v713 = vunpack.c.l.b16 %v552
        %v714 = vunpack.c.l.b16 %v553
        %v715 = vunpack.c.l.b16 %v554
        %v716 = vunpack.c.l.b16 %v555
        %v717 = vunpack.c.l.b16 %v556
        %v718 = vunpack.c.l.b16 %v557
        %v719 = vunpack.c.l.b16 %v558
        %v720 = vunpack.c.l.b16 %v559
        %v721 = vunpack.c.l.b16 %v560
        %v722 = vunpack.c.l.b16 %v561
        %v723 = vunpack.c.l.b16 %v562
        %v724 = vunpack.c.l.b16 %v563
        %v725 = vunpack.c.l.b16 %v564
        %v726 = vunpack.c.l.b16 %v565
        %v727 = vunpack.c.l.b16 %v566
        %v728 = vunpack.c.l.b16 %v567
        %v729 = vunpack.c.l.b16 %v568
        %v730 = vunpack.c.l.b16 %v569
        %v731 = vunpack.c.l.b16 %v570
        %v732 = vunpack.c.l.b16 %v571
        %v733 = vunpack.c.l.b16 %v572
        %v734 = vunpack.c.l.b16 %v573
        %v735 = vunpack.c.l.b16 %v574
        %v736 = vunpack.c.l.b16 %v575
        %v737 = vunpack.c.l.b16 %v576
        %v738 = vunpack.c.l.b16 %v577
        %v739 = vunpack.c.l.b16 %v578
        %v740 = vunpack.c.l.b16 %v579
        %v741 = vunpack.c.l.b16 %v580
        %v742 = vunpack.c.l.b16 %v581
        %v743 = vunpack.c.l.b16 %v582
        %v744 = vunpack.c.l.b16 %v583
        %v745 = vunpack.c.l.b16 %v584
        %v746 = vunpack.c.l.b16 %v585
        %v747 = vunpack.c.l.b16 %v586
        %v748 = vunpack.c.l.b16 %v587
        %v749 = vunpack.c.l.b16 %v588
        %v750 = vpack.c.b16 %v687, %v686
        %v751 = vpack.c.b16 %v689, %v688
        %v752 = vpack.c.b16 %v691, %v690
        %v753 = vpack.c.b16 %v693, %v692
        %v754 = vpack.c.b16 %v695, %v694
        %v755 = vpack.c.b16 %v697, %v696
        %v756 = vpack.c.b16 %v699, %v698
        %v757 = vpack.c.b16 %v701, %v700
        %v758 = vpack.c.b16 %v703, %v702
        %v759 = vpack.c.b16 %v705, %v704
        %v760 = vpack.c.b16 %v707, %v706
        %v761 = vpack.c.b16 %v709, %v708
        %v762 = vpack.c.b16 %v711, %v710
        %v763 = vpack.c.b16 %v713, %v712
        %v764 = vpack.c.b16 %v715, %v714
        %v765 = vpack.c.b16 %v717, %v716
        %v766 = vpack.c.b16 %v719, %v718
        %v767 = vpack.c.b16 %v721, %v720
        %v768 = vpack.c.b16 %v723, %v722
        %v769 = vpack.c.b16 %v725, %v724
        %v770 = vpack.c.b16 %v727, %v726
        %v771 = vpack.c.b16 %v729, %v728
        %v772 = vpack.c.b16 %v731, %v730
        %v773 = vpack.c.b16 %v733, %v732
        %v774 = vpack.c.b16 %v735, %v734
        %v775 = vpack.c.b16 %v737, %v736
        %v776 = vpack.c.b16 %v739, %v738
        %v777 = vpack.c.b16 %v741, %v740
        %v778 = vpack.c.b16 %v743, %v742
        %v779 = vpack.c.b16 %v745, %v744
        %v780 = vpack.c.b16 %v747, %v746
        %v781 = vpack.c.b16 %v749, %v748
        %814 = vmatprep.subr.bf16.mxu0 0
        %815 = vmatpush1.bf16.msra.mxu0 %v614
        %816 = vmatprep.subr.bf16.mxu0 0
        %817 = vmatpush1.bf16.msra.mxu0 %v615
        %818 = vmatprep.subr.bf16.mxu0 0
        %819 = vmatpush1.bf16.msra.mxu0 %v616
        %820 = vmatprep.subr.bf16.mxu0 0
        %821 = vmatpush1.bf16.msra.mxu0 %v617
        %822 = vmatprep.subr.bf16.mxu0 0
        %823 = vmatpush1.bf16.msra.mxu0 %v618
        %824 = vmatprep.subr.bf16.mxu0 0
        %825 = vmatpush1.bf16.msra.mxu0 %v619
        %826 = vmatprep.subr.bf16.mxu0 0
        %827 = vmatpush1.bf16.msra.mxu0 %v620
        %828 = vmatprep.subr.bf16.mxu0 0
        %829 = vmatpush1.bf16.msra.mxu0 %v621
        %830 = vmatprep.subr.bf16.mxu0 0
        %831 = vmatpush1.bf16.msra.mxu0 0
        %832 = vmatprep.subr.bf16.mxu0 0
        %833 = vmatpush1.bf16.msra.mxu0 0
        %834 = vmatprep.subr.bf16.mxu0 0
        %835 = vmatpush1.bf16.msra.mxu0 0
        %836 = vmatprep.subr.bf16.mxu0 0
        %837 = vmatpush1.bf16.msra.mxu0 0
        %838 = vmatprep.subr.bf16.mxu0 0
        %839 = vmatpush1.bf16.msra.mxu0 0
        %840 = vmatprep.subr.bf16.mxu0 0
        %841 = vmatpush1.bf16.msra.mxu0 0
        %842 = vmatprep.subr.bf16.mxu0 0
        %843 = vmatpush1.bf16.msra.mxu0 0
        %844 = vmatprep.subr.bf16.mxu0 0
        %845 = vmatpush1.bf16.msra.mxu0 0
        %846 = vmatprep.mubr.bf16.mxu0 0
        %847 = vmatmul.mubr.bf16.gmra.mrb[0].mxu0 %v750
        %v848 = vpop.f32.mrb[0].mxu0
        %v849 = vadd.f32 0.0, %v848
        %v850 = vpop.f32.mrb[0].mxu0
        %v851 = vpop.f32.mrb[0].mxu0
        %v852 = vadd.f32 0.0, %v851
        %v853 = vpop.f32.mrb[0].mxu0
        %854 = vmatprep.mubr.bf16.mxu0 0
        %855 = vmatmul.mubr.bf16.gmra.mrb[0].mxu0 %v751
        %v856 = vpop.f32.mrb[0].mxu0
        %v857 = vadd.f32 0.0, %v856
        %v858 = vpop.f32.mrb[0].mxu0
        %v859 = vpop.f32.mrb[0].mxu0
        %v860 = vadd.f32 0.0, %v859
        %v861 = vpop.f32.mrb[0].mxu0
        %862 = vmatprep.mubr.bf16.mxu0 0
        %863 = vmatmul.mubr.bf16.gmra.mrb[0].mxu0 %v752
        %v864 = vpop.f32.mrb[0].mxu0
        %v865 = vadd.f32 0.0, %v864
        %v866 = vpop.f32.mrb[0].mxu0
        %v867 = vpop.f32.mrb[0].mxu0
        %v868 = vadd.f32 0.0, %v867
        %v869 = vpop.f32.mrb[0].mxu0
        %870 = vmatprep.mubr.bf16.mxu0 0
        %871 = vmatmul.mubr.bf16.gmra.mrb[0].mxu0 %v753
        %v872 = vpop.f32.mrb[0].mxu0
        %v873 = vadd.f32 0.0, %v872
        %v874 = vpop.f32.mrb[0].mxu0
        %v875 = vpop.f32.mrb[0].mxu0
        %v876 = vadd.f32 0.0, %v875
        %v877 = vpop.f32.mrb[0].mxu0
        %878 = vmatprep.mubr.bf16.mxu0 0
        %879 = vmatmul.mubr.bf16.gmra.mrb[0].mxu0 %v754
        %v880 = vpop.f32.mrb[0].mxu0
        %v881 = vadd.f32 0.0, %v880
        %v882 = vpop.f32.mrb[0].mxu0
        %v883 = vpop.f32.mrb[0].mxu0
        %v884 = vadd.f32 0.0, %v883
        %v885 = vpop.f32.mrb[0].mxu0
        %886 = vmatprep.mubr.bf16.mxu0 0
        %887 = vmatmul.mubr.bf16.gmra.mrb[0].mxu0 %v755
        %v888 = vpop.f32.mrb[0].mxu0
        %v889 = vadd.f32 0.0, %v888
        %v890 = vpop.f32.mrb[0].mxu0
        %v891 = vpop.f32.mrb[0].mxu0
        %v892 = vadd.f32 0.0, %v891
        %v893 = vpop.f32.mrb[0].mxu0
        %894 = vmatprep.mubr.bf16.mxu0 0
        %895 = vmatmul.mubr.bf16.gmra.mrb[0].mxu0 %v756
        %v896 = vpop.f32.mrb[0].mxu0
        %v897 = vadd.f32 0.0, %v896
        %v898 = vpop.f32.mrb[0].mxu0
        %v899 = vpop.f32.mrb[0].mxu0
        %v900 = vadd.f32 0.0, %v899
        %v901 = vpop.f32.mrb[0].mxu0
        %902 = vmatprep.mubr.bf16.mxu0 0
        %903 = vmatmul.mubr.bf16.gmra.mrb[0].mxu0 %v757
        %v904 = vpop.f32.mrb[0].mxu0
        %v905 = vadd.f32 0.0, %v904
        %v906 = vpop.f32.mrb[0].mxu0
        %v907 = vpop.f32.mrb[0].mxu0
        %v908 = vadd.f32 0.0, %v907
        %v909 = vpop.f32.mrb[0].mxu0
        %910 = vmatprep.mubr.bf16.mxu0 0
        %911 = vmatmul.mubr.bf16.gmra.mrb[0].mxu0 %v758
        %v912 = vpop.f32.mrb[0].mxu0
        %v913 = vadd.f32 0.0, %v912
        %v914 = vpop.f32.mrb[0].mxu0
        %v915 = vpop.f32.mrb[0].mxu0
        %v916 = vadd.f32 0.0, %v915
        %v917 = vpop.f32.mrb[0].mxu0
        %918 = vmatprep.mubr.bf16.mxu0 0
        %919 = vmatmul.mubr.bf16.gmra.mrb[0].mxu0 %v759
        %v920 = vpop.f32.mrb[0].mxu0
        %v921 = vadd.f32 0.0, %v920
        %v922 = vpop.f32.mrb[0].mxu0
        %v923 = vpop.f32.mrb[0].mxu0
        %v924 = vadd.f32 0.0, %v923
        %v925 = vpop.f32.mrb[0].mxu0
        %926 = vmatprep.mubr.bf16.mxu0 0
        %927 = vmatmul.mubr.bf16.gmra.mrb[0].mxu0 %v760
        %v928 = vpop.f32.mrb[0].mxu0
        %v929 = vadd.f32 0.0, %v928
        %v930 = vpop.f32.mrb[0].mxu0
        %v931 = vpop.f32.mrb[0].mxu0
        %v932 = vadd.f32 0.0, %v931
        %v933 = vpop.f32.mrb[0].mxu0
        %934 = vmatprep.mubr.bf16.mxu0 0
        %935 = vmatmul.mubr.bf16.gmra.mrb[0].mxu0 %v761
        %v936 = vpop.f32.mrb[0].mxu0
        %v937 = vadd.f32 0.0, %v936
        %v938 = vpop.f32.mrb[0].mxu0
        %v939 = vpop.f32.mrb[0].mxu0
        %v940 = vadd.f32 0.0, %v939
        %v941 = vpop.f32.mrb[0].mxu0
        %942 = vmatprep.mubr.bf16.mxu0 0
        %943 = vmatmul.mubr.bf16.gmra.mrb[0].mxu0 %v762
        %v944 = vpop.f32.mrb[0].mxu0
        %v945 = vadd.f32 0.0, %v944
        %v946 = vpop.f32.mrb[0].mxu0
        %v947 = vpop.f32.mrb[0].mxu0
        %v948 = vadd.f32 0.0, %v947
        %v949 = vpop.f32.mrb[0].mxu0
        %950 = vmatprep.mubr.bf16.mxu0 0
        %951 = vmatmul.mubr.bf16.gmra.mrb[0].mxu0 %v763
        %v952 = vpop.f32.mrb[0].mxu0
        %v953 = vadd.f32 0.0, %v952
        %v954 = vpop.f32.mrb[0].mxu0
        %v955 = vpop.f32.mrb[0].mxu0
        %v956 = vadd.f32 0.0, %v955
        %v957 = vpop.f32.mrb[0].mxu0
        %958 = vmatprep.mubr.bf16.mxu0 0
        %959 = vmatmul.mubr.bf16.gmra.mrb[0].mxu0 %v764
        %v960 = vpop.f32.mrb[0].mxu0
        %v961 = vadd.f32 0.0, %v960
        %v962 = vpop.f32.mrb[0].mxu0
        %v963 = vpop.f32.mrb[0].mxu0
        %v964 = vadd.f32 0.0, %v963
        %v965 = vpop.f32.mrb[0].mxu0
        %966 = vmatprep.mubr.bf16.mxu0 0
        %967 = vmatmul.mubr.bf16.gmra.mrb[0].mxu0 %v765
        %v968 = vpop.f32.mrb[0].mxu0
        %v969 = vadd.f32 0.0, %v968
        %v970 = vpop.f32.mrb[0].mxu0
        %v971 = vpop.f32.mrb[0].mxu0
        %v972 = vadd.f32 0.0, %v971
        %v973 = vpop.f32.mrb[0].mxu0
        %974 = vmatprep.mubr.bf16.mxu0 0
        %975 = vmatmul.mubr.bf16.gmra.mrb[0].mxu0 %v766
        %v976 = vpop.f32.mrb[0].mxu0
        %v977 = vadd.f32 0.0, %v976
        %v978 = vpop.f32.mrb[0].mxu0
        %v979 = vpop.f32.mrb[0].mxu0
        %v980 = vadd.f32 0.0, %v979
        %v981 = vpop.f32.mrb[0].mxu0
        %982 = vmatprep.mubr.bf16.mxu0 0
        %983 = vmatmul.mubr.bf16.gmra.mrb[0].mxu0 %v767
        %v984 = vpop.f32.mrb[0].mxu0
        %v985 = vadd.f32 0.0, %v984
        %v986 = vpop.f32.mrb[0].mxu0
        %v987 = vpop.f32.mrb[0].mxu0
        %v988 = vadd.f32 0.0, %v987
        %v989 = vpop.f32.mrb[0].mxu0
        %990 = vmatprep.mubr.bf16.mxu0 0
        %991 = vmatmul.mubr.bf16.gmra.mrb[0].mxu0 %v768
        %v992 = vpop.f32.mrb[0].mxu0
        %v993 = vadd.f32 0.0, %v992
        %v994 = vpop.f32.mrb[0].mxu0
        %v995 = vpop.f32.mrb[0].mxu0
        %v996 = vadd.f32 0.0, %v995
        %v997 = vpop.f32.mrb[0].mxu0
        %998 = vmatprep.mubr.bf16.mxu0 0
        %999 = vmatmul.mubr.bf16.gmra.mrb[0].mxu0 %v769
        %v1000 = vpop.f32.mrb[0].mxu0
        %v1001 = vadd.f32 0.0, %v1000
        %v1002 = vpop.f32.mrb[0].mxu0
        %v1003 = vpop.f32.mrb[0].mxu0
        %v1004 = vadd.f32 0.0, %v1003
        %v1005 = vpop.f32.mrb[0].mxu0
        %1006 = vmatprep.mubr.bf16.mxu0 0
        %1007 = vmatmul.mubr.bf16.gmra.mrb[0].mxu0 %v770
        %v1008 = vpop.f32.mrb[0].mxu0
        %v1009 = vadd.f32 0.0, %v1008
        %v1010 = vpop.f32.mrb[0].mxu0
        %v1011 = vpop.f32.mrb[0].mxu0
        %v1012 = vadd.f32 0.0, %v1011
        %v1013 = vpop.f32.mrb[0].mxu0
        %1014 = vmatprep.mubr.bf16.mxu0 0
        %1015 = vmatmul.mubr.bf16.gmra.mrb[0].mxu0 %v771
        %v1016 = vpop.f32.mrb[0].mxu0
        %v1017 = vadd.f32 0.0, %v1016
        %v1018 = vpop.f32.mrb[0].mxu0
        %v1019 = vpop.f32.mrb[0].mxu0
        %v1020 = vadd.f32 0.0, %v1019
        %v1021 = vpop.f32.mrb[0].mxu0
        %1022 = vmatprep.mubr.bf16.mxu0 0
        %1023 = vmatmul.mubr.bf16.gmra.mrb[0].mxu0 %v772
        %v1024 = vpop.f32.mrb[0].mxu0
        %v1025 = vadd.f32 0.0, %v1024
        %v1026 = vpop.f32.mrb[0].mxu0
        %v1027 = vpop.f32.mrb[0].mxu0
        %v1028 = vadd.f32 0.0, %v1027
        %v1029 = vpop.f32.mrb[0].mxu0
        %1030 = vmatprep.mubr.bf16.mxu0 0
        %1031 = vmatmul.mubr.bf16.gmra.mrb[0].mxu0 %v773
        %v1032 = vpop.f32.mrb[0].mxu0
        %v1033 = vadd.f32 0.0, %v1032
        %v1034 = vpop.f32.mrb[0].mxu0
        %v1035 = vpop.f32.mrb[0].mxu0
        %v1036 = vadd.f32 0.0, %v1035
        %v1037 = vpop.f32.mrb[0].mxu0
        %1038 = vmatprep.mubr.bf16.mxu0 0
        %1039 = vmatmul.mubr.bf16.gmra.mrb[0].mxu0 %v774
        %v1040 = vpop.f32.mrb[0].mxu0
        %v1041 = vadd.f32 0.0, %v1040
        %v1042 = vpop.f32.mrb[0].mxu0
        %v1043 = vpop.f32.mrb[0].mxu0
        %v1044 = vadd.f32 0.0, %v1043
        %v1045 = vpop.f32.mrb[0].mxu0
        %1046 = vmatprep.mubr.bf16.mxu0 0
        %1047 = vmatmul.mubr.bf16.gmra.mrb[0].mxu0 %v775
        %v1048 = vpop.f32.mrb[0].mxu0
        %v1049 = vadd.f32 0.0, %v1048
        %v1050 = vpop.f32.mrb[0].mxu0
        %v1051 = vpop.f32.mrb[0].mxu0
        %v1052 = vadd.f32 0.0, %v1051
        %v1053 = vpop.f32.mrb[0].mxu0
        %1054 = vmatprep.mubr.bf16.mxu0 0
        %1055 = vmatmul.mubr.bf16.gmra.mrb[0].mxu0 %v776
        %v1056 = vpop.f32.mrb[0].mxu0
        %v1057 = vadd.f32 0.0, %v1056
        %v1058 = vpop.f32.mrb[0].mxu0
        %v1059 = vpop.f32.mrb[0].mxu0
        %v1060 = vadd.f32 0.0, %v1059
        %v1061 = vpop.f32.mrb[0].mxu0
        %1062 = vmatprep.mubr.bf16.mxu0 0
        %1063 = vmatmul.mubr.bf16.gmra.mrb[0].mxu0 %v777
        %v1064 = vpop.f32.mrb[0].mxu0
        %v1065 = vadd.f32 0.0, %v1064
        %v1066 = vpop.f32.mrb[0].mxu0
        %v1067 = vpop.f32.mrb[0].mxu0
        %v1068 = vadd.f32 0.0, %v1067
        %v1069 = vpop.f32.mrb[0].mxu0
        %1070 = vmatprep.mubr.bf16.mxu0 0
        %1071 = vmatmul.mubr.bf16.gmra.mrb[0].mxu0 %v778
        %v1072 = vpop.f32.mrb[0].mxu0
        %v1073 = vadd.f32 0.0, %v1072
        %v1074 = vpop.f32.mrb[0].mxu0
        %v1075 = vpop.f32.mrb[0].mxu0
        %v1076 = vadd.f32 0.0, %v1075
        %v1077 = vpop.f32.mrb[0].mxu0
        %1078 = vmatprep.mubr.bf16.mxu0 0
        %1079 = vmatmul.mubr.bf16.gmra.mrb[0].mxu0 %v779
        %v1080 = vpop.f32.mrb[0].mxu0
        %v1081 = vadd.f32 0.0, %v1080
        %v1082 = vpop.f32.mrb[0].mxu0
        %v1083 = vpop.f32.mrb[0].mxu0
        %v1084 = vadd.f32 0.0, %v1083
        %v1085 = vpop.f32.mrb[0].mxu0
        %1086 = vmatprep.mubr.bf16.mxu0 0
        %1087 = vmatmul.mubr.bf16.gmra.mrb[0].mxu0 %v780
        %v1088 = vpop.f32.mrb[0].mxu0
        %v1089 = vadd.f32 0.0, %v1088
        %v1090 = vpop.f32.mrb[0].mxu0
        %v1091 = vpop.f32.mrb[0].mxu0
        %v1092 = vadd.f32 0.0, %v1091
        %v1093 = vpop.f32.mrb[0].mxu0
        %1094 = vmatprep.mubr.bf16.mxu0 0
        %1095 = vmatmul.mubr.bf16.gmra.mrb[0].mxu0 %v781
        %v1096 = vpop.f32.mrb[0].mxu0
        %v1097 = vadd.f32 0.0, %v1096
        %v1098 = vpop.f32.mrb[0].mxu0
        %v1099 = vpop.f32.mrb[0].mxu0
        %v1100 = vadd.f32 0.0, %v1099
        %v1101 = vpop.f32.mrb[0].mxu0
        %1102 = vdwg.mxu0
        %vm1103 = vcmask 261120
        %v1105 = vsel %vm1103, %v977, 0
        %v1108 = vsel %vm1103, %v980, 0
        %v1111 = vsel %vm1103, %v985, 0
        %v1114 = vsel %vm1103, %v988, 0
        %v1117 = vsel %vm1103, %v993, 0
        %v1120 = vsel %vm1103, %v996, 0
        %v1123 = vsel %vm1103, %v1001, 0
        %v1126 = vsel %vm1103, %v1004, 0
        %v1129 = vsel %vm1103, %v1009, 0
        %v1132 = vsel %vm1103, %v1012, 0
        %v1135 = vsel %vm1103, %v1017, 0
        %v1138 = vsel %vm1103, %v1020, 0
        %v1141 = vsel %vm1103, %v1025, 0
        %v1144 = vsel %vm1103, %v1028, 0
        %v1147 = vsel %vm1103, %v1033, 0
        %v1150 = vsel %vm1103, %v1036, 0
        %v1153 = vsel %vm1103, %v1041, 0
        %v1156 = vsel %vm1103, %v1044, 0
        %v1159 = vsel %vm1103, %v1049, 0
        %v1162 = vsel %vm1103, %v1052, 0
        %v1165 = vsel %vm1103, %v1057, 0
        %v1168 = vsel %vm1103, %v1060, 0
        %v1171 = vsel %vm1103, %v1065, 0
        %v1174 = vsel %vm1103, %v1068, 0
        %v1177 = vsel %vm1103, %v1073, 0
        %v1180 = vsel %vm1103, %v1076, 0
        %v1183 = vsel %vm1103, %v1081, 0
        %v1186 = vsel %vm1103, %v1084, 0
        %v1189 = vsel %vm1103, %v1089, 0
        %v1192 = vsel %vm1103, %v1092, 0
        %v1195 = vsel %vm1103, %v1097, 0
        %v1198 = vsel %vm1103, %v1100, 0
        %1200 = vmatprep.subr.mxu0 0.0
        %1201 = vmatpush1.msra.mxu0 %v609
        %1202 = vmatprep.subr.mxu0 0.0
        %1203 = vmatpush1.msra.mxu0 %v610
        %1204 = vmatprep.subr.mxu0 0.0
        %1205 = vmatpush1.msra.mxu0 %v611
        %1206 = vmatprep.subr.mxu0 0.0
        %1207 = vmatpush1.msra.mxu0 %v612
        %1208 = vmatprep.subr.mxu0 0.0
        %1209 = vmatpush1.msra.mxu0 0.0
        %1210 = vmatprep.subr.mxu0 0.0
        %1211 = vmatpush1.msra.mxu0 0.0
        %1212 = vmatprep.subr.mxu0 0.0
        %1213 = vmatpush1.msra.mxu0 0.0
        %1214 = vmatprep.subr.mxu0 0.0
        %1215 = vmatpush1.msra.mxu0 0.0
        %1216 = vmatprep.subr.mxu0 0.0
        %1217 = vmatpush1.msra.mxu0 0.0
        %1218 = vmatprep.subr.mxu0 0.0
        %1219 = vmatpush1.msra.mxu0 0.0
        %1220 = vmatprep.subr.mxu0 0.0
        %1221 = vmatpush1.msra.mxu0 0.0
        %1222 = vmatprep.subr.mxu0 0.0
        %1223 = vmatpush1.msra.mxu0 0.0
        %1224 = vmatprep.subr.mxu0 0.0
        %1225 = vmatpush1.msra.mxu0 0.0
        %1226 = vmatprep.subr.mxu0 0.0
        %1227 = vmatpush1.msra.mxu0 0.0
        %1228 = vmatprep.subr.mxu0 0.0
        %1229 = vmatpush1.msra.mxu0 0.0
        %1230 = vmatprep.subr.mxu0 0.0
        %1231 = vmatpush1.msra.mxu0 0.0
        %1232 = vmatprep.subr.mxu0 0.0
        %1233 = vmatpush1.msra.mxu0 0.0
        %1234 = vmatprep.subr.mxu0 0.0
        %1235 = vmatpush1.msra.mxu0 0.0
        %1236 = vmatprep.subr.mxu0 0.0
        %1237 = vmatpush1.msra.mxu0 0.0
        %1238 = vmatprep.subr.mxu0 0.0
        %1239 = vmatpush1.msra.mxu0 0.0
        %1240 = vmatprep.subr.mxu0 0.0
        %1241 = vmatpush1.msra.mxu0 0.0
        %1242 = vmatprep.subr.mxu0 0.0
        %1243 = vmatpush1.msra.mxu0 0.0
        %1244 = vmatprep.subr.mxu0 0.0
        %1245 = vmatpush1.msra.mxu0 0.0
        %1246 = vmatprep.subr.mxu0 0.0
        %1247 = vmatpush1.msra.mxu0 0.0
        %1248 = vmatprep.subr.mxu0 0.0
        %1249 = vmatpush1.msra.mxu0 0.0
        %1250 = vmatprep.subr.mxu0 0.0
        %1251 = vmatpush1.msra.mxu0 0.0
        %1252 = vmatprep.subr.mxu0 0.0
        %1253 = vmatpush1.msra.mxu0 0.0
        %1254 = vmatprep.subr.mxu0 0.0
        %1255 = vmatpush1.msra.mxu0 0.0
        %1256 = vmatprep.subr.mxu0 0.0
        %1257 = vmatpush1.msra.mxu0 0.0
        %1258 = vmatprep.subr.mxu0 0.0
        %1259 = vmatpush1.msra.mxu0 0.0
        %1260 = vmatprep.subr.mxu0 0.0
        %1261 = vmatpush1.msra.mxu0 0.0
        %1262 = vmatprep.subr.mxu0 0.0
        %1263 = vmatpush1.msra.mxu0 0.0
        %1264 = vmatprep.mubr.f32.mxu0 0.0
        %1265 = vmatmul.mubr.f32.gmra.mrb[0].mxu0 %v1105
        %v1266 = vpop.f32.mrb[0].mxu0
        %v1267 = vadd.f32 0.0, %v1266
        %v1268 = vpop.f32.mrb[0].mxu0
        %1269 = vmatprep.mubr.f32.mxu0 0.0
        %1270 = vmatmul.mubr.f32.gmra.mrb[0].mxu0 %v1108
        %v1271 = vpop.f32.mrb[0].mxu0
        %v1272 = vadd.f32 0.0, %v1271
        %v1273 = vpop.f32.mrb[0].mxu0
        %1274 = vmatprep.mubr.f32.mxu0 0.0
        %1275 = vmatmul.mubr.f32.gmra.mrb[0].mxu0 %v1111
        %v1276 = vpop.f32.mrb[0].mxu0
        %v1277 = vadd.f32 0.0, %v1276
        %v1278 = vpop.f32.mrb[0].mxu0
        %1279 = vmatprep.mubr.f32.mxu0 0.0
        %1280 = vmatmul.mubr.f32.gmra.mrb[0].mxu0 %v1114
        %v1281 = vpop.f32.mrb[0].mxu0
        %v1282 = vadd.f32 0.0, %v1281
        %v1283 = vpop.f32.mrb[0].mxu0
        %1284 = vmatprep.mubr.f32.mxu0 0.0
        %1285 = vmatmul.mubr.f32.gmra.mrb[0].mxu0 %v1117
        %v1286 = vpop.f32.mrb[0].mxu0
        %v1287 = vadd.f32 0.0, %v1286
        %v1288 = vpop.f32.mrb[0].mxu0
        %1289 = vmatprep.mubr.f32.mxu0 0.0
        %1290 = vmatmul.mubr.f32.gmra.mrb[0].mxu0 %v1120
        %v1291 = vpop.f32.mrb[0].mxu0
        %v1292 = vadd.f32 0.0, %v1291
        %v1293 = vpop.f32.mrb[0].mxu0
        %1294 = vmatprep.mubr.f32.mxu0 0.0
        %1295 = vmatmul.mubr.f32.gmra.mrb[0].mxu0 %v1123
        %v1296 = vpop.f32.mrb[0].mxu0
        %v1297 = vadd.f32 0.0, %v1296
        %v1298 = vpop.f32.mrb[0].mxu0
        %1299 = vmatprep.mubr.f32.mxu0 0.0
        %1300 = vmatmul.mubr.f32.gmra.mrb[0].mxu0 %v1126
        %v1301 = vpop.f32.mrb[0].mxu0
        %v1302 = vadd.f32 0.0, %v1301
        %v1303 = vpop.f32.mrb[0].mxu0
        %1304 = vmatprep.mubr.f32.mxu0 0.0
        %1305 = vmatmul.mubr.f32.gmra.mrb[0].mxu0 %v1129
        %v1306 = vpop.f32.mrb[0].mxu0
        %v1307 = vadd.f32 0.0, %v1306
        %v1308 = vpop.f32.mrb[0].mxu0
        %1309 = vmatprep.mubr.f32.mxu0 0.0
        %1310 = vmatmul.mubr.f32.gmra.mrb[0].mxu0 %v1132
        %v1311 = vpop.f32.mrb[0].mxu0
        %v1312 = vadd.f32 0.0, %v1311
        %v1313 = vpop.f32.mrb[0].mxu0
        %1314 = vmatprep.mubr.f32.mxu0 0.0
        %1315 = vmatmul.mubr.f32.gmra.mrb[0].mxu0 %v1135
        %v1316 = vpop.f32.mrb[0].mxu0
        %v1317 = vadd.f32 0.0, %v1316
        %v1318 = vpop.f32.mrb[0].mxu0
        %1319 = vmatprep.mubr.f32.mxu0 0.0
        %1320 = vmatmul.mubr.f32.gmra.mrb[0].mxu0 %v1138
        %v1321 = vpop.f32.mrb[0].mxu0
        %v1322 = vadd.f32 0.0, %v1321
        %v1323 = vpop.f32.mrb[0].mxu0
        %1324 = vmatprep.mubr.f32.mxu0 0.0
        %1325 = vmatmul.mubr.f32.gmra.mrb[0].mxu0 %v1141
        %v1326 = vpop.f32.mrb[0].mxu0
        %v1327 = vadd.f32 0.0, %v1326
        %v1328 = vpop.f32.mrb[0].mxu0
        %1329 = vmatprep.mubr.f32.mxu0 0.0
        %1330 = vmatmul.mubr.f32.gmra.mrb[0].mxu0 %v1144
        %v1331 = vpop.f32.mrb[0].mxu0
        %v1332 = vadd.f32 0.0, %v1331
        %v1333 = vpop.f32.mrb[0].mxu0
        %1334 = vmatprep.mubr.f32.mxu0 0.0
        %1335 = vmatmul.mubr.f32.gmra.mrb[0].mxu0 %v1147
        %v1336 = vpop.f32.mrb[0].mxu0
        %v1337 = vadd.f32 0.0, %v1336
        %v1338 = vpop.f32.mrb[0].mxu0
        %1339 = vmatprep.mubr.f32.mxu0 0.0
        %1340 = vmatmul.mubr.f32.gmra.mrb[0].mxu0 %v1150
        %v1341 = vpop.f32.mrb[0].mxu0
        %v1342 = vadd.f32 0.0, %v1341
        %v1343 = vpop.f32.mrb[0].mxu0
        %1344 = vmatprep.mubr.f32.mxu0 0.0
        %1345 = vmatmul.mubr.f32.gmra.mrb[0].mxu0 %v1153
        %v1346 = vpop.f32.mrb[0].mxu0
        %v1347 = vadd.f32 0.0, %v1346
        %v1348 = vpop.f32.mrb[0].mxu0
        %1349 = vmatprep.mubr.f32.mxu0 0.0
        %1350 = vmatmul.mubr.f32.gmra.mrb[0].mxu0 %v1156
        %v1351 = vpop.f32.mrb[0].mxu0
        %v1352 = vadd.f32 0.0, %v1351
        %v1353 = vpop.f32.mrb[0].mxu0
        %1354 = vmatprep.mubr.f32.mxu0 0.0
        %1355 = vmatmul.mubr.f32.gmra.mrb[0].mxu0 %v1159
        %v1356 = vpop.f32.mrb[0].mxu0
        %v1357 = vadd.f32 0.0, %v1356
        %v1358 = vpop.f32.mrb[0].mxu0
        %1359 = vmatprep.mubr.f32.mxu0 0.0
        %1360 = vmatmul.mubr.f32.gmra.mrb[0].mxu0 %v1162
        %v1361 = vpop.f32.mrb[0].mxu0
        %v1362 = vadd.f32 0.0, %v1361
        %v1363 = vpop.f32.mrb[0].mxu0
        %1364 = vmatprep.mubr.f32.mxu0 0.0
        %1365 = vmatmul.mubr.f32.gmra.mrb[0].mxu0 %v1165
        %v1366 = vpop.f32.mrb[0].mxu0
        %v1367 = vadd.f32 0.0, %v1366
        %v1368 = vpop.f32.mrb[0].mxu0
        %1369 = vmatprep.mubr.f32.mxu0 0.0
        %1370 = vmatmul.mubr.f32.gmra.mrb[0].mxu0 %v1168
        %v1371 = vpop.f32.mrb[0].mxu0
        %v1372 = vadd.f32 0.0, %v1371
        %v1373 = vpop.f32.mrb[0].mxu0
        %1374 = vmatprep.mubr.f32.mxu0 0.0
        %1375 = vmatmul.mubr.f32.gmra.mrb[0].mxu0 %v1171
        %v1376 = vpop.f32.mrb[0].mxu0
        %v1377 = vadd.f32 0.0, %v1376
        %v1378 = vpop.f32.mrb[0].mxu0
        %1379 = vmatprep.mubr.f32.mxu0 0.0
        %1380 = vmatmul.mubr.f32.gmra.mrb[0].mxu0 %v1174
        %v1381 = vpop.f32.mrb[0].mxu0
        %v1382 = vadd.f32 0.0, %v1381
        %v1383 = vpop.f32.mrb[0].mxu0
        %1384 = vmatprep.mubr.f32.mxu0 0.0
        %1385 = vmatmul.mubr.f32.gmra.mrb[0].mxu0 %v1177
        %v1386 = vpop.f32.mrb[0].mxu0
        %v1387 = vadd.f32 0.0, %v1386
        %v1388 = vpop.f32.mrb[0].mxu0
        %1389 = vmatprep.mubr.f32.mxu0 0.0
        %1390 = vmatmul.mubr.f32.gmra.mrb[0].mxu0 %v1180
        %v1391 = vpop.f32.mrb[0].mxu0
        %v1392 = vadd.f32 0.0, %v1391
        %v1393 = vpop.f32.mrb[0].mxu0
        %1394 = vmatprep.mubr.f32.mxu0 0.0
        %1395 = vmatmul.mubr.f32.gmra.mrb[0].mxu0 %v1183
        %v1396 = vpop.f32.mrb[0].mxu0
        %v1397 = vadd.f32 0.0, %v1396
        %v1398 = vpop.f32.mrb[0].mxu0
        %1399 = vmatprep.mubr.f32.mxu0 0.0
        %1400 = vmatmul.mubr.f32.gmra.mrb[0].mxu0 %v1186
        %v1401 = vpop.f32.mrb[0].mxu0
        %v1402 = vadd.f32 0.0, %v1401
        %v1403 = vpop.f32.mrb[0].mxu0
        %1404 = vmatprep.mubr.f32.mxu0 0.0
        %1405 = vmatmul.mubr.f32.gmra.mrb[0].mxu0 %v1189
        %v1406 = vpop.f32.mrb[0].mxu0
        %v1407 = vadd.f32 0.0, %v1406
        %v1408 = vpop.f32.mrb[0].mxu0
        %1409 = vmatprep.mubr.f32.mxu0 0.0
        %1410 = vmatmul.mubr.f32.gmra.mrb[0].mxu0 %v1192
        %v1411 = vpop.f32.mrb[0].mxu0
        %v1412 = vadd.f32 0.0, %v1411
        %v1413 = vpop.f32.mrb[0].mxu0
        %1414 = vmatprep.mubr.f32.mxu0 0.0
        %1415 = vmatmul.mubr.f32.gmra.mrb[0].mxu0 %v1195
        %v1416 = vpop.f32.mrb[0].mxu0
        %v1417 = vadd.f32 0.0, %v1416
        %v1418 = vpop.f32.mrb[0].mxu0
        %1419 = vmatprep.mubr.f32.mxu0 0.0
        %1420 = vmatmul.mubr.f32.gmra.mrb[0].mxu0 %v1198
        %v1421 = vpop.f32.mrb[0].mxu0
        %v1422 = vadd.f32 0.0, %v1421
        %v1423 = vpop.f32.mrb[0].mxu0
        %1424 = vdwg.mxu0
        %v1426 = vsel %vm1103, %v849, 0
        %v1429 = vsel %vm1103, %v852, 0
        %v1432 = vsel %vm1103, %v857, 0
        %v1435 = vsel %vm1103, %v860, 0
        %v1438 = vsel %vm1103, %v865, 0
        %v1441 = vsel %vm1103, %v868, 0
        %v1444 = vsel %vm1103, %v873, 0
        %v1447 = vsel %vm1103, %v876, 0
        %v1450 = vsel %vm1103, %v881, 0
        %v1453 = vsel %vm1103, %v884, 0
        %v1456 = vsel %vm1103, %v889, 0
        %v1459 = vsel %vm1103, %v892, 0
        %v1462 = vsel %vm1103, %v897, 0
        %v1465 = vsel %vm1103, %v900, 0
        %v1468 = vsel %vm1103, %v905, 0
        %v1471 = vsel %vm1103, %v908, 0
        %v1474 = vsel %vm1103, %v913, 0
        %v1477 = vsel %vm1103, %v916, 0
        %v1480 = vsel %vm1103, %v921, 0
        %v1483 = vsel %vm1103, %v924, 0
        %v1486 = vsel %vm1103, %v929, 0
        %v1489 = vsel %vm1103, %v932, 0
        %v1492 = vsel %vm1103, %v937, 0
        %v1495 = vsel %vm1103, %v940, 0
        %v1498 = vsel %vm1103, %v945, 0
        %v1501 = vsel %vm1103, %v948, 0
        %v1504 = vsel %vm1103, %v953, 0
        %v1507 = vsel %vm1103, %v956, 0
        %v1510 = vsel %vm1103, %v961, 0
        %v1513 = vsel %vm1103, %v964, 0
        %v1516 = vsel %vm1103, %v969, 0
        %v1519 = vsel %vm1103, %v972, 0
        %1521 = vmatprep.subr.mxu0 0.0
        %1522 = vmatpush1.msra.mxu0 %v605
        %1523 = vmatprep.subr.mxu0 0.0
        %1524 = vmatpush1.msra.mxu0 %v606
        %1525 = vmatprep.subr.mxu0 0.0
        %1526 = vmatpush1.msra.mxu0 %v607
        %1527 = vmatprep.subr.mxu0 0.0
        %1528 = vmatpush1.msra.mxu0 %v608
        %1529 = vmatprep.subr.mxu0 0.0
        %1530 = vmatpush1.msra.mxu0 0.0
        %1531 = vmatprep.subr.mxu0 0.0
        %1532 = vmatpush1.msra.mxu0 0.0
        %1533 = vmatprep.subr.mxu0 0.0
        %1534 = vmatpush1.msra.mxu0 0.0
        %1535 = vmatprep.subr.mxu0 0.0
        %1536 = vmatpush1.msra.mxu0 0.0
        %1537 = vmatprep.subr.mxu0 0.0
        %1538 = vmatpush1.msra.mxu0 0.0
        %1539 = vmatprep.subr.mxu0 0.0
        %1540 = vmatpush1.msra.mxu0 0.0
        %1541 = vmatprep.subr.mxu0 0.0
        %1542 = vmatpush1.msra.mxu0 0.0
        %1543 = vmatprep.subr.mxu0 0.0
        %1544 = vmatpush1.msra.mxu0 0.0
        %1545 = vmatprep.subr.mxu0 0.0
        %1546 = vmatpush1.msra.mxu0 0.0
        %1547 = vmatprep.subr.mxu0 0.0
        %1548 = vmatpush1.msra.mxu0 0.0
        %1549 = vmatprep.subr.mxu0 0.0
        %1550 = vmatpush1.msra.mxu0 0.0
        %1551 = vmatprep.subr.mxu0 0.0
        %1552 = vmatpush1.msra.mxu0 0.0
        %1553 = vmatprep.subr.mxu0 0.0
        %1554 = vmatpush1.msra.mxu0 0.0
        %1555 = vmatprep.subr.mxu0 0.0
        %1556 = vmatpush1.msra.mxu0 0.0
        %1557 = vmatprep.subr.mxu0 0.0
        %1558 = vmatpush1.msra.mxu0 0.0
        %1559 = vmatprep.subr.mxu0 0.0
        %1560 = vmatpush1.msra.mxu0 0.0
        %1561 = vmatprep.subr.mxu0 0.0
        %1562 = vmatpush1.msra.mxu0 0.0
        %1563 = vmatprep.subr.mxu0 0.0
        %1564 = vmatpush1.msra.mxu0 0.0
        %1565 = vmatprep.subr.mxu0 0.0
        %1566 = vmatpush1.msra.mxu0 0.0
        %1567 = vmatprep.subr.mxu0 0.0
        %1568 = vmatpush1.msra.mxu0 0.0
        %1569 = vmatprep.subr.mxu0 0.0
        %1570 = vmatpush1.msra.mxu0 0.0
        %1571 = vmatprep.subr.mxu0 0.0
        %1572 = vmatpush1.msra.mxu0 0.0
        %1573 = vmatprep.subr.mxu0 0.0
        %1574 = vmatpush1.msra.mxu0 0.0
        %1575 = vmatprep.subr.mxu0 0.0
        %1576 = vmatpush1.msra.mxu0 0.0
        %1577 = vmatprep.subr.mxu0 0.0
        %1578 = vmatpush1.msra.mxu0 0.0
        %1579 = vmatprep.subr.mxu0 0.0
        %1580 = vmatpush1.msra.mxu0 0.0
        %1581 = vmatprep.subr.mxu0 0.0
        %1582 = vmatpush1.msra.mxu0 0.0
        %1583 = vmatprep.subr.mxu0 0.0
        %1584 = vmatpush1.msra.mxu0 0.0
        %1585 = vmatprep.mubr.f32.mxu0 0.0
        %1586 = vmatmul.mubr.f32.gmra.mrb[0].mxu0 %v1426
        %v1587 = vpop.f32.mrb[0].mxu0
        %v1588 = vadd.f32 %v1267, %v1587
        %v1589 = vpop.f32.mrb[0].mxu0
        %1590 = vmatprep.mubr.f32.mxu0 0.0
        %1591 = vmatmul.mubr.f32.gmra.mrb[0].mxu0 %v1429
        %v1592 = vpop.f32.mrb[0].mxu0
        %v1593 = vadd.f32 %v1272, %v1592
        %v1594 = vpop.f32.mrb[0].mxu0
        %1595 = vmatprep.mubr.f32.mxu0 0.0
        %1596 = vmatmul.mubr.f32.gmra.mrb[0].mxu0 %v1432
        %v1597 = vpop.f32.mrb[0].mxu0
        %v1598 = vadd.f32 %v1277, %v1597
        %v1599 = vpop.f32.mrb[0].mxu0
        %1600 = vmatprep.mubr.f32.mxu0 0.0
        %1601 = vmatmul.mubr.f32.gmra.mrb[0].mxu0 %v1435
        %v1602 = vpop.f32.mrb[0].mxu0
        %v1603 = vadd.f32 %v1282, %v1602
        %v1604 = vpop.f32.mrb[0].mxu0
        %1605 = vmatprep.mubr.f32.mxu0 0.0
        %1606 = vmatmul.mubr.f32.gmra.mrb[0].mxu0 %v1438
        %v1607 = vpop.f32.mrb[0].mxu0
        %v1608 = vadd.f32 %v1287, %v1607
        %v1609 = vpop.f32.mrb[0].mxu0
        %1610 = vmatprep.mubr.f32.mxu0 0.0
        %1611 = vmatmul.mubr.f32.gmra.mrb[0].mxu0 %v1441
        %v1612 = vpop.f32.mrb[0].mxu0
        %v1613 = vadd.f32 %v1292, %v1612
        %v1614 = vpop.f32.mrb[0].mxu0
        %1615 = vmatprep.mubr.f32.mxu0 0.0
        %1616 = vmatmul.mubr.f32.gmra.mrb[0].mxu0 %v1444
        %v1617 = vpop.f32.mrb[0].mxu0
        %v1618 = vadd.f32 %v1297, %v1617
        %v1619 = vpop.f32.mrb[0].mxu0
        %1620 = vmatprep.mubr.f32.mxu0 0.0
        %1621 = vmatmul.mubr.f32.gmra.mrb[0].mxu0 %v1447
        %v1622 = vpop.f32.mrb[0].mxu0
        %v1623 = vadd.f32 %v1302, %v1622
        %v1624 = vpop.f32.mrb[0].mxu0
        %1625 = vmatprep.mubr.f32.mxu0 0.0
        %1626 = vmatmul.mubr.f32.gmra.mrb[0].mxu0 %v1450
        %v1627 = vpop.f32.mrb[0].mxu0
        %v1628 = vadd.f32 %v1307, %v1627
        %v1629 = vpop.f32.mrb[0].mxu0
        %1630 = vmatprep.mubr.f32.mxu0 0.0
        %1631 = vmatmul.mubr.f32.gmra.mrb[0].mxu0 %v1453
        %v1632 = vpop.f32.mrb[0].mxu0
        %v1633 = vadd.f32 %v1312, %v1632
        %v1634 = vpop.f32.mrb[0].mxu0
        %1635 = vmatprep.mubr.f32.mxu0 0.0
        %1636 = vmatmul.mubr.f32.gmra.mrb[0].mxu0 %v1456
        %v1637 = vpop.f32.mrb[0].mxu0
        %v1638 = vadd.f32 %v1317, %v1637
        %v1639 = vpop.f32.mrb[0].mxu0
        %1640 = vmatprep.mubr.f32.mxu0 0.0
        %1641 = vmatmul.mubr.f32.gmra.mrb[0].mxu0 %v1459
        %v1642 = vpop.f32.mrb[0].mxu0
        %v1643 = vadd.f32 %v1322, %v1642
        %v1644 = vpop.f32.mrb[0].mxu0
        %1645 = vmatprep.mubr.f32.mxu0 0.0
        %1646 = vmatmul.mubr.f32.gmra.mrb[0].mxu0 %v1462
        %v1647 = vpop.f32.mrb[0].mxu0
        %v1648 = vadd.f32 %v1327, %v1647
        %v1649 = vpop.f32.mrb[0].mxu0
        %1650 = vmatprep.mubr.f32.mxu0 0.0
        %1651 = vmatmul.mubr.f32.gmra.mrb[0].mxu0 %v1465
        %v1652 = vpop.f32.mrb[0].mxu0
        %v1653 = vadd.f32 %v1332, %v1652
        %v1654 = vpop.f32.mrb[0].mxu0
        %1655 = vmatprep.mubr.f32.mxu0 0.0
        %1656 = vmatmul.mubr.f32.gmra.mrb[0].mxu0 %v1468
        %v1657 = vpop.f32.mrb[0].mxu0
        %v1658 = vadd.f32 %v1337, %v1657
        %v1659 = vpop.f32.mrb[0].mxu0
        %1660 = vmatprep.mubr.f32.mxu0 0.0
        %1661 = vmatmul.mubr.f32.gmra.mrb[0].mxu0 %v1471
        %v1662 = vpop.f32.mrb[0].mxu0
        %v1663 = vadd.f32 %v1342, %v1662
        %v1664 = vpop.f32.mrb[0].mxu0
        %1665 = vmatprep.mubr.f32.mxu0 0.0
        %1666 = vmatmul.mubr.f32.gmra.mrb[0].mxu0 %v1474
        %v1667 = vpop.f32.mrb[0].mxu0
        %v1668 = vadd.f32 %v1347, %v1667
        %v1669 = vpop.f32.mrb[0].mxu0
        %1670 = vmatprep.mubr.f32.mxu0 0.0
        %1671 = vmatmul.mubr.f32.gmra.mrb[0].mxu0 %v1477
        %v1672 = vpop.f32.mrb[0].mxu0
        %v1673 = vadd.f32 %v1352, %v1672
        %v1674 = vpop.f32.mrb[0].mxu0
        %1675 = vmatprep.mubr.f32.mxu0 0.0
        %1676 = vmatmul.mubr.f32.gmra.mrb[0].mxu0 %v1480
        %v1677 = vpop.f32.mrb[0].mxu0
        %v1678 = vadd.f32 %v1357, %v1677
        %v1679 = vpop.f32.mrb[0].mxu0
        %1680 = vmatprep.mubr.f32.mxu0 0.0
        %1681 = vmatmul.mubr.f32.gmra.mrb[0].mxu0 %v1483
        %v1682 = vpop.f32.mrb[0].mxu0
        %v1683 = vadd.f32 %v1362, %v1682
        %v1684 = vpop.f32.mrb[0].mxu0
        %1685 = vmatprep.mubr.f32.mxu0 0.0
        %1686 = vmatmul.mubr.f32.gmra.mrb[0].mxu0 %v1486
        %v1687 = vpop.f32.mrb[0].mxu0
        %v1688 = vadd.f32 %v1367, %v1687
        %v1689 = vpop.f32.mrb[0].mxu0
        %1690 = vmatprep.mubr.f32.mxu0 0.0
        %1691 = vmatmul.mubr.f32.gmra.mrb[0].mxu0 %v1489
        %v1692 = vpop.f32.mrb[0].mxu0
        %v1693 = vadd.f32 %v1372, %v1692
        %v1694 = vpop.f32.mrb[0].mxu0
        %1695 = vmatprep.mubr.f32.mxu0 0.0
        %1696 = vmatmul.mubr.f32.gmra.mrb[0].mxu0 %v1492
        %v1697 = vpop.f32.mrb[0].mxu0
        %v1698 = vadd.f32 %v1377, %v1697
        %v1699 = vpop.f32.mrb[0].mxu0
        %1700 = vmatprep.mubr.f32.mxu0 0.0
        %1701 = vmatmul.mubr.f32.gmra.mrb[0].mxu0 %v1495
        %v1702 = vpop.f32.mrb[0].mxu0
        %v1703 = vadd.f32 %v1382, %v1702
        %v1704 = vpop.f32.mrb[0].mxu0
        %1705 = vmatprep.mubr.f32.mxu0 0.0
        %1706 = vmatmul.mubr.f32.gmra.mrb[0].mxu0 %v1498
        %v1707 = vpop.f32.mrb[0].mxu0
        %v1708 = vadd.f32 %v1387, %v1707
        %v1709 = vpop.f32.mrb[0].mxu0
        %1710 = vmatprep.mubr.f32.mxu0 0.0
        %1711 = vmatmul.mubr.f32.gmra.mrb[0].mxu0 %v1501
        %v1712 = vpop.f32.mrb[0].mxu0
        %v1713 = vadd.f32 %v1392, %v1712
        %v1714 = vpop.f32.mrb[0].mxu0
        %1715 = vmatprep.mubr.f32.mxu0 0.0
        %1716 = vmatmul.mubr.f32.gmra.mrb[0].mxu0 %v1504
        %v1717 = vpop.f32.mrb[0].mxu0
        %v1718 = vadd.f32 %v1397, %v1717
        %v1719 = vpop.f32.mrb[0].mxu0
        %1720 = vmatprep.mubr.f32.mxu0 0.0
        %1721 = vmatmul.mubr.f32.gmra.mrb[0].mxu0 %v1507
        %v1722 = vpop.f32.mrb[0].mxu0
        %v1723 = vadd.f32 %v1402, %v1722
        %v1724 = vpop.f32.mrb[0].mxu0
        %1725 = vmatprep.mubr.f32.mxu0 0.0
        %1726 = vmatmul.mubr.f32.gmra.mrb[0].mxu0 %v1510
        %v1727 = vpop.f32.mrb[0].mxu0
        %v1728 = vadd.f32 %v1407, %v1727
        %v1729 = vpop.f32.mrb[0].mxu0
        %1730 = vmatprep.mubr.f32.mxu0 0.0
        %1731 = vmatmul.mubr.f32.gmra.mrb[0].mxu0 %v1513
        %v1732 = vpop.f32.mrb[0].mxu0
        %v1733 = vadd.f32 %v1412, %v1732
        %v1734 = vpop.f32.mrb[0].mxu0
        %1735 = vmatprep.mubr.f32.mxu0 0.0
        %1736 = vmatmul.mubr.f32.gmra.mrb[0].mxu0 %v1516
        %v1737 = vpop.f32.mrb[0].mxu0
        %v1738 = vadd.f32 %v1417, %v1737
        %v1739 = vpop.f32.mrb[0].mxu0
        %1740 = vmatprep.mubr.f32.mxu0 0.0
        %1741 = vmatmul.mubr.f32.gmra.mrb[0].mxu0 %v1519
        %v1742 = vpop.f32.mrb[0].mxu0
        %v1743 = vadd.f32 %v1422, %v1742
        %v1744 = vpop.f32.mrb[0].mxu0
        %1745 = vdwg.mxu0
        %v1746 = vlaneseq
        %v1747 = vshrl.u32 %v1746, 7
        %v1748 = vsub.s32 0, %v1747
        %v1749 = vrot.slane %v613, %v1748
        %v1750 = vadd.f32 %v1588, %v1749
        %v1751 = vadd.f32 %v1593, %v1749
        %v1752 = vadd.f32 %v1598, %v1749
        %v1753 = vadd.f32 %v1603, %v1749
        %v1754 = vadd.f32 %v1608, %v1749
        %v1755 = vadd.f32 %v1613, %v1749
        %v1756 = vadd.f32 %v1618, %v1749
        %v1757 = vadd.f32 %v1623, %v1749
        %v1758 = vadd.f32 %v1628, %v1749
        %v1759 = vadd.f32 %v1633, %v1749
        %v1760 = vadd.f32 %v1638, %v1749
        %v1761 = vadd.f32 %v1643, %v1749
        %v1762 = vadd.f32 %v1648, %v1749
        %v1763 = vadd.f32 %v1653, %v1749
        %v1764 = vadd.f32 %v1658, %v1749
        %v1765 = vadd.f32 %v1663, %v1749
        %v1766 = vadd.f32 %v1668, %v1749
        %v1767 = vadd.f32 %v1673, %v1749
        %v1768 = vadd.f32 %v1678, %v1749
        %v1769 = vadd.f32 %v1683, %v1749
        %v1770 = vadd.f32 %v1688, %v1749
        %v1771 = vadd.f32 %v1693, %v1749
        %v1772 = vadd.f32 %v1698, %v1749
        %v1773 = vadd.f32 %v1703, %v1749
        %v1774 = vadd.f32 %v1708, %v1749
        %v1775 = vadd.f32 %v1713, %v1749
        %v1776 = vadd.f32 %v1718, %v1749
        %v1777 = vadd.f32 %v1723, %v1749
        %v1778 = vadd.f32 %v1728, %v1749
        %v1779 = vadd.f32 %v1733, %v1749
        %v1780 = vadd.f32 %v1738, %v1749
        %v1781 = vadd.f32 %v1743, %v1749
        %v1782 = vmax.f32 %v1750, 0.0
        %v1783 = vmax.f32 %v1751, 0.0
        %v1784 = vmax.f32 %v1752, 0.0
        %v1785 = vmax.f32 %v1753, 0.0
        %v1786 = vmax.f32 %v1754, 0.0
        %v1787 = vmax.f32 %v1755, 0.0
        %v1788 = vmax.f32 %v1756, 0.0
        %v1789 = vmax.f32 %v1757, 0.0
        %v1790 = vmax.f32 %v1758, 0.0
        %v1791 = vmax.f32 %v1759, 0.0
        %v1792 = vmax.f32 %v1760, 0.0
        %v1793 = vmax.f32 %v1761, 0.0
        %v1794 = vmax.f32 %v1762, 0.0
        %v1795 = vmax.f32 %v1763, 0.0
        %v1796 = vmax.f32 %v1764, 0.0
        %v1797 = vmax.f32 %v1765, 0.0
        %v1798 = vmax.f32 %v1766, 0.0
        %v1799 = vmax.f32 %v1767, 0.0
        %v1800 = vmax.f32 %v1768, 0.0
        %v1801 = vmax.f32 %v1769, 0.0
        %v1802 = vmax.f32 %v1770, 0.0
        %v1803 = vmax.f32 %v1771, 0.0
        %v1804 = vmax.f32 %v1772, 0.0
        %v1805 = vmax.f32 %v1773, 0.0
        %v1806 = vmax.f32 %v1774, 0.0
        %v1807 = vmax.f32 %v1775, 0.0
        %v1808 = vmax.f32 %v1776, 0.0
        %v1809 = vmax.f32 %v1777, 0.0
        %v1810 = vmax.f32 %v1778, 0.0
        %v1811 = vmax.f32 %v1779, 0.0
        %v1812 = vmax.f32 %v1780, 0.0
        %v1813 = vmax.f32 %v1781, 0.0
        %v1814 = vpack.c.bf16 %v1783, %v1782
        %v1815 = vpack.c.bf16 %v1785, %v1784
        %v1816 = vpack.c.bf16 %v1787, %v1786
        %v1817 = vpack.c.bf16 %v1789, %v1788
        %v1818 = vpack.c.bf16 %v1791, %v1790
        %v1819 = vpack.c.bf16 %v1793, %v1792
        %v1820 = vpack.c.bf16 %v1795, %v1794
        %v1821 = vpack.c.bf16 %v1797, %v1796
        %v1822 = vpack.c.bf16 %v1799, %v1798
        %v1823 = vpack.c.bf16 %v1801, %v1800
        %v1824 = vpack.c.bf16 %v1803, %v1802
        %v1825 = vpack.c.bf16 %v1805, %v1804
        %v1826 = vpack.c.bf16 %v1807, %v1806
        %v1827 = vpack.c.bf16 %v1809, %v1808
        %v1828 = vpack.c.bf16 %v1811, %v1810
        %v1829 = vpack.c.bf16 %v1813, %v1812
        %v1846 = vunpack.c.l.b16 %v589
        %v1847 = vunpack.c.h.b16 %v589
        %v1848 = vunpack.c.l.b16 %v590
        %v1849 = vunpack.c.h.b16 %v590
        %v1850 = vunpack.c.l.b16 %v591
        %v1851 = vunpack.c.h.b16 %v591
        %v1852 = vunpack.c.l.b16 %v592
        %v1853 = vunpack.c.h.b16 %v592
        %v1854 = vunpack.c.l.b16 %v593
        %v1855 = vunpack.c.h.b16 %v593
        %v1856 = vunpack.c.l.b16 %v594
        %v1857 = vunpack.c.h.b16 %v594
        %v1858 = vunpack.c.l.b16 %v595
        %v1859 = vunpack.c.h.b16 %v595
        %v1860 = vunpack.c.l.b16 %v596
        %v1861 = vunpack.c.h.b16 %v596
        %v1862 = vunpack.c.l.b16 %v597
        %v1863 = vunpack.c.h.b16 %v597
        %v1864 = vunpack.c.l.b16 %v598
        %v1865 = vunpack.c.h.b16 %v598
        %v1866 = vunpack.c.l.b16 %v599
        %v1867 = vunpack.c.h.b16 %v599
        %v1868 = vunpack.c.l.b16 %v600
        %v1869 = vunpack.c.h.b16 %v600
        %v1870 = vunpack.c.l.b16 %v601
        %v1871 = vunpack.c.h.b16 %v601
        %v1872 = vunpack.c.l.b16 %v602
        %v1873 = vunpack.c.h.b16 %v602
        %v1874 = vunpack.c.l.b16 %v603
        %v1875 = vunpack.c.h.b16 %v603
        %v1876 = vunpack.c.l.b16 %v604
        %v1877 = vunpack.c.h.b16 %v604
        %v1878 = vpack.c.b16 %v1848, %v1846
        %v1879 = vpack.c.b16 %v1849, %v1847
        %v1880 = vpack.c.b16 %v1852, %v1850
        %v1881 = vpack.c.b16 %v1853, %v1851
        %v1882 = vpack.c.b16 %v1856, %v1854
        %v1883 = vpack.c.b16 %v1857, %v1855
        %v1884 = vpack.c.b16 %v1860, %v1858
        %v1885 = vpack.c.b16 %v1861, %v1859
        %v1886 = vpack.c.b16 %v1864, %v1862
        %v1887 = vpack.c.b16 %v1865, %v1863
        %v1888 = vpack.c.b16 %v1868, %v1866
        %v1889 = vpack.c.b16 %v1869, %v1867
        %v1890 = vpack.c.b16 %v1872, %v1870
        %v1891 = vpack.c.b16 %v1873, %v1871
        %v1892 = vpack.c.b16 %v1876, %v1874
        %v1893 = vpack.c.b16 %v1877, %v1875
        %1910 = vmatprep.subr.bf16.mxu0 0
        %1911 = vmatpush1.bf16.msra.mxu0 %v1814
        %1912 = vmatprep.subr.bf16.mxu0 0
        %1913 = vmatpush1.bf16.msra.mxu0 %v1815
        %1914 = vmatprep.subr.bf16.mxu0 0
        %1915 = vmatpush1.bf16.msra.mxu0 %v1816
        %1916 = vmatprep.subr.bf16.mxu0 0
        %1917 = vmatpush1.bf16.msra.mxu0 %v1817
        %1918 = vmatprep.subr.bf16.mxu0 0
        %1919 = vmatpush1.bf16.msra.mxu0 %v1818
        %1920 = vmatprep.subr.bf16.mxu0 0
        %1921 = vmatpush1.bf16.msra.mxu0 %v1819
        %1922 = vmatprep.subr.bf16.mxu0 0
        %1923 = vmatpush1.bf16.msra.mxu0 %v1820
        %1924 = vmatprep.subr.bf16.mxu0 0
        %1925 = vmatpush1.bf16.msra.mxu0 %v1821
        %1926 = vmatprep.subr.bf16.mxu0 0
        %1927 = vmatpush1.bf16.msra.mxu0 %v1822
        %1928 = vmatprep.subr.bf16.mxu0 0
        %1929 = vmatpush1.bf16.msra.mxu0 %v1823
        %1930 = vmatprep.subr.bf16.mxu0 0
        %1931 = vmatpush1.bf16.msra.mxu0 %v1824
        %1932 = vmatprep.subr.bf16.mxu0 0
        %1933 = vmatpush1.bf16.msra.mxu0 %v1825
        %1934 = vmatprep.subr.bf16.mxu0 0
        %1935 = vmatpush1.bf16.msra.mxu0 %v1826
        %1936 = vmatprep.subr.bf16.mxu0 0
        %1937 = vmatpush1.bf16.msra.mxu0 %v1827
        %1938 = vmatprep.subr.bf16.mxu0 0
        %1939 = vmatpush1.bf16.msra.mxu0 %v1828
        %1940 = vmatprep.subr.bf16.mxu0 0
        %1941 = vmatpush1.bf16.msra.mxu0 %v1829
        %1942 = vmatprep.mubr.bf16.mxu0 %v1879
        %1943 = vmatmul.mubr.bf16.gmra.mrb[0].mxu0 %v1878
        %v1944 = vpop.f32.mrb[0].mxu0
        %v1945 = vadd.f32 0.0, %v1944
        %v1946 = vpop.f32.mrb[0].mxu0
        %v1947 = vpop.f32.mrb[0].mxu0
        %v1948 = vadd.f32 0.0, %v1947
        %v1949 = vpop.f32.mrb[0].mxu0
        %1950 = vmatprep.mubr.bf16.mxu0 %v1881
        %1951 = vmatmul.mubr.bf16.gmra.mrb[0].mxu0 %v1880
        %v1952 = vpop.f32.mrb[0].mxu0
        %v1953 = vadd.f32 0.0, %v1952
        %v1954 = vpop.f32.mrb[0].mxu0
        %v1955 = vpop.f32.mrb[0].mxu0
        %v1956 = vadd.f32 0.0, %v1955
        %v1957 = vpop.f32.mrb[0].mxu0
        %1958 = vmatprep.mubr.bf16.mxu0 %v1883
        %1959 = vmatmul.mubr.bf16.gmra.mrb[0].mxu0 %v1882
        %v1960 = vpop.f32.mrb[0].mxu0
        %v1961 = vadd.f32 0.0, %v1960
        %v1962 = vpop.f32.mrb[0].mxu0
        %v1963 = vpop.f32.mrb[0].mxu0
        %v1964 = vadd.f32 0.0, %v1963
        %v1965 = vpop.f32.mrb[0].mxu0
        %1966 = vmatprep.mubr.bf16.mxu0 %v1885
        %1967 = vmatmul.mubr.bf16.gmra.mrb[0].mxu0 %v1884
        %v1968 = vpop.f32.mrb[0].mxu0
        %v1969 = vadd.f32 0.0, %v1968
        %v1970 = vpop.f32.mrb[0].mxu0
        %v1971 = vpop.f32.mrb[0].mxu0
        %v1972 = vadd.f32 0.0, %v1971
        %v1973 = vpop.f32.mrb[0].mxu0
        %1974 = vmatprep.mubr.bf16.mxu0 %v1887
        %1975 = vmatmul.mubr.bf16.gmra.mrb[0].mxu0 %v1886
        %v1976 = vpop.f32.mrb[0].mxu0
        %v1977 = vadd.f32 0.0, %v1976
        %v1978 = vpop.f32.mrb[0].mxu0
        %v1979 = vpop.f32.mrb[0].mxu0
        %v1980 = vadd.f32 0.0, %v1979
        %v1981 = vpop.f32.mrb[0].mxu0
        %1982 = vmatprep.mubr.bf16.mxu0 %v1889
        %1983 = vmatmul.mubr.bf16.gmra.mrb[0].mxu0 %v1888
        %v1984 = vpop.f32.mrb[0].mxu0
        %v1985 = vadd.f32 0.0, %v1984
        %v1986 = vpop.f32.mrb[0].mxu0
        %v1987 = vpop.f32.mrb[0].mxu0
        %v1988 = vadd.f32 0.0, %v1987
        %v1989 = vpop.f32.mrb[0].mxu0
        %1990 = vmatprep.mubr.bf16.mxu0 %v1891
        %1991 = vmatmul.mubr.bf16.gmra.mrb[0].mxu0 %v1890
        %v1992 = vpop.f32.mrb[0].mxu0
        %v1993 = vadd.f32 0.0, %v1992
        %v1994 = vpop.f32.mrb[0].mxu0
        %v1995 = vpop.f32.mrb[0].mxu0
        %v1996 = vadd.f32 0.0, %v1995
        %v1997 = vpop.f32.mrb[0].mxu0
        %1998 = vmatprep.mubr.bf16.mxu0 %v1893
        %1999 = vmatmul.mubr.bf16.gmra.mrb[0].mxu0 %v1892
        %v2000 = vpop.f32.mrb[0].mxu0
        %v2001 = vadd.f32 0.0, %v2000
        %v2002 = vpop.f32.mrb[0].mxu0
        %v2003 = vpop.f32.mrb[0].mxu0
        %v2004 = vadd.f32 0.0, %v2003
        %v2005 = vpop.f32.mrb[0].mxu0
        %2006 = vdwg.mxu0
        %v2007 = vadd.f32 %v509, %v1945
        %v2008 = vadd.f32 %v510, %v1948
        %v2009 = vadd.f32 %v511, %v1953
        %v2010 = vadd.f32 %v512, %v1956
        %v2011 = vadd.f32 %v513, %v1961
        %v2012 = vadd.f32 %v514, %v1964
        %v2013 = vadd.f32 %v515, %v1969
        %v2014 = vadd.f32 %v516, %v1972
        %v2015 = vadd.f32 %v517, %v1977
        %v2016 = vadd.f32 %v518, %v1980
        %v2017 = vadd.f32 %v519, %v1985
        %v2018 = vadd.f32 %v520, %v1988
        %v2019 = vadd.f32 %v521, %v1993
        %v2020 = vadd.f32 %v522, %v1996
        %v2021 = vadd.f32 %v523, %v2001
        %v2022 = vadd.f32 %v524, %v2004
        %v2023 = vld [vmem:[%s3 + $0x48] sm:$0xff]
        %v2024 = vld [vmem:[%s3 + $0x50] sm:$0xff]
        %v2025 = vld [vmem:[%s3 + $0x58] sm:$0xff]
        %v2026 = vld [vmem:[%s3 + $0x60] sm:$0xff]
        %v2027 = vld [vmem:[%s3 + $0x68] sm:$0xff]
        %v2028 = vld [vmem:[%s3 + $0x70] sm:$0xff]
        %v2029 = vld [vmem:[%s3 + $0x78] sm:$0xff]
        %v2030 = vld [vmem:[%s3 + $0x80] sm:$0xff]
        %v2031 = vld [vmem:[%s4 + $0x2] sm:$0x1]
        %v2032 = vpack.c.bf16 %v2008, %v2007
        %v2033 = vpack.c.bf16 %v2010, %v2009
        %v2034 = vpack.c.bf16 %v2012, %v2011
        %v2035 = vpack.c.bf16 %v2014, %v2013
        %v2036 = vpack.c.bf16 %v2016, %v2015
        %v2037 = vpack.c.bf16 %v2018, %v2017
        %v2038 = vpack.c.bf16 %v2020, %v2019
        %v2039 = vpack.c.bf16 %v2022, %v2021
        %2040 = vmatprep.subr.bf16.mxu0 0
        %2041 = vmatpush1.bf16.msra.mxu0 %v2032
        %2042 = vmatprep.subr.bf16.mxu0 0
        %2043 = vmatpush1.bf16.msra.mxu0 %v2033
        %2044 = vmatprep.subr.bf16.mxu0 0
        %2045 = vmatpush1.bf16.msra.mxu0 %v2034
        %2046 = vmatprep.subr.bf16.mxu0 0
        %2047 = vmatpush1.bf16.msra.mxu0 %v2035
        %2048 = vmatprep.subr.bf16.mxu0 0
        %2049 = vmatpush1.bf16.msra.mxu0 %v2036
        %2050 = vmatprep.subr.bf16.mxu0 0
        %2051 = vmatpush1.bf16.msra.mxu0 %v2037
        %2052 = vmatprep.subr.bf16.mxu0 0
        %2053 = vmatpush1.bf16.msra.mxu0 %v2038
        %2054 = vmatprep.subr.bf16.mxu0 0
        %2055 = vmatpush1.bf16.msra.mxu0 %v2039
        %2056 = vmatprep.subr.bf16.mxu0 0
        %2057 = vmatpush1.bf16.msra.mxu0 0
        %2058 = vmatprep.subr.bf16.mxu0 0
        %2059 = vmatpush1.bf16.msra.mxu0 0
        %2060 = vmatprep.subr.bf16.mxu0 0
        %2061 = vmatpush1.bf16.msra.mxu0 0
        %2062 = vmatprep.subr.bf16.mxu0 0
        %2063 = vmatpush1.bf16.msra.mxu0 0
        %2064 = vmatprep.subr.bf16.mxu0 0
        %2065 = vmatpush1.bf16.msra.mxu0 0
        %2066 = vmatprep.subr.bf16.mxu0 0
        %2067 = vmatpush1.bf16.msra.mxu0 0
        %2068 = vmatprep.subr.bf16.mxu0 0
        %2069 = vmatpush1.bf16.msra.mxu0 0
        %2070 = vmatprep.subr.bf16.mxu0 0
        %2071 = vmatpush1.bf16.msra.mxu0 0
        %2072 = vmatprep.mubr.bf16.mxu0 0
        %2073 = vmatmul.mubr.bf16.gmra.mrb[0].mxu0 %v750
        %v2074 = vpop.f32.mrb[0].mxu0
        %v2075 = vadd.f32 0.0, %v2074
        %v2076 = vpop.f32.mrb[0].mxu0
        %v2077 = vpop.f32.mrb[0].mxu0
        %v2078 = vadd.f32 0.0, %v2077
        %v2079 = vpop.f32.mrb[0].mxu0
        %2080 = vmatprep.mubr.bf16.mxu0 0
        %2081 = vmatmul.mubr.bf16.gmra.mrb[0].mxu0 %v751
        %v2082 = vpop.f32.mrb[0].mxu0
        %v2083 = vadd.f32 0.0, %v2082
        %v2084 = vpop.f32.mrb[0].mxu0
        %v2085 = vpop.f32.mrb[0].mxu0
        %v2086 = vadd.f32 0.0, %v2085
        %v2087 = vpop.f32.mrb[0].mxu0
        %2088 = vmatprep.mubr.bf16.mxu0 0
        %2089 = vmatmul.mubr.bf16.gmra.mrb[0].mxu0 %v752
        %v2090 = vpop.f32.mrb[0].mxu0
        %v2091 = vadd.f32 0.0, %v2090
        %v2092 = vpop.f32.mrb[0].mxu0
        %v2093 = vpop.f32.mrb[0].mxu0
        %v2094 = vadd.f32 0.0, %v2093
        %v2095 = vpop.f32.mrb[0].mxu0
        %2096 = vmatprep.mubr.bf16.mxu0 0
        %2097 = vmatmul.mubr.bf16.gmra.mrb[0].mxu0 %v753
        %v2098 = vpop.f32.mrb[0].mxu0
        %v2099 = vadd.f32 0.0, %v2098
        %v2100 = vpop.f32.mrb[0].mxu0
        %v2101 = vpop.f32.mrb[0].mxu0
        %v2102 = vadd.f32 0.0, %v2101
        %v2103 = vpop.f32.mrb[0].mxu0
        %2104 = vmatprep.mubr.bf16.mxu0 0
        %2105 = vmatmul.mubr.bf16.gmra.mrb[0].mxu0 %v754
        %v2106 = vpop.f32.mrb[0].mxu0
        %v2107 = vadd.f32 0.0, %v2106
        %v2108 = vpop.f32.mrb[0].mxu0
        %v2109 = vpop.f32.mrb[0].mxu0
        %v2110 = vadd.f32 0.0, %v2109
        %v2111 = vpop.f32.mrb[0].mxu0
        %2112 = vmatprep.mubr.bf16.mxu0 0
        %2113 = vmatmul.mubr.bf16.gmra.mrb[0].mxu0 %v755
        %v2114 = vpop.f32.mrb[0].mxu0
        %v2115 = vadd.f32 0.0, %v2114
        %v2116 = vpop.f32.mrb[0].mxu0
        %v2117 = vpop.f32.mrb[0].mxu0
        %v2118 = vadd.f32 0.0, %v2117
        %v2119 = vpop.f32.mrb[0].mxu0
        %2120 = vmatprep.mubr.bf16.mxu0 0
        %2121 = vmatmul.mubr.bf16.gmra.mrb[0].mxu0 %v756
        %v2122 = vpop.f32.mrb[0].mxu0
        %v2123 = vadd.f32 0.0, %v2122
        %v2124 = vpop.f32.mrb[0].mxu0
        %v2125 = vpop.f32.mrb[0].mxu0
        %v2126 = vadd.f32 0.0, %v2125
        %v2127 = vpop.f32.mrb[0].mxu0
        %2128 = vmatprep.mubr.bf16.mxu0 0
        %2129 = vmatmul.mubr.bf16.gmra.mrb[0].mxu0 %v757
        %v2130 = vpop.f32.mrb[0].mxu0
        %v2131 = vadd.f32 0.0, %v2130
        %v2132 = vpop.f32.mrb[0].mxu0
        %v2133 = vpop.f32.mrb[0].mxu0
        %v2134 = vadd.f32 0.0, %v2133
        %v2135 = vpop.f32.mrb[0].mxu0
        %2136 = vmatprep.mubr.bf16.mxu0 0
        %2137 = vmatmul.mubr.bf16.gmra.mrb[0].mxu0 %v758
        %v2138 = vpop.f32.mrb[0].mxu0
        %v2139 = vadd.f32 0.0, %v2138
        %v2140 = vpop.f32.mrb[0].mxu0
        %v2141 = vpop.f32.mrb[0].mxu0
        %v2142 = vadd.f32 0.0, %v2141
        %v2143 = vpop.f32.mrb[0].mxu0
        %2144 = vmatprep.mubr.bf16.mxu0 0
        %2145 = vmatmul.mubr.bf16.gmra.mrb[0].mxu0 %v759
        %v2146 = vpop.f32.mrb[0].mxu0
        %v2147 = vadd.f32 0.0, %v2146
        %v2148 = vpop.f32.mrb[0].mxu0
        %v2149 = vpop.f32.mrb[0].mxu0
        %v2150 = vadd.f32 0.0, %v2149
        %v2151 = vpop.f32.mrb[0].mxu0
        %2152 = vmatprep.mubr.bf16.mxu0 0
        %2153 = vmatmul.mubr.bf16.gmra.mrb[0].mxu0 %v760
        %v2154 = vpop.f32.mrb[0].mxu0
        %v2155 = vadd.f32 0.0, %v2154
        %v2156 = vpop.f32.mrb[0].mxu0
        %v2157 = vpop.f32.mrb[0].mxu0
        %v2158 = vadd.f32 0.0, %v2157
        %v2159 = vpop.f32.mrb[0].mxu0
        %2160 = vmatprep.mubr.bf16.mxu0 0
        %2161 = vmatmul.mubr.bf16.gmra.mrb[0].mxu0 %v761
        %v2162 = vpop.f32.mrb[0].mxu0
        %v2163 = vadd.f32 0.0, %v2162
        %v2164 = vpop.f32.mrb[0].mxu0
        %v2165 = vpop.f32.mrb[0].mxu0
        %v2166 = vadd.f32 0.0, %v2165
        %v2167 = vpop.f32.mrb[0].mxu0
        %2168 = vmatprep.mubr.bf16.mxu0 0
        %2169 = vmatmul.mubr.bf16.gmra.mrb[0].mxu0 %v762
        %v2170 = vpop.f32.mrb[0].mxu0
        %v2171 = vadd.f32 0.0, %v2170
        %v2172 = vpop.f32.mrb[0].mxu0
        %v2173 = vpop.f32.mrb[0].mxu0
        %v2174 = vadd.f32 0.0, %v2173
        %v2175 = vpop.f32.mrb[0].mxu0
        %2176 = vmatprep.mubr.bf16.mxu0 0
        %2177 = vmatmul.mubr.bf16.gmra.mrb[0].mxu0 %v763
        %v2178 = vpop.f32.mrb[0].mxu0
        %v2179 = vadd.f32 0.0, %v2178
        %v2180 = vpop.f32.mrb[0].mxu0
        %v2181 = vpop.f32.mrb[0].mxu0
        %v2182 = vadd.f32 0.0, %v2181
        %v2183 = vpop.f32.mrb[0].mxu0
        %2184 = vmatprep.mubr.bf16.mxu0 0
        %2185 = vmatmul.mubr.bf16.gmra.mrb[0].mxu0 %v764
        %v2186 = vpop.f32.mrb[0].mxu0
        %v2187 = vadd.f32 0.0, %v2186
        %v2188 = vpop.f32.mrb[0].mxu0
        %v2189 = vpop.f32.mrb[0].mxu0
        %v2190 = vadd.f32 0.0, %v2189
        %v2191 = vpop.f32.mrb[0].mxu0
        %2192 = vmatprep.mubr.bf16.mxu0 0
        %2193 = vmatmul.mubr.bf16.gmra.mrb[0].mxu0 %v765
        %v2194 = vpop.f32.mrb[0].mxu0
        %v2195 = vadd.f32 0.0, %v2194
        %v2196 = vpop.f32.mrb[0].mxu0
        %v2197 = vpop.f32.mrb[0].mxu0
        %v2198 = vadd.f32 0.0, %v2197
        %v2199 = vpop.f32.mrb[0].mxu0
        %2200 = vmatprep.mubr.bf16.mxu0 0
        %2201 = vmatmul.mubr.bf16.gmra.mrb[0].mxu0 %v766
        %v2202 = vpop.f32.mrb[0].mxu0
        %v2203 = vadd.f32 0.0, %v2202
        %v2204 = vpop.f32.mrb[0].mxu0
        %v2205 = vpop.f32.mrb[0].mxu0
        %v2206 = vadd.f32 0.0, %v2205
        %v2207 = vpop.f32.mrb[0].mxu0
        %2208 = vmatprep.mubr.bf16.mxu0 0
        %2209 = vmatmul.mubr.bf16.gmra.mrb[0].mxu0 %v767
        %v2210 = vpop.f32.mrb[0].mxu0
        %v2211 = vadd.f32 0.0, %v2210
        %v2212 = vpop.f32.mrb[0].mxu0
        %v2213 = vpop.f32.mrb[0].mxu0
        %v2214 = vadd.f32 0.0, %v2213
        %v2215 = vpop.f32.mrb[0].mxu0
        %2216 = vmatprep.mubr.bf16.mxu0 0
        %2217 = vmatmul.mubr.bf16.gmra.mrb[0].mxu0 %v768
        %v2218 = vpop.f32.mrb[0].mxu0
        %v2219 = vadd.f32 0.0, %v2218
        %v2220 = vpop.f32.mrb[0].mxu0
        %v2221 = vpop.f32.mrb[0].mxu0
        %v2222 = vadd.f32 0.0, %v2221
        %v2223 = vpop.f32.mrb[0].mxu0
        %2224 = vmatprep.mubr.bf16.mxu0 0
        %2225 = vmatmul.mubr.bf16.gmra.mrb[0].mxu0 %v769
        %v2226 = vpop.f32.mrb[0].mxu0
        %v2227 = vadd.f32 0.0, %v2226
        %v2228 = vpop.f32.mrb[0].mxu0
        %v2229 = vpop.f32.mrb[0].mxu0
        %v2230 = vadd.f32 0.0, %v2229
        %v2231 = vpop.f32.mrb[0].mxu0
        %2232 = vmatprep.mubr.bf16.mxu0 0
        %2233 = vmatmul.mubr.bf16.gmra.mrb[0].mxu0 %v770
        %v2234 = vpop.f32.mrb[0].mxu0
        %v2235 = vadd.f32 0.0, %v2234
        %v2236 = vpop.f32.mrb[0].mxu0
        %v2237 = vpop.f32.mrb[0].mxu0
        %v2238 = vadd.f32 0.0, %v2237
        %v2239 = vpop.f32.mrb[0].mxu0
        %2240 = vmatprep.mubr.bf16.mxu0 0
        %2241 = vmatmul.mubr.bf16.gmra.mrb[0].mxu0 %v771
        %v2242 = vpop.f32.mrb[0].mxu0
        %v2243 = vadd.f32 0.0, %v2242
        %v2244 = vpop.f32.mrb[0].mxu0
        %v2245 = vpop.f32.mrb[0].mxu0
        %v2246 = vadd.f32 0.0, %v2245
        %v2247 = vpop.f32.mrb[0].mxu0
        %2248 = vmatprep.mubr.bf16.mxu0 0
        %2249 = vmatmul.mubr.bf16.gmra.mrb[0].mxu0 %v772
        %v2250 = vpop.f32.mrb[0].mxu0
        %v2251 = vadd.f32 0.0, %v2250
        %v2252 = vpop.f32.mrb[0].mxu0
        %v2253 = vpop.f32.mrb[0].mxu0
        %v2254 = vadd.f32 0.0, %v2253
        %v2255 = vpop.f32.mrb[0].mxu0
        %2256 = vmatprep.mubr.bf16.mxu0 0
        %2257 = vmatmul.mubr.bf16.gmra.mrb[0].mxu0 %v773
        %v2258 = vpop.f32.mrb[0].mxu0
        %v2259 = vadd.f32 0.0, %v2258
        %v2260 = vpop.f32.mrb[0].mxu0
        %v2261 = vpop.f32.mrb[0].mxu0
        %v2262 = vadd.f32 0.0, %v2261
        %v2263 = vpop.f32.mrb[0].mxu0
        %2264 = vmatprep.mubr.bf16.mxu0 0
        %2265 = vmatmul.mubr.bf16.gmra.mrb[0].mxu0 %v774
        %v2266 = vpop.f32.mrb[0].mxu0
        %v2267 = vadd.f32 0.0, %v2266
        %v2268 = vpop.f32.mrb[0].mxu0
        %v2269 = vpop.f32.mrb[0].mxu0
        %v2270 = vadd.f32 0.0, %v2269
        %v2271 = vpop.f32.mrb[0].mxu0
        %2272 = vmatprep.mubr.bf16.mxu0 0
        %2273 = vmatmul.mubr.bf16.gmra.mrb[0].mxu0 %v775
        %v2274 = vpop.f32.mrb[0].mxu0
        %v2275 = vadd.f32 0.0, %v2274
        %v2276 = vpop.f32.mrb[0].mxu0
        %v2277 = vpop.f32.mrb[0].mxu0
        %v2278 = vadd.f32 0.0, %v2277
        %v2279 = vpop.f32.mrb[0].mxu0
        %2280 = vmatprep.mubr.bf16.mxu0 0
        %2281 = vmatmul.mubr.bf16.gmra.mrb[0].mxu0 %v776
        %v2282 = vpop.f32.mrb[0].mxu0
        %v2283 = vadd.f32 0.0, %v2282
        %v2284 = vpop.f32.mrb[0].mxu0
        %v2285 = vpop.f32.mrb[0].mxu0
        %v2286 = vadd.f32 0.0, %v2285
        %v2287 = vpop.f32.mrb[0].mxu0
        %2288 = vmatprep.mubr.bf16.mxu0 0
        %2289 = vmatmul.mubr.bf16.gmra.mrb[0].mxu0 %v777
        %v2290 = vpop.f32.mrb[0].mxu0
        %v2291 = vadd.f32 0.0, %v2290
        %v2292 = vpop.f32.mrb[0].mxu0
        %v2293 = vpop.f32.mrb[0].mxu0
        %v2294 = vadd.f32 0.0, %v2293
        %v2295 = vpop.f32.mrb[0].mxu0
        %2296 = vmatprep.mubr.bf16.mxu0 0
        %2297 = vmatmul.mubr.bf16.gmra.mrb[0].mxu0 %v778
        %v2298 = vpop.f32.mrb[0].mxu0
        %v2299 = vadd.f32 0.0, %v2298
        %v2300 = vpop.f32.mrb[0].mxu0
        %v2301 = vpop.f32.mrb[0].mxu0
        %v2302 = vadd.f32 0.0, %v2301
        %v2303 = vpop.f32.mrb[0].mxu0
        %2304 = vmatprep.mubr.bf16.mxu0 0
        %2305 = vmatmul.mubr.bf16.gmra.mrb[0].mxu0 %v779
        %v2306 = vpop.f32.mrb[0].mxu0
        %v2307 = vadd.f32 0.0, %v2306
        %v2308 = vpop.f32.mrb[0].mxu0
        %v2309 = vpop.f32.mrb[0].mxu0
        %v2310 = vadd.f32 0.0, %v2309
        %v2311 = vpop.f32.mrb[0].mxu0
        %2312 = vmatprep.mubr.bf16.mxu0 0
        %2313 = vmatmul.mubr.bf16.gmra.mrb[0].mxu0 %v780
        %v2314 = vpop.f32.mrb[0].mxu0
        %v2315 = vadd.f32 0.0, %v2314
        %v2316 = vpop.f32.mrb[0].mxu0
        %v2317 = vpop.f32.mrb[0].mxu0
        %v2318 = vadd.f32 0.0, %v2317
        %v2319 = vpop.f32.mrb[0].mxu0
        %2320 = vmatprep.mubr.bf16.mxu0 0
        %2321 = vmatmul.mubr.bf16.gmra.mrb[0].mxu0 %v781
        %v2322 = vpop.f32.mrb[0].mxu0
        %v2323 = vadd.f32 0.0, %v2322
        %v2324 = vpop.f32.mrb[0].mxu0
        %v2325 = vpop.f32.mrb[0].mxu0
        %v2326 = vadd.f32 0.0, %v2325
        %v2327 = vpop.f32.mrb[0].mxu0
        %2328 = vdwg.mxu0
        %v2330 = vsel %vm1103, %v2203, 0
        %v2333 = vsel %vm1103, %v2206, 0
        %v2336 = vsel %vm1103, %v2211, 0
        %v2339 = vsel %vm1103, %v2214, 0
        %v2342 = vsel %vm1103, %v2219, 0
        %v2345 = vsel %vm1103, %v2222, 0
        %v2348 = vsel %vm1103, %v2227, 0
        %v2351 = vsel %vm1103, %v2230, 0
        %v2354 = vsel %vm1103, %v2235, 0
        %v2357 = vsel %vm1103, %v2238, 0
        %v2360 = vsel %vm1103, %v2243, 0
        %v2363 = vsel %vm1103, %v2246, 0
        %v2366 = vsel %vm1103, %v2251, 0
        %v2369 = vsel %vm1103, %v2254, 0
        %v2372 = vsel %vm1103, %v2259, 0
        %v2375 = vsel %vm1103, %v2262, 0
        %v2378 = vsel %vm1103, %v2267, 0
        %v2381 = vsel %vm1103, %v2270, 0
        %v2384 = vsel %vm1103, %v2275, 0
        %v2387 = vsel %vm1103, %v2278, 0
        %v2390 = vsel %vm1103, %v2283, 0
        %v2393 = vsel %vm1103, %v2286, 0
        %v2396 = vsel %vm1103, %v2291, 0
        %v2399 = vsel %vm1103, %v2294, 0
        %v2402 = vsel %vm1103, %v2299, 0
        %v2405 = vsel %vm1103, %v2302, 0
        %v2408 = vsel %vm1103, %v2307, 0
        %v2411 = vsel %vm1103, %v2310, 0
        %v2414 = vsel %vm1103, %v2315, 0
        %v2417 = vsel %vm1103, %v2318, 0
        %v2420 = vsel %vm1103, %v2323, 0
        %v2423 = vsel %vm1103, %v2326, 0
        %2425 = vmatprep.subr.mxu0 0.0
        %2426 = vmatpush1.msra.mxu0 %v2027
        %2427 = vmatprep.subr.mxu0 0.0
        %2428 = vmatpush1.msra.mxu0 %v2028
        %2429 = vmatprep.subr.mxu0 0.0
        %2430 = vmatpush1.msra.mxu0 %v2029
        %2431 = vmatprep.subr.mxu0 0.0
        %2432 = vmatpush1.msra.mxu0 %v2030
        %2433 = vmatprep.subr.mxu0 0.0
        %2434 = vmatpush1.msra.mxu0 0.0
        %2435 = vmatprep.subr.mxu0 0.0
        %2436 = vmatpush1.msra.mxu0 0.0
        %2437 = vmatprep.subr.mxu0 0.0
        %2438 = vmatpush1.msra.mxu0 0.0
        %2439 = vmatprep.subr.mxu0 0.0
        %2440 = vmatpush1.msra.mxu0 0.0
        %2441 = vmatprep.subr.mxu0 0.0
        %2442 = vmatpush1.msra.mxu0 0.0
        %2443 = vmatprep.subr.mxu0 0.0
        %2444 = vmatpush1.msra.mxu0 0.0
        %2445 = vmatprep.subr.mxu0 0.0
        %2446 = vmatpush1.msra.mxu0 0.0
        %2447 = vmatprep.subr.mxu0 0.0
        %2448 = vmatpush1.msra.mxu0 0.0
        %2449 = vmatprep.subr.mxu0 0.0
        %2450 = vmatpush1.msra.mxu0 0.0
        %2451 = vmatprep.subr.mxu0 0.0
        %2452 = vmatpush1.msra.mxu0 0.0
        %2453 = vmatprep.subr.mxu0 0.0
        %2454 = vmatpush1.msra.mxu0 0.0
        %2455 = vmatprep.subr.mxu0 0.0
        %2456 = vmatpush1.msra.mxu0 0.0
        %2457 = vmatprep.subr.mxu0 0.0
        %2458 = vmatpush1.msra.mxu0 0.0
        %2459 = vmatprep.subr.mxu0 0.0
        %2460 = vmatpush1.msra.mxu0 0.0
        %2461 = vmatprep.subr.mxu0 0.0
        %2462 = vmatpush1.msra.mxu0 0.0
        %2463 = vmatprep.subr.mxu0 0.0
        %2464 = vmatpush1.msra.mxu0 0.0
        %2465 = vmatprep.subr.mxu0 0.0
        %2466 = vmatpush1.msra.mxu0 0.0
        %2467 = vmatprep.subr.mxu0 0.0
        %2468 = vmatpush1.msra.mxu0 0.0
        %2469 = vmatprep.subr.mxu0 0.0
        %2470 = vmatpush1.msra.mxu0 0.0
        %2471 = vmatprep.subr.mxu0 0.0
        %2472 = vmatpush1.msra.mxu0 0.0
        %2473 = vmatprep.subr.mxu0 0.0
        %2474 = vmatpush1.msra.mxu0 0.0
        %2475 = vmatprep.subr.mxu0 0.0
        %2476 = vmatpush1.msra.mxu0 0.0
        %2477 = vmatprep.subr.mxu0 0.0
        %2478 = vmatpush1.msra.mxu0 0.0
        %2479 = vmatprep.subr.mxu0 0.0
        %2480 = vmatpush1.msra.mxu0 0.0
        %2481 = vmatprep.subr.mxu0 0.0
        %2482 = vmatpush1.msra.mxu0 0.0
        %2483 = vmatprep.subr.mxu0 0.0
        %2484 = vmatpush1.msra.mxu0 0.0
        %2485 = vmatprep.subr.mxu0 0.0
        %2486 = vmatpush1.msra.mxu0 0.0
        %2487 = vmatprep.subr.mxu0 0.0
        %2488 = vmatpush1.msra.mxu0 0.0
        %2489 = vmatprep.mubr.f32.mxu0 0.0
        %2490 = vmatmul.mubr.f32.gmra.mrb[0].mxu0 %v2330
        %v2491 = vpop.f32.mrb[0].mxu0
        %v2492 = vadd.f32 0.0, %v2491
        %v2493 = vpop.f32.mrb[0].mxu0
        %2494 = vmatprep.mubr.f32.mxu0 0.0
        %2495 = vmatmul.mubr.f32.gmra.mrb[0].mxu0 %v2333
        %v2496 = vpop.f32.mrb[0].mxu0
        %v2497 = vadd.f32 0.0, %v2496
        %v2498 = vpop.f32.mrb[0].mxu0
        %2499 = vmatprep.mubr.f32.mxu0 0.0
        %2500 = vmatmul.mubr.f32.gmra.mrb[0].mxu0 %v2336
        %v2501 = vpop.f32.mrb[0].mxu0
        %v2502 = vadd.f32 0.0, %v2501
        %v2503 = vpop.f32.mrb[0].mxu0
        %2504 = vmatprep.mubr.f32.mxu0 0.0
        %2505 = vmatmul.mubr.f32.gmra.mrb[0].mxu0 %v2339
        %v2506 = vpop.f32.mrb[0].mxu0
        %v2507 = vadd.f32 0.0, %v2506
        %v2508 = vpop.f32.mrb[0].mxu0
        %2509 = vmatprep.mubr.f32.mxu0 0.0
        %2510 = vmatmul.mubr.f32.gmra.mrb[0].mxu0 %v2342
        %v2511 = vpop.f32.mrb[0].mxu0
        %v2512 = vadd.f32 0.0, %v2511
        %v2513 = vpop.f32.mrb[0].mxu0
        %2514 = vmatprep.mubr.f32.mxu0 0.0
        %2515 = vmatmul.mubr.f32.gmra.mrb[0].mxu0 %v2345
        %v2516 = vpop.f32.mrb[0].mxu0
        %v2517 = vadd.f32 0.0, %v2516
        %v2518 = vpop.f32.mrb[0].mxu0
        %2519 = vmatprep.mubr.f32.mxu0 0.0
        %2520 = vmatmul.mubr.f32.gmra.mrb[0].mxu0 %v2348
        %v2521 = vpop.f32.mrb[0].mxu0
        %v2522 = vadd.f32 0.0, %v2521
        %v2523 = vpop.f32.mrb[0].mxu0
        %2524 = vmatprep.mubr.f32.mxu0 0.0
        %2525 = vmatmul.mubr.f32.gmra.mrb[0].mxu0 %v2351
        %v2526 = vpop.f32.mrb[0].mxu0
        %v2527 = vadd.f32 0.0, %v2526
        %v2528 = vpop.f32.mrb[0].mxu0
        %2529 = vmatprep.mubr.f32.mxu0 0.0
        %2530 = vmatmul.mubr.f32.gmra.mrb[0].mxu0 %v2354
        %v2531 = vpop.f32.mrb[0].mxu0
        %v2532 = vadd.f32 0.0, %v2531
        %v2533 = vpop.f32.mrb[0].mxu0
        %2534 = vmatprep.mubr.f32.mxu0 0.0
        %2535 = vmatmul.mubr.f32.gmra.mrb[0].mxu0 %v2357
        %v2536 = vpop.f32.mrb[0].mxu0
        %v2537 = vadd.f32 0.0, %v2536
        %v2538 = vpop.f32.mrb[0].mxu0
        %2539 = vmatprep.mubr.f32.mxu0 0.0
        %2540 = vmatmul.mubr.f32.gmra.mrb[0].mxu0 %v2360
        %v2541 = vpop.f32.mrb[0].mxu0
        %v2542 = vadd.f32 0.0, %v2541
        %v2543 = vpop.f32.mrb[0].mxu0
        %2544 = vmatprep.mubr.f32.mxu0 0.0
        %2545 = vmatmul.mubr.f32.gmra.mrb[0].mxu0 %v2363
        %v2546 = vpop.f32.mrb[0].mxu0
        %v2547 = vadd.f32 0.0, %v2546
        %v2548 = vpop.f32.mrb[0].mxu0
        %2549 = vmatprep.mubr.f32.mxu0 0.0
        %2550 = vmatmul.mubr.f32.gmra.mrb[0].mxu0 %v2366
        %v2551 = vpop.f32.mrb[0].mxu0
        %v2552 = vadd.f32 0.0, %v2551
        %v2553 = vpop.f32.mrb[0].mxu0
        %2554 = vmatprep.mubr.f32.mxu0 0.0
        %2555 = vmatmul.mubr.f32.gmra.mrb[0].mxu0 %v2369
        %v2556 = vpop.f32.mrb[0].mxu0
        %v2557 = vadd.f32 0.0, %v2556
        %v2558 = vpop.f32.mrb[0].mxu0
        %2559 = vmatprep.mubr.f32.mxu0 0.0
        %2560 = vmatmul.mubr.f32.gmra.mrb[0].mxu0 %v2372
        %v2561 = vpop.f32.mrb[0].mxu0
        %v2562 = vadd.f32 0.0, %v2561
        %v2563 = vpop.f32.mrb[0].mxu0
        %2564 = vmatprep.mubr.f32.mxu0 0.0
        %2565 = vmatmul.mubr.f32.gmra.mrb[0].mxu0 %v2375
        %v2566 = vpop.f32.mrb[0].mxu0
        %v2567 = vadd.f32 0.0, %v2566
        %v2568 = vpop.f32.mrb[0].mxu0
        %2569 = vmatprep.mubr.f32.mxu0 0.0
        %2570 = vmatmul.mubr.f32.gmra.mrb[0].mxu0 %v2378
        %v2571 = vpop.f32.mrb[0].mxu0
        %v2572 = vadd.f32 0.0, %v2571
        %v2573 = vpop.f32.mrb[0].mxu0
        %2574 = vmatprep.mubr.f32.mxu0 0.0
        %2575 = vmatmul.mubr.f32.gmra.mrb[0].mxu0 %v2381
        %v2576 = vpop.f32.mrb[0].mxu0
        %v2577 = vadd.f32 0.0, %v2576
        %v2578 = vpop.f32.mrb[0].mxu0
        %2579 = vmatprep.mubr.f32.mxu0 0.0
        %2580 = vmatmul.mubr.f32.gmra.mrb[0].mxu0 %v2384
        %v2581 = vpop.f32.mrb[0].mxu0
        %v2582 = vadd.f32 0.0, %v2581
        %v2583 = vpop.f32.mrb[0].mxu0
        %2584 = vmatprep.mubr.f32.mxu0 0.0
        %2585 = vmatmul.mubr.f32.gmra.mrb[0].mxu0 %v2387
        %v2586 = vpop.f32.mrb[0].mxu0
        %v2587 = vadd.f32 0.0, %v2586
        %v2588 = vpop.f32.mrb[0].mxu0
        %2589 = vmatprep.mubr.f32.mxu0 0.0
        %2590 = vmatmul.mubr.f32.gmra.mrb[0].mxu0 %v2390
        %v2591 = vpop.f32.mrb[0].mxu0
        %v2592 = vadd.f32 0.0, %v2591
        %v2593 = vpop.f32.mrb[0].mxu0
        %2594 = vmatprep.mubr.f32.mxu0 0.0
        %2595 = vmatmul.mubr.f32.gmra.mrb[0].mxu0 %v2393
        %v2596 = vpop.f32.mrb[0].mxu0
        %v2597 = vadd.f32 0.0, %v2596
        %v2598 = vpop.f32.mrb[0].mxu0
        %2599 = vmatprep.mubr.f32.mxu0 0.0
        %2600 = vmatmul.mubr.f32.gmra.mrb[0].mxu0 %v2396
        %v2601 = vpop.f32.mrb[0].mxu0
        %v2602 = vadd.f32 0.0, %v2601
        %v2603 = vpop.f32.mrb[0].mxu0
        %2604 = vmatprep.mubr.f32.mxu0 0.0
        %2605 = vmatmul.mubr.f32.gmra.mrb[0].mxu0 %v2399
        %v2606 = vpop.f32.mrb[0].mxu0
        %v2607 = vadd.f32 0.0, %v2606
        %v2608 = vpop.f32.mrb[0].mxu0
        %2609 = vmatprep.mubr.f32.mxu0 0.0
        %2610 = vmatmul.mubr.f32.gmra.mrb[0].mxu0 %v2402
        %v2611 = vpop.f32.mrb[0].mxu0
        %v2612 = vadd.f32 0.0, %v2611
        %v2613 = vpop.f32.mrb[0].mxu0
        %2614 = vmatprep.mubr.f32.mxu0 0.0
        %2615 = vmatmul.mubr.f32.gmra.mrb[0].mxu0 %v2405
        %v2616 = vpop.f32.mrb[0].mxu0
        %v2617 = vadd.f32 0.0, %v2616
        %v2618 = vpop.f32.mrb[0].mxu0
        %2619 = vmatprep.mubr.f32.mxu0 0.0
        %2620 = vmatmul.mubr.f32.gmra.mrb[0].mxu0 %v2408
        %v2621 = vpop.f32.mrb[0].mxu0
        %v2622 = vadd.f32 0.0, %v2621
        %v2623 = vpop.f32.mrb[0].mxu0
        %2624 = vmatprep.mubr.f32.mxu0 0.0
        %2625 = vmatmul.mubr.f32.gmra.mrb[0].mxu0 %v2411
        %v2626 = vpop.f32.mrb[0].mxu0
        %v2627 = vadd.f32 0.0, %v2626
        %v2628 = vpop.f32.mrb[0].mxu0
        %2629 = vmatprep.mubr.f32.mxu0 0.0
        %2630 = vmatmul.mubr.f32.gmra.mrb[0].mxu0 %v2414
        %v2631 = vpop.f32.mrb[0].mxu0
        %v2632 = vadd.f32 0.0, %v2631
        %v2633 = vpop.f32.mrb[0].mxu0
        %2634 = vmatprep.mubr.f32.mxu0 0.0
        %2635 = vmatmul.mubr.f32.gmra.mrb[0].mxu0 %v2417
        %v2636 = vpop.f32.mrb[0].mxu0
        %v2637 = vadd.f32 0.0, %v2636
        %v2638 = vpop.f32.mrb[0].mxu0
        %2639 = vmatprep.mubr.f32.mxu0 0.0
        %2640 = vmatmul.mubr.f32.gmra.mrb[0].mxu0 %v2420
        %v2641 = vpop.f32.mrb[0].mxu0
        %v2642 = vadd.f32 0.0, %v2641
        %v2643 = vpop.f32.mrb[0].mxu0
        %2644 = vmatprep.mubr.f32.mxu0 0.0
        %2645 = vmatmul.mubr.f32.gmra.mrb[0].mxu0 %v2423
        %v2646 = vpop.f32.mrb[0].mxu0
        %v2647 = vadd.f32 0.0, %v2646
        %v2648 = vpop.f32.mrb[0].mxu0
        %2649 = vdwg.mxu0
        %v2651 = vsel %vm1103, %v2075, 0
        %v2654 = vsel %vm1103, %v2078, 0
        %v2657 = vsel %vm1103, %v2083, 0
        %v2660 = vsel %vm1103, %v2086, 0
        %v2663 = vsel %vm1103, %v2091, 0
        %v2666 = vsel %vm1103, %v2094, 0
        %v2669 = vsel %vm1103, %v2099, 0
        %v2672 = vsel %vm1103, %v2102, 0
        %v2675 = vsel %vm1103, %v2107, 0
        %v2678 = vsel %vm1103, %v2110, 0
        %v2681 = vsel %vm1103, %v2115, 0
        %v2684 = vsel %vm1103, %v2118, 0
        %v2687 = vsel %vm1103, %v2123, 0
        %v2690 = vsel %vm1103, %v2126, 0
        %v2693 = vsel %vm1103, %v2131, 0
        %v2696 = vsel %vm1103, %v2134, 0
        %v2699 = vsel %vm1103, %v2139, 0
        %v2702 = vsel %vm1103, %v2142, 0
        %v2705 = vsel %vm1103, %v2147, 0
        %v2708 = vsel %vm1103, %v2150, 0
        %v2711 = vsel %vm1103, %v2155, 0
        %v2714 = vsel %vm1103, %v2158, 0
        %v2717 = vsel %vm1103, %v2163, 0
        %v2720 = vsel %vm1103, %v2166, 0
        %v2723 = vsel %vm1103, %v2171, 0
        %v2726 = vsel %vm1103, %v2174, 0
        %v2729 = vsel %vm1103, %v2179, 0
        %v2732 = vsel %vm1103, %v2182, 0
        %v2735 = vsel %vm1103, %v2187, 0
        %v2738 = vsel %vm1103, %v2190, 0
        %v2741 = vsel %vm1103, %v2195, 0
        %v2744 = vsel %vm1103, %v2198, 0
        %2746 = vmatprep.subr.mxu0 0.0
        %2747 = vmatpush1.msra.mxu0 %v2023
        %2748 = vmatprep.subr.mxu0 0.0
        %2749 = vmatpush1.msra.mxu0 %v2024
        %2750 = vmatprep.subr.mxu0 0.0
        %2751 = vmatpush1.msra.mxu0 %v2025
        %2752 = vmatprep.subr.mxu0 0.0
        %2753 = vmatpush1.msra.mxu0 %v2026
        %2754 = vmatprep.subr.mxu0 0.0
        %2755 = vmatpush1.msra.mxu0 0.0
        %2756 = vmatprep.subr.mxu0 0.0
        %2757 = vmatpush1.msra.mxu0 0.0
        %2758 = vmatprep.subr.mxu0 0.0
        %2759 = vmatpush1.msra.mxu0 0.0
        %2760 = vmatprep.subr.mxu0 0.0
        %2761 = vmatpush1.msra.mxu0 0.0
        %2762 = vmatprep.subr.mxu0 0.0
        %2763 = vmatpush1.msra.mxu0 0.0
        %2764 = vmatprep.subr.mxu0 0.0
        %2765 = vmatpush1.msra.mxu0 0.0
        %2766 = vmatprep.subr.mxu0 0.0
        %2767 = vmatpush1.msra.mxu0 0.0
        %2768 = vmatprep.subr.mxu0 0.0
        %2769 = vmatpush1.msra.mxu0 0.0
        %2770 = vmatprep.subr.mxu0 0.0
        %2771 = vmatpush1.msra.mxu0 0.0
        %2772 = vmatprep.subr.mxu0 0.0
        %2773 = vmatpush1.msra.mxu0 0.0
        %2774 = vmatprep.subr.mxu0 0.0
        %2775 = vmatpush1.msra.mxu0 0.0
        %2776 = vmatprep.subr.mxu0 0.0
        %2777 = vmatpush1.msra.mxu0 0.0
        %2778 = vmatprep.subr.mxu0 0.0
        %2779 = vmatpush1.msra.mxu0 0.0
        %2780 = vmatprep.subr.mxu0 0.0
        %2781 = vmatpush1.msra.mxu0 0.0
        %2782 = vmatprep.subr.mxu0 0.0
        %2783 = vmatpush1.msra.mxu0 0.0
        %2784 = vmatprep.subr.mxu0 0.0
        %2785 = vmatpush1.msra.mxu0 0.0
        %2786 = vmatprep.subr.mxu0 0.0
        %2787 = vmatpush1.msra.mxu0 0.0
        %2788 = vmatprep.subr.mxu0 0.0
        %2789 = vmatpush1.msra.mxu0 0.0
        %2790 = vmatprep.subr.mxu0 0.0
        %2791 = vmatpush1.msra.mxu0 0.0
        %2792 = vmatprep.subr.mxu0 0.0
        %2793 = vmatpush1.msra.mxu0 0.0
        %2794 = vmatprep.subr.mxu0 0.0
        %2795 = vmatpush1.msra.mxu0 0.0
        %2796 = vmatprep.subr.mxu0 0.0
        %2797 = vmatpush1.msra.mxu0 0.0
        %2798 = vmatprep.subr.mxu0 0.0
        %2799 = vmatpush1.msra.mxu0 0.0
        %2800 = vmatprep.subr.mxu0 0.0
        %2801 = vmatpush1.msra.mxu0 0.0
        %2802 = vmatprep.subr.mxu0 0.0
        %2803 = vmatpush1.msra.mxu0 0.0
        %2804 = vmatprep.subr.mxu0 0.0
        %2805 = vmatpush1.msra.mxu0 0.0
        %2806 = vmatprep.subr.mxu0 0.0
        %2807 = vmatpush1.msra.mxu0 0.0
        %2808 = vmatprep.subr.mxu0 0.0
        %2809 = vmatpush1.msra.mxu0 0.0
        %2810 = vmatprep.mubr.f32.mxu0 0.0
        %2811 = vmatmul.mubr.f32.gmra.mrb[0].mxu0 %v2651
        %v2812 = vpop.f32.mrb[0].mxu0
        %v2813 = vadd.f32 %v2492, %v2812
        %v2814 = vpop.f32.mrb[0].mxu0
        %2815 = vmatprep.mubr.f32.mxu0 0.0
        %2816 = vmatmul.mubr.f32.gmra.mrb[0].mxu0 %v2654
        %v2817 = vpop.f32.mrb[0].mxu0
        %v2818 = vadd.f32 %v2497, %v2817
        %v2819 = vpop.f32.mrb[0].mxu0
        %2820 = vmatprep.mubr.f32.mxu0 0.0
        %2821 = vmatmul.mubr.f32.gmra.mrb[0].mxu0 %v2657
        %v2822 = vpop.f32.mrb[0].mxu0
        %v2823 = vadd.f32 %v2502, %v2822
        %v2824 = vpop.f32.mrb[0].mxu0
        %2825 = vmatprep.mubr.f32.mxu0 0.0
        %2826 = vmatmul.mubr.f32.gmra.mrb[0].mxu0 %v2660
        %v2827 = vpop.f32.mrb[0].mxu0
        %v2828 = vadd.f32 %v2507, %v2827
        %v2829 = vpop.f32.mrb[0].mxu0
        %2830 = vmatprep.mubr.f32.mxu0 0.0
        %2831 = vmatmul.mubr.f32.gmra.mrb[0].mxu0 %v2663
        %v2832 = vpop.f32.mrb[0].mxu0
        %v2833 = vadd.f32 %v2512, %v2832
        %v2834 = vpop.f32.mrb[0].mxu0
        %2835 = vmatprep.mubr.f32.mxu0 0.0
        %2836 = vmatmul.mubr.f32.gmra.mrb[0].mxu0 %v2666
        %v2837 = vpop.f32.mrb[0].mxu0
        %v2838 = vadd.f32 %v2517, %v2837
        %v2839 = vpop.f32.mrb[0].mxu0
        %2840 = vmatprep.mubr.f32.mxu0 0.0
        %2841 = vmatmul.mubr.f32.gmra.mrb[0].mxu0 %v2669
        %v2842 = vpop.f32.mrb[0].mxu0
        %v2843 = vadd.f32 %v2522, %v2842
        %v2844 = vpop.f32.mrb[0].mxu0
        %2845 = vmatprep.mubr.f32.mxu0 0.0
        %2846 = vmatmul.mubr.f32.gmra.mrb[0].mxu0 %v2672
        %v2847 = vpop.f32.mrb[0].mxu0
        %v2848 = vadd.f32 %v2527, %v2847
        %v2849 = vpop.f32.mrb[0].mxu0
        %2850 = vmatprep.mubr.f32.mxu0 0.0
        %2851 = vmatmul.mubr.f32.gmra.mrb[0].mxu0 %v2675
        %v2852 = vpop.f32.mrb[0].mxu0
        %v2853 = vadd.f32 %v2532, %v2852
        %v2854 = vpop.f32.mrb[0].mxu0
        %2855 = vmatprep.mubr.f32.mxu0 0.0
        %2856 = vmatmul.mubr.f32.gmra.mrb[0].mxu0 %v2678
        %v2857 = vpop.f32.mrb[0].mxu0
        %v2858 = vadd.f32 %v2537, %v2857
        %v2859 = vpop.f32.mrb[0].mxu0
        %2860 = vmatprep.mubr.f32.mxu0 0.0
        %2861 = vmatmul.mubr.f32.gmra.mrb[0].mxu0 %v2681
        %v2862 = vpop.f32.mrb[0].mxu0
        %v2863 = vadd.f32 %v2542, %v2862
        %v2864 = vpop.f32.mrb[0].mxu0
        %2865 = vmatprep.mubr.f32.mxu0 0.0
        %2866 = vmatmul.mubr.f32.gmra.mrb[0].mxu0 %v2684
        %v2867 = vpop.f32.mrb[0].mxu0
        %v2868 = vadd.f32 %v2547, %v2867
        %v2869 = vpop.f32.mrb[0].mxu0
        %2870 = vmatprep.mubr.f32.mxu0 0.0
        %2871 = vmatmul.mubr.f32.gmra.mrb[0].mxu0 %v2687
        %v2872 = vpop.f32.mrb[0].mxu0
        %v2873 = vadd.f32 %v2552, %v2872
        %v2874 = vpop.f32.mrb[0].mxu0
        %2875 = vmatprep.mubr.f32.mxu0 0.0
        %2876 = vmatmul.mubr.f32.gmra.mrb[0].mxu0 %v2690
        %v2877 = vpop.f32.mrb[0].mxu0
        %v2878 = vadd.f32 %v2557, %v2877
        %v2879 = vpop.f32.mrb[0].mxu0
        %2880 = vmatprep.mubr.f32.mxu0 0.0
        %2881 = vmatmul.mubr.f32.gmra.mrb[0].mxu0 %v2693
        %v2882 = vpop.f32.mrb[0].mxu0
        %v2883 = vadd.f32 %v2562, %v2882
        %v2884 = vpop.f32.mrb[0].mxu0
        %2885 = vmatprep.mubr.f32.mxu0 0.0
        %2886 = vmatmul.mubr.f32.gmra.mrb[0].mxu0 %v2696
        %v2887 = vpop.f32.mrb[0].mxu0
        %v2888 = vadd.f32 %v2567, %v2887
        %v2889 = vpop.f32.mrb[0].mxu0
        %2890 = vmatprep.mubr.f32.mxu0 0.0
        %2891 = vmatmul.mubr.f32.gmra.mrb[0].mxu0 %v2699
        %v2892 = vpop.f32.mrb[0].mxu0
        %v2893 = vadd.f32 %v2572, %v2892
        %v2894 = vpop.f32.mrb[0].mxu0
        %2895 = vmatprep.mubr.f32.mxu0 0.0
        %2896 = vmatmul.mubr.f32.gmra.mrb[0].mxu0 %v2702
        %v2897 = vpop.f32.mrb[0].mxu0
        %v2898 = vadd.f32 %v2577, %v2897
        %v2899 = vpop.f32.mrb[0].mxu0
        %2900 = vmatprep.mubr.f32.mxu0 0.0
        %2901 = vmatmul.mubr.f32.gmra.mrb[0].mxu0 %v2705
        %v2902 = vpop.f32.mrb[0].mxu0
        %v2903 = vadd.f32 %v2582, %v2902
        %v2904 = vpop.f32.mrb[0].mxu0
        %2905 = vmatprep.mubr.f32.mxu0 0.0
        %2906 = vmatmul.mubr.f32.gmra.mrb[0].mxu0 %v2708
        %v2907 = vpop.f32.mrb[0].mxu0
        %v2908 = vadd.f32 %v2587, %v2907
        %v2909 = vpop.f32.mrb[0].mxu0
        %2910 = vmatprep.mubr.f32.mxu0 0.0
        %2911 = vmatmul.mubr.f32.gmra.mrb[0].mxu0 %v2711
        %v2912 = vpop.f32.mrb[0].mxu0
        %v2913 = vadd.f32 %v2592, %v2912
        %v2914 = vpop.f32.mrb[0].mxu0
        %2915 = vmatprep.mubr.f32.mxu0 0.0
        %2916 = vmatmul.mubr.f32.gmra.mrb[0].mxu0 %v2714
        %v2917 = vpop.f32.mrb[0].mxu0
        %v2918 = vadd.f32 %v2597, %v2917
        %v2919 = vpop.f32.mrb[0].mxu0
        %2920 = vmatprep.mubr.f32.mxu0 0.0
        %2921 = vmatmul.mubr.f32.gmra.mrb[0].mxu0 %v2717
        %v2922 = vpop.f32.mrb[0].mxu0
        %v2923 = vadd.f32 %v2602, %v2922
        %v2924 = vpop.f32.mrb[0].mxu0
        %2925 = vmatprep.mubr.f32.mxu0 0.0
        %2926 = vmatmul.mubr.f32.gmra.mrb[0].mxu0 %v2720
        %v2927 = vpop.f32.mrb[0].mxu0
        %v2928 = vadd.f32 %v2607, %v2927
        %v2929 = vpop.f32.mrb[0].mxu0
        %2930 = vmatprep.mubr.f32.mxu0 0.0
        %2931 = vmatmul.mubr.f32.gmra.mrb[0].mxu0 %v2723
        %v2932 = vpop.f32.mrb[0].mxu0
        %v2933 = vadd.f32 %v2612, %v2932
        %v2934 = vpop.f32.mrb[0].mxu0
        %2935 = vmatprep.mubr.f32.mxu0 0.0
        %2936 = vmatmul.mubr.f32.gmra.mrb[0].mxu0 %v2726
        %v2937 = vpop.f32.mrb[0].mxu0
        %v2938 = vadd.f32 %v2617, %v2937
        %v2939 = vpop.f32.mrb[0].mxu0
        %2940 = vmatprep.mubr.f32.mxu0 0.0
        %2941 = vmatmul.mubr.f32.gmra.mrb[0].mxu0 %v2729
        %v2942 = vpop.f32.mrb[0].mxu0
        %v2943 = vadd.f32 %v2622, %v2942
        %v2944 = vpop.f32.mrb[0].mxu0
        %2945 = vmatprep.mubr.f32.mxu0 0.0
        %2946 = vmatmul.mubr.f32.gmra.mrb[0].mxu0 %v2732
        %v2947 = vpop.f32.mrb[0].mxu0
        %v2948 = vadd.f32 %v2627, %v2947
        %v2949 = vpop.f32.mrb[0].mxu0
        %2950 = vmatprep.mubr.f32.mxu0 0.0
        %2951 = vmatmul.mubr.f32.gmra.mrb[0].mxu0 %v2735
        %v2952 = vpop.f32.mrb[0].mxu0
        %v2953 = vadd.f32 %v2632, %v2952
        %v2954 = vpop.f32.mrb[0].mxu0
        %2955 = vmatprep.mubr.f32.mxu0 0.0
        %2956 = vmatmul.mubr.f32.gmra.mrb[0].mxu0 %v2738
        %v2957 = vpop.f32.mrb[0].mxu0
        %v2958 = vadd.f32 %v2637, %v2957
        %v2959 = vpop.f32.mrb[0].mxu0
        %2960 = vmatprep.mubr.f32.mxu0 0.0
        %2961 = vmatmul.mubr.f32.gmra.mrb[0].mxu0 %v2741
        %v2962 = vpop.f32.mrb[0].mxu0
        %v2963 = vadd.f32 %v2642, %v2962
        %v2964 = vpop.f32.mrb[0].mxu0
        %2965 = vmatprep.mubr.f32.mxu0 0.0
        %2966 = vmatmul.mubr.f32.gmra.mrb[0].mxu0 %v2744
        %v2967 = vpop.f32.mrb[0].mxu0
        %v2968 = vadd.f32 %v2647, %v2967
        %v2969 = vpop.f32.mrb[0].mxu0
        %2970 = vdwg.mxu0
        %v2971 = vlaneseq
        %v2972 = vshrl.u32 %v2971, 7
        %v2973 = vsub.s32 0, %v2972
        %v2974 = vrot.slane %v2031, %v2973
        %v2975 = vadd.f32 %v2813, %v2974
        %v2976 = vadd.f32 %v2818, %v2974
        %v2977 = vadd.f32 %v2823, %v2974
        %v2978 = vadd.f32 %v2828, %v2974
        %v2979 = vadd.f32 %v2833, %v2974
        %v2980 = vadd.f32 %v2838, %v2974
        %v2981 = vadd.f32 %v2843, %v2974
        %v2982 = vadd.f32 %v2848, %v2974
        %v2983 = vadd.f32 %v2853, %v2974
        %v2984 = vadd.f32 %v2858, %v2974
        %v2985 = vadd.f32 %v2863, %v2974
        %v2986 = vadd.f32 %v2868, %v2974
        %v2987 = vadd.f32 %v2873, %v2974
        %v2988 = vadd.f32 %v2878, %v2974
        %v2989 = vadd.f32 %v2883, %v2974
        %v2990 = vadd.f32 %v2888, %v2974
        %v2991 = vadd.f32 %v2893, %v2974
        %v2992 = vadd.f32 %v2898, %v2974
        %v2993 = vadd.f32 %v2903, %v2974
        %v2994 = vadd.f32 %v2908, %v2974
        %v2995 = vadd.f32 %v2913, %v2974
        %v2996 = vadd.f32 %v2918, %v2974
        %v2997 = vadd.f32 %v2923, %v2974
        %v2998 = vadd.f32 %v2928, %v2974
        %v2999 = vadd.f32 %v2933, %v2974
        %v3000 = vadd.f32 %v2938, %v2974
        %v3001 = vadd.f32 %v2943, %v2974
        %v3002 = vadd.f32 %v2948, %v2974
        %v3003 = vadd.f32 %v2953, %v2974
        %v3004 = vadd.f32 %v2958, %v2974
        %v3005 = vadd.f32 %v2963, %v2974
        %v3006 = vadd.f32 %v2968, %v2974
        %v3007 = vmax.f32 %v2975, 0.0
        %v3008 = vmax.f32 %v2976, 0.0
        %v3009 = vmax.f32 %v2977, 0.0
        %v3010 = vmax.f32 %v2978, 0.0
        %v3011 = vmax.f32 %v2979, 0.0
        %v3012 = vmax.f32 %v2980, 0.0
        %v3013 = vmax.f32 %v2981, 0.0
        %v3014 = vmax.f32 %v2982, 0.0
        %v3015 = vmax.f32 %v2983, 0.0
        %v3016 = vmax.f32 %v2984, 0.0
        %v3017 = vmax.f32 %v2985, 0.0
        %v3018 = vmax.f32 %v2986, 0.0
        %v3019 = vmax.f32 %v2987, 0.0
        %v3020 = vmax.f32 %v2988, 0.0
        %v3021 = vmax.f32 %v2989, 0.0
        %v3022 = vmax.f32 %v2990, 0.0
        %v3023 = vmax.f32 %v2991, 0.0
        %v3024 = vmax.f32 %v2992, 0.0
        %v3025 = vmax.f32 %v2993, 0.0
        %v3026 = vmax.f32 %v2994, 0.0
        %v3027 = vmax.f32 %v2995, 0.0
        %v3028 = vmax.f32 %v2996, 0.0
        %v3029 = vmax.f32 %v2997, 0.0
        %v3030 = vmax.f32 %v2998, 0.0
        %v3031 = vmax.f32 %v2999, 0.0
        %v3032 = vmax.f32 %v3000, 0.0
        %v3033 = vmax.f32 %v3001, 0.0
        %v3034 = vmax.f32 %v3002, 0.0
        %v3035 = vmax.f32 %v3003, 0.0
        %v3036 = vmax.f32 %v3004, 0.0
        %v3037 = vmax.f32 %v3005, 0.0
        %v3038 = vmax.f32 %v3006, 0.0
        %v3039 = vpack.c.bf16 %v3008, %v3007
        %v3040 = vpack.c.bf16 %v3010, %v3009
        %v3041 = vpack.c.bf16 %v3012, %v3011
        %v3042 = vpack.c.bf16 %v3014, %v3013
        %v3043 = vpack.c.bf16 %v3016, %v3015
        %v3044 = vpack.c.bf16 %v3018, %v3017
        %v3045 = vpack.c.bf16 %v3020, %v3019
        %v3046 = vpack.c.bf16 %v3022, %v3021
        %v3047 = vpack.c.bf16 %v3024, %v3023
        %v3048 = vpack.c.bf16 %v3026, %v3025
        %v3049 = vpack.c.bf16 %v3028, %v3027
        %v3050 = vpack.c.bf16 %v3030, %v3029
        %v3051 = vpack.c.bf16 %v3032, %v3031
        %v3052 = vpack.c.bf16 %v3034, %v3033
        %v3053 = vpack.c.bf16 %v3036, %v3035
        %v3054 = vpack.c.bf16 %v3038, %v3037
        %3055 = vmatprep.subr.bf16.mxu0 0
        %3056 = vmatpush1.bf16.msra.mxu0 %v3039
        %3057 = vmatprep.subr.bf16.mxu0 0
        %3058 = vmatpush1.bf16.msra.mxu0 %v3040
        %3059 = vmatprep.subr.bf16.mxu0 0
        %3060 = vmatpush1.bf16.msra.mxu0 %v3041
        %3061 = vmatprep.subr.bf16.mxu0 0
        %3062 = vmatpush1.bf16.msra.mxu0 %v3042
        %3063 = vmatprep.subr.bf16.mxu0 0
        %3064 = vmatpush1.bf16.msra.mxu0 %v3043
        %3065 = vmatprep.subr.bf16.mxu0 0
        %3066 = vmatpush1.bf16.msra.mxu0 %v3044
        %3067 = vmatprep.subr.bf16.mxu0 0
        %3068 = vmatpush1.bf16.msra.mxu0 %v3045
        %3069 = vmatprep.subr.bf16.mxu0 0
        %3070 = vmatpush1.bf16.msra.mxu0 %v3046
        %3071 = vmatprep.subr.bf16.mxu0 0
        %3072 = vmatpush1.bf16.msra.mxu0 %v3047
        %3073 = vmatprep.subr.bf16.mxu0 0
        %3074 = vmatpush1.bf16.msra.mxu0 %v3048
        %3075 = vmatprep.subr.bf16.mxu0 0
        %3076 = vmatpush1.bf16.msra.mxu0 %v3049
        %3077 = vmatprep.subr.bf16.mxu0 0
        %3078 = vmatpush1.bf16.msra.mxu0 %v3050
        %3079 = vmatprep.subr.bf16.mxu0 0
        %3080 = vmatpush1.bf16.msra.mxu0 %v3051
        %3081 = vmatprep.subr.bf16.mxu0 0
        %3082 = vmatpush1.bf16.msra.mxu0 %v3052
        %3083 = vmatprep.subr.bf16.mxu0 0
        %3084 = vmatpush1.bf16.msra.mxu0 %v3053
        %3085 = vmatprep.subr.bf16.mxu0 0
        %3086 = vmatpush1.bf16.msra.mxu0 %v3054
        %3087 = vmatprep.mubr.bf16.mxu0 %v1879
        %3088 = vmatmul.mubr.bf16.gmra.mrb[0].mxu0 %v1878
        %v3089 = vpop.f32.mrb[0].mxu0
        %v3090 = vadd.f32 0.0, %v3089
        %v3091 = vpop.f32.mrb[0].mxu0
        %v3092 = vpop.f32.mrb[0].mxu0
        %v3093 = vadd.f32 0.0, %v3092
        %v3094 = vpop.f32.mrb[0].mxu0
        %3095 = vmatprep.mubr.bf16.mxu0 %v1881
        %3096 = vmatmul.mubr.bf16.gmra.mrb[0].mxu0 %v1880
        %v3097 = vpop.f32.mrb[0].mxu0
        %v3098 = vadd.f32 0.0, %v3097
        %v3099 = vpop.f32.mrb[0].mxu0
        %v3100 = vpop.f32.mrb[0].mxu0
        %v3101 = vadd.f32 0.0, %v3100
        %v3102 = vpop.f32.mrb[0].mxu0
        %3103 = vmatprep.mubr.bf16.mxu0 %v1883
        %3104 = vmatmul.mubr.bf16.gmra.mrb[0].mxu0 %v1882
        %v3105 = vpop.f32.mrb[0].mxu0
        %v3106 = vadd.f32 0.0, %v3105
        %v3107 = vpop.f32.mrb[0].mxu0
        %v3108 = vpop.f32.mrb[0].mxu0
        %v3109 = vadd.f32 0.0, %v3108
        %v3110 = vpop.f32.mrb[0].mxu0
        %3111 = vmatprep.mubr.bf16.mxu0 %v1885
        %3112 = vmatmul.mubr.bf16.gmra.mrb[0].mxu0 %v1884
        %v3113 = vpop.f32.mrb[0].mxu0
        %v3114 = vadd.f32 0.0, %v3113
        %v3115 = vpop.f32.mrb[0].mxu0
        %v3116 = vpop.f32.mrb[0].mxu0
        %v3117 = vadd.f32 0.0, %v3116
        %v3118 = vpop.f32.mrb[0].mxu0
        %3119 = vmatprep.mubr.bf16.mxu0 %v1887
        %3120 = vmatmul.mubr.bf16.gmra.mrb[0].mxu0 %v1886
        %v3121 = vpop.f32.mrb[0].mxu0
        %v3122 = vadd.f32 0.0, %v3121
        %v3123 = vpop.f32.mrb[0].mxu0
        %v3124 = vpop.f32.mrb[0].mxu0
        %v3125 = vadd.f32 0.0, %v3124
        %v3126 = vpop.f32.mrb[0].mxu0
        %3127 = vmatprep.mubr.bf16.mxu0 %v1889
        %3128 = vmatmul.mubr.bf16.gmra.mrb[0].mxu0 %v1888
        %v3129 = vpop.f32.mrb[0].mxu0
        %v3130 = vadd.f32 0.0, %v3129
        %v3131 = vpop.f32.mrb[0].mxu0
        %v3132 = vpop.f32.mrb[0].mxu0
        %v3133 = vadd.f32 0.0, %v3132
        %v3134 = vpop.f32.mrb[0].mxu0
        %3135 = vmatprep.mubr.bf16.mxu0 %v1891
        %3136 = vmatmul.mubr.bf16.gmra.mrb[0].mxu0 %v1890
        %v3137 = vpop.f32.mrb[0].mxu0
        %v3138 = vadd.f32 0.0, %v3137
        %v3139 = vpop.f32.mrb[0].mxu0
        %v3140 = vpop.f32.mrb[0].mxu0
        %v3141 = vadd.f32 0.0, %v3140
        %v3142 = vpop.f32.mrb[0].mxu0
        %3143 = vmatprep.mubr.bf16.mxu0 %v1893
        %3144 = vmatmul.mubr.bf16.gmra.mrb[0].mxu0 %v1892
        %v3145 = vpop.f32.mrb[0].mxu0
        %v3146 = vadd.f32 0.0, %v3145
        %v3147 = vpop.f32.mrb[0].mxu0
        %v3148 = vpop.f32.mrb[0].mxu0
        %v3149 = vadd.f32 0.0, %v3148
        %v3150 = vpop.f32.mrb[0].mxu0
        %3151 = vdwg.mxu0
        %v3152 = vadd.f32 %v2007, %v3090
        %v3153 = vadd.f32 %v2008, %v3093
        %v3154 = vadd.f32 %v2009, %v3098
        %v3155 = vadd.f32 %v2010, %v3101
        %v3156 = vadd.f32 %v2011, %v3106
        %v3157 = vadd.f32 %v2012, %v3109
        %v3158 = vadd.f32 %v2013, %v3114
        %v3159 = vadd.f32 %v2014, %v3117
        %v3160 = vadd.f32 %v2015, %v3122
        %v3161 = vadd.f32 %v2016, %v3125
        %v3162 = vadd.f32 %v2017, %v3130
        %v3163 = vadd.f32 %v2018, %v3133
        %v3164 = vadd.f32 %v2019, %v3138
        %v3165 = vadd.f32 %v2020, %v3141
        %v3166 = vadd.f32 %v2021, %v3146
        %v3167 = vadd.f32 %v2022, %v3149
        %v3168 = vld [vmem:[%s3 + $0x88] sm:$0xff]
        %v3169 = vld [vmem:[%s3 + $0x90] sm:$0xff]
        %v3170 = vld [vmem:[%s3 + $0x98] sm:$0xff]
        %v3171 = vld [vmem:[%s3 + $0xa0] sm:$0xff]
        %v3172 = vld [vmem:[%s3 + $0xa8] sm:$0xff]
        %v3173 = vld [vmem:[%s3 + $0xb0] sm:$0xff]
        %v3174 = vld [vmem:[%s3 + $0xb8] sm:$0xff]
        %v3175 = vld [vmem:[%s3 + $0xc0] sm:$0xff]
        %v3176 = vld [vmem:[%s4 + $0x3] sm:$0x1]
        %v3177 = vpack.c.bf16 %v3153, %v3152
        %v3178 = vpack.c.bf16 %v3155, %v3154
        %v3179 = vpack.c.bf16 %v3157, %v3156
        %v3180 = vpack.c.bf16 %v3159, %v3158
        %v3181 = vpack.c.bf16 %v3161, %v3160
        %v3182 = vpack.c.bf16 %v3163, %v3162
        %v3183 = vpack.c.bf16 %v3165, %v3164
        %v3184 = vpack.c.bf16 %v3167, %v3166
        %3185 = vmatprep.subr.bf16.mxu0 0
        %3186 = vmatpush1.bf16.msra.mxu0 %v3177
        %3187 = vmatprep.subr.bf16.mxu0 0
        %3188 = vmatpush1.bf16.msra.mxu0 %v3178
        %3189 = vmatprep.subr.bf16.mxu0 0
        %3190 = vmatpush1.bf16.msra.mxu0 %v3179
        %3191 = vmatprep.subr.bf16.mxu0 0
        %3192 = vmatpush1.bf16.msra.mxu0 %v3180
        %3193 = vmatprep.subr.bf16.mxu0 0
        %3194 = vmatpush1.bf16.msra.mxu0 %v3181
        %3195 = vmatprep.subr.bf16.mxu0 0
        %3196 = vmatpush1.bf16.msra.mxu0 %v3182
        %3197 = vmatprep.subr.bf16.mxu0 0
        %3198 = vmatpush1.bf16.msra.mxu0 %v3183
        %3199 = vmatprep.subr.bf16.mxu0 0
        %3200 = vmatpush1.bf16.msra.mxu0 %v3184
        %3201 = vmatprep.subr.bf16.mxu0 0
        %3202 = vmatpush1.bf16.msra.mxu0 0
        %3203 = vmatprep.subr.bf16.mxu0 0
        %3204 = vmatpush1.bf16.msra.mxu0 0
        %3205 = vmatprep.subr.bf16.mxu0 0
        %3206 = vmatpush1.bf16.msra.mxu0 0
        %3207 = vmatprep.subr.bf16.mxu0 0
        %3208 = vmatpush1.bf16.msra.mxu0 0
        %3209 = vmatprep.subr.bf16.mxu0 0
        %3210 = vmatpush1.bf16.msra.mxu0 0
        %3211 = vmatprep.subr.bf16.mxu0 0
        %3212 = vmatpush1.bf16.msra.mxu0 0
        %3213 = vmatprep.subr.bf16.mxu0 0
        %3214 = vmatpush1.bf16.msra.mxu0 0
        %3215 = vmatprep.subr.bf16.mxu0 0
        %3216 = vmatpush1.bf16.msra.mxu0 0
        %3217 = vmatprep.mubr.bf16.mxu0 0
        %3218 = vmatmul.mubr.bf16.gmra.mrb[0].mxu0 %v750
        %v3219 = vpop.f32.mrb[0].mxu0
        %v3220 = vadd.f32 0.0, %v3219
        %v3221 = vpop.f32.mrb[0].mxu0
        %v3222 = vpop.f32.mrb[0].mxu0
        %v3223 = vadd.f32 0.0, %v3222
        %v3224 = vpop.f32.mrb[0].mxu0
        %3225 = vmatprep.mubr.bf16.mxu0 0
        %3226 = vmatmul.mubr.bf16.gmra.mrb[0].mxu0 %v751
        %v3227 = vpop.f32.mrb[0].mxu0
        %v3228 = vadd.f32 0.0, %v3227
        %v3229 = vpop.f32.mrb[0].mxu0
        %v3230 = vpop.f32.mrb[0].mxu0
        %v3231 = vadd.f32 0.0, %v3230
        %v3232 = vpop.f32.mrb[0].mxu0
        %3233 = vmatprep.mubr.bf16.mxu0 0
        %3234 = vmatmul.mubr.bf16.gmra.mrb[0].mxu0 %v752
        %v3235 = vpop.f32.mrb[0].mxu0
        %v3236 = vadd.f32 0.0, %v3235
        %v3237 = vpop.f32.mrb[0].mxu0
        %v3238 = vpop.f32.mrb[0].mxu0
        %v3239 = vadd.f32 0.0, %v3238
        %v3240 = vpop.f32.mrb[0].mxu0
        %3241 = vmatprep.mubr.bf16.mxu0 0
        %3242 = vmatmul.mubr.bf16.gmra.mrb[0].mxu0 %v753
        %v3243 = vpop.f32.mrb[0].mxu0
        %v3244 = vadd.f32 0.0, %v3243
        %v3245 = vpop.f32.mrb[0].mxu0
        %v3246 = vpop.f32.mrb[0].mxu0
        %v3247 = vadd.f32 0.0, %v3246
        %v3248 = vpop.f32.mrb[0].mxu0
        %3249 = vmatprep.mubr.bf16.mxu0 0
        %3250 = vmatmul.mubr.bf16.gmra.mrb[0].mxu0 %v754
        %v3251 = vpop.f32.mrb[0].mxu0
        %v3252 = vadd.f32 0.0, %v3251
        %v3253 = vpop.f32.mrb[0].mxu0
        %v3254 = vpop.f32.mrb[0].mxu0
        %v3255 = vadd.f32 0.0, %v3254
        %v3256 = vpop.f32.mrb[0].mxu0
        %3257 = vmatprep.mubr.bf16.mxu0 0
        %3258 = vmatmul.mubr.bf16.gmra.mrb[0].mxu0 %v755
        %v3259 = vpop.f32.mrb[0].mxu0
        %v3260 = vadd.f32 0.0, %v3259
        %v3261 = vpop.f32.mrb[0].mxu0
        %v3262 = vpop.f32.mrb[0].mxu0
        %v3263 = vadd.f32 0.0, %v3262
        %v3264 = vpop.f32.mrb[0].mxu0
        %3265 = vmatprep.mubr.bf16.mxu0 0
        %3266 = vmatmul.mubr.bf16.gmra.mrb[0].mxu0 %v756
        %v3267 = vpop.f32.mrb[0].mxu0
        %v3268 = vadd.f32 0.0, %v3267
        %v3269 = vpop.f32.mrb[0].mxu0
        %v3270 = vpop.f32.mrb[0].mxu0
        %v3271 = vadd.f32 0.0, %v3270
        %v3272 = vpop.f32.mrb[0].mxu0
        %3273 = vmatprep.mubr.bf16.mxu0 0
        %3274 = vmatmul.mubr.bf16.gmra.mrb[0].mxu0 %v757
        %v3275 = vpop.f32.mrb[0].mxu0
        %v3276 = vadd.f32 0.0, %v3275
        %v3277 = vpop.f32.mrb[0].mxu0
        %v3278 = vpop.f32.mrb[0].mxu0
        %v3279 = vadd.f32 0.0, %v3278
        %v3280 = vpop.f32.mrb[0].mxu0
        %3281 = vmatprep.mubr.bf16.mxu0 0
        %3282 = vmatmul.mubr.bf16.gmra.mrb[0].mxu0 %v758
        %v3283 = vpop.f32.mrb[0].mxu0
        %v3284 = vadd.f32 0.0, %v3283
        %v3285 = vpop.f32.mrb[0].mxu0
        %v3286 = vpop.f32.mrb[0].mxu0
        %v3287 = vadd.f32 0.0, %v3286
        %v3288 = vpop.f32.mrb[0].mxu0
        %3289 = vmatprep.mubr.bf16.mxu0 0
        %3290 = vmatmul.mubr.bf16.gmra.mrb[0].mxu0 %v759
        %v3291 = vpop.f32.mrb[0].mxu0
        %v3292 = vadd.f32 0.0, %v3291
        %v3293 = vpop.f32.mrb[0].mxu0
        %v3294 = vpop.f32.mrb[0].mxu0
        %v3295 = vadd.f32 0.0, %v3294
        %v3296 = vpop.f32.mrb[0].mxu0
        %3297 = vmatprep.mubr.bf16.mxu0 0
        %3298 = vmatmul.mubr.bf16.gmra.mrb[0].mxu0 %v760
        %v3299 = vpop.f32.mrb[0].mxu0
        %v3300 = vadd.f32 0.0, %v3299
        %v3301 = vpop.f32.mrb[0].mxu0
        %v3302 = vpop.f32.mrb[0].mxu0
        %v3303 = vadd.f32 0.0, %v3302
        %v3304 = vpop.f32.mrb[0].mxu0
        %3305 = vmatprep.mubr.bf16.mxu0 0
        %3306 = vmatmul.mubr.bf16.gmra.mrb[0].mxu0 %v761
        %v3307 = vpop.f32.mrb[0].mxu0
        %v3308 = vadd.f32 0.0, %v3307
        %v3309 = vpop.f32.mrb[0].mxu0
        %v3310 = vpop.f32.mrb[0].mxu0
        %v3311 = vadd.f32 0.0, %v3310
        %v3312 = vpop.f32.mrb[0].mxu0
        %3313 = vmatprep.mubr.bf16.mxu0 0
        %3314 = vmatmul.mubr.bf16.gmra.mrb[0].mxu0 %v762
        %v3315 = vpop.f32.mrb[0].mxu0
        %v3316 = vadd.f32 0.0, %v3315
        %v3317 = vpop.f32.mrb[0].mxu0
        %v3318 = vpop.f32.mrb[0].mxu0
        %v3319 = vadd.f32 0.0, %v3318
        %v3320 = vpop.f32.mrb[0].mxu0
        %3321 = vmatprep.mubr.bf16.mxu0 0
        %3322 = vmatmul.mubr.bf16.gmra.mrb[0].mxu0 %v763
        %v3323 = vpop.f32.mrb[0].mxu0
        %v3324 = vadd.f32 0.0, %v3323
        %v3325 = vpop.f32.mrb[0].mxu0
        %v3326 = vpop.f32.mrb[0].mxu0
        %v3327 = vadd.f32 0.0, %v3326
        %v3328 = vpop.f32.mrb[0].mxu0
        %3329 = vmatprep.mubr.bf16.mxu0 0
        %3330 = vmatmul.mubr.bf16.gmra.mrb[0].mxu0 %v764
        %v3331 = vpop.f32.mrb[0].mxu0
        %v3332 = vadd.f32 0.0, %v3331
        %v3333 = vpop.f32.mrb[0].mxu0
        %v3334 = vpop.f32.mrb[0].mxu0
        %v3335 = vadd.f32 0.0, %v3334
        %v3336 = vpop.f32.mrb[0].mxu0
        %3337 = vmatprep.mubr.bf16.mxu0 0
        %3338 = vmatmul.mubr.bf16.gmra.mrb[0].mxu0 %v765
        %v3339 = vpop.f32.mrb[0].mxu0
        %v3340 = vadd.f32 0.0, %v3339
        %v3341 = vpop.f32.mrb[0].mxu0
        %v3342 = vpop.f32.mrb[0].mxu0
        %v3343 = vadd.f32 0.0, %v3342
        %v3344 = vpop.f32.mrb[0].mxu0
        %3345 = vmatprep.mubr.bf16.mxu0 0
        %3346 = vmatmul.mubr.bf16.gmra.mrb[0].mxu0 %v766
        %v3347 = vpop.f32.mrb[0].mxu0
        %v3348 = vadd.f32 0.0, %v3347
        %v3349 = vpop.f32.mrb[0].mxu0
        %v3350 = vpop.f32.mrb[0].mxu0
        %v3351 = vadd.f32 0.0, %v3350
        %v3352 = vpop.f32.mrb[0].mxu0
        %3353 = vmatprep.mubr.bf16.mxu0 0
        %3354 = vmatmul.mubr.bf16.gmra.mrb[0].mxu0 %v767
        %v3355 = vpop.f32.mrb[0].mxu0
        %v3356 = vadd.f32 0.0, %v3355
        %v3357 = vpop.f32.mrb[0].mxu0
        %v3358 = vpop.f32.mrb[0].mxu0
        %v3359 = vadd.f32 0.0, %v3358
        %v3360 = vpop.f32.mrb[0].mxu0
        %3361 = vmatprep.mubr.bf16.mxu0 0
        %3362 = vmatmul.mubr.bf16.gmra.mrb[0].mxu0 %v768
        %v3363 = vpop.f32.mrb[0].mxu0
        %v3364 = vadd.f32 0.0, %v3363
        %v3365 = vpop.f32.mrb[0].mxu0
        %v3366 = vpop.f32.mrb[0].mxu0
        %v3367 = vadd.f32 0.0, %v3366
        %v3368 = vpop.f32.mrb[0].mxu0
        %3369 = vmatprep.mubr.bf16.mxu0 0
        %3370 = vmatmul.mubr.bf16.gmra.mrb[0].mxu0 %v769
        %v3371 = vpop.f32.mrb[0].mxu0
        %v3372 = vadd.f32 0.0, %v3371
        %v3373 = vpop.f32.mrb[0].mxu0
        %v3374 = vpop.f32.mrb[0].mxu0
        %v3375 = vadd.f32 0.0, %v3374
        %v3376 = vpop.f32.mrb[0].mxu0
        %3377 = vmatprep.mubr.bf16.mxu0 0
        %3378 = vmatmul.mubr.bf16.gmra.mrb[0].mxu0 %v770
        %v3379 = vpop.f32.mrb[0].mxu0
        %v3380 = vadd.f32 0.0, %v3379
        %v3381 = vpop.f32.mrb[0].mxu0
        %v3382 = vpop.f32.mrb[0].mxu0
        %v3383 = vadd.f32 0.0, %v3382
        %v3384 = vpop.f32.mrb[0].mxu0
        %3385 = vmatprep.mubr.bf16.mxu0 0
        %3386 = vmatmul.mubr.bf16.gmra.mrb[0].mxu0 %v771
        %v3387 = vpop.f32.mrb[0].mxu0
        %v3388 = vadd.f32 0.0, %v3387
        %v3389 = vpop.f32.mrb[0].mxu0
        %v3390 = vpop.f32.mrb[0].mxu0
        %v3391 = vadd.f32 0.0, %v3390
        %v3392 = vpop.f32.mrb[0].mxu0
        %3393 = vmatprep.mubr.bf16.mxu0 0
        %3394 = vmatmul.mubr.bf16.gmra.mrb[0].mxu0 %v772
        %v3395 = vpop.f32.mrb[0].mxu0
        %v3396 = vadd.f32 0.0, %v3395
        %v3397 = vpop.f32.mrb[0].mxu0
        %v3398 = vpop.f32.mrb[0].mxu0
        %v3399 = vadd.f32 0.0, %v3398
        %v3400 = vpop.f32.mrb[0].mxu0
        %3401 = vmatprep.mubr.bf16.mxu0 0
        %3402 = vmatmul.mubr.bf16.gmra.mrb[0].mxu0 %v773
        %v3403 = vpop.f32.mrb[0].mxu0
        %v3404 = vadd.f32 0.0, %v3403
        %v3405 = vpop.f32.mrb[0].mxu0
        %v3406 = vpop.f32.mrb[0].mxu0
        %v3407 = vadd.f32 0.0, %v3406
        %v3408 = vpop.f32.mrb[0].mxu0
        %3409 = vmatprep.mubr.bf16.mxu0 0
        %3410 = vmatmul.mubr.bf16.gmra.mrb[0].mxu0 %v774
        %v3411 = vpop.f32.mrb[0].mxu0
        %v3412 = vadd.f32 0.0, %v3411
        %v3413 = vpop.f32.mrb[0].mxu0
        %v3414 = vpop.f32.mrb[0].mxu0
        %v3415 = vadd.f32 0.0, %v3414
        %v3416 = vpop.f32.mrb[0].mxu0
        %3417 = vmatprep.mubr.bf16.mxu0 0
        %3418 = vmatmul.mubr.bf16.gmra.mrb[0].mxu0 %v775
        %v3419 = vpop.f32.mrb[0].mxu0
        %v3420 = vadd.f32 0.0, %v3419
        %v3421 = vpop.f32.mrb[0].mxu0
        %v3422 = vpop.f32.mrb[0].mxu0
        %v3423 = vadd.f32 0.0, %v3422
        %v3424 = vpop.f32.mrb[0].mxu0
        %3425 = vmatprep.mubr.bf16.mxu0 0
        %3426 = vmatmul.mubr.bf16.gmra.mrb[0].mxu0 %v776
        %v3427 = vpop.f32.mrb[0].mxu0
        %v3428 = vadd.f32 0.0, %v3427
        %v3429 = vpop.f32.mrb[0].mxu0
        %v3430 = vpop.f32.mrb[0].mxu0
        %v3431 = vadd.f32 0.0, %v3430
        %v3432 = vpop.f32.mrb[0].mxu0
        %3433 = vmatprep.mubr.bf16.mxu0 0
        %3434 = vmatmul.mubr.bf16.gmra.mrb[0].mxu0 %v777
        %v3435 = vpop.f32.mrb[0].mxu0
        %v3436 = vadd.f32 0.0, %v3435
        %v3437 = vpop.f32.mrb[0].mxu0
        %v3438 = vpop.f32.mrb[0].mxu0
        %v3439 = vadd.f32 0.0, %v3438
        %v3440 = vpop.f32.mrb[0].mxu0
        %3441 = vmatprep.mubr.bf16.mxu0 0
        %3442 = vmatmul.mubr.bf16.gmra.mrb[0].mxu0 %v778
        %v3443 = vpop.f32.mrb[0].mxu0
        %v3444 = vadd.f32 0.0, %v3443
        %v3445 = vpop.f32.mrb[0].mxu0
        %v3446 = vpop.f32.mrb[0].mxu0
        %v3447 = vadd.f32 0.0, %v3446
        %v3448 = vpop.f32.mrb[0].mxu0
        %3449 = vmatprep.mubr.bf16.mxu0 0
        %3450 = vmatmul.mubr.bf16.gmra.mrb[0].mxu0 %v779
        %v3451 = vpop.f32.mrb[0].mxu0
        %v3452 = vadd.f32 0.0, %v3451
        %v3453 = vpop.f32.mrb[0].mxu0
        %v3454 = vpop.f32.mrb[0].mxu0
        %v3455 = vadd.f32 0.0, %v3454
        %v3456 = vpop.f32.mrb[0].mxu0
        %3457 = vmatprep.mubr.bf16.mxu0 0
        %3458 = vmatmul.mubr.bf16.gmra.mrb[0].mxu0 %v780
        %v3459 = vpop.f32.mrb[0].mxu0
        %v3460 = vadd.f32 0.0, %v3459
        %v3461 = vpop.f32.mrb[0].mxu0
        %v3462 = vpop.f32.mrb[0].mxu0
        %v3463 = vadd.f32 0.0, %v3462
        %v3464 = vpop.f32.mrb[0].mxu0
        %3465 = vmatprep.mubr.bf16.mxu0 0
        %3466 = vmatmul.mubr.bf16.gmra.mrb[0].mxu0 %v781
        %v3467 = vpop.f32.mrb[0].mxu0
        %v3468 = vadd.f32 0.0, %v3467
        %v3469 = vpop.f32.mrb[0].mxu0
        %v3470 = vpop.f32.mrb[0].mxu0
        %v3471 = vadd.f32 0.0, %v3470
        %v3472 = vpop.f32.mrb[0].mxu0
        %3473 = vdwg.mxu0
        %v3475 = vsel %vm1103, %v3348, 0
        %v3478 = vsel %vm1103, %v3351, 0
        %v3481 = vsel %vm1103, %v3356, 0
        %v3484 = vsel %vm1103, %v3359, 0
        %v3487 = vsel %vm1103, %v3364, 0
        %v3490 = vsel %vm1103, %v3367, 0
        %v3493 = vsel %vm1103, %v3372, 0
        %v3496 = vsel %vm1103, %v3375, 0
        %v3499 = vsel %vm1103, %v3380, 0
        %v3502 = vsel %vm1103, %v3383, 0
        %v3505 = vsel %vm1103, %v3388, 0
        %v3508 = vsel %vm1103, %v3391, 0
        %v3511 = vsel %vm1103, %v3396, 0
        %v3514 = vsel %vm1103, %v3399, 0
        %v3517 = vsel %vm1103, %v3404, 0
        %v3520 = vsel %vm1103, %v3407, 0
        %v3523 = vsel %vm1103, %v3412, 0
        %v3526 = vsel %vm1103, %v3415, 0
        %v3529 = vsel %vm1103, %v3420, 0
        %v3532 = vsel %vm1103, %v3423, 0
        %v3535 = vsel %vm1103, %v3428, 0
        %v3538 = vsel %vm1103, %v3431, 0
        %v3541 = vsel %vm1103, %v3436, 0
        %v3544 = vsel %vm1103, %v3439, 0
        %v3547 = vsel %vm1103, %v3444, 0
        %v3550 = vsel %vm1103, %v3447, 0
        %v3553 = vsel %vm1103, %v3452, 0
        %v3556 = vsel %vm1103, %v3455, 0
        %v3559 = vsel %vm1103, %v3460, 0
        %v3562 = vsel %vm1103, %v3463, 0
        %v3565 = vsel %vm1103, %v3468, 0
        %v3568 = vsel %vm1103, %v3471, 0
        %3570 = vmatprep.subr.mxu0 0.0
        %3571 = vmatpush1.msra.mxu0 %v3172
        %3572 = vmatprep.subr.mxu0 0.0
        %3573 = vmatpush1.msra.mxu0 %v3173
        %3574 = vmatprep.subr.mxu0 0.0
        %3575 = vmatpush1.msra.mxu0 %v3174
        %3576 = vmatprep.subr.mxu0 0.0
        %3577 = vmatpush1.msra.mxu0 %v3175
        %3578 = vmatprep.subr.mxu0 0.0
        %3579 = vmatpush1.msra.mxu0 0.0
        %3580 = vmatprep.subr.mxu0 0.0
        %3581 = vmatpush1.msra.mxu0 0.0
        %3582 = vmatprep.subr.mxu0 0.0
        %3583 = vmatpush1.msra.mxu0 0.0
        %3584 = vmatprep.subr.mxu0 0.0
        %3585 = vmatpush1.msra.mxu0 0.0
        %3586 = vmatprep.subr.mxu0 0.0
        %3587 = vmatpush1.msra.mxu0 0.0
        %3588 = vmatprep.subr.mxu0 0.0
        %3589 = vmatpush1.msra.mxu0 0.0
        %3590 = vmatprep.subr.mxu0 0.0
        %3591 = vmatpush1.msra.mxu0 0.0
        %3592 = vmatprep.subr.mxu0 0.0
        %3593 = vmatpush1.msra.mxu0 0.0
        %3594 = vmatprep.subr.mxu0 0.0
        %3595 = vmatpush1.msra.mxu0 0.0
        %3596 = vmatprep.subr.mxu0 0.0
        %3597 = vmatpush1.msra.mxu0 0.0
        %3598 = vmatprep.subr.mxu0 0.0
        %3599 = vmatpush1.msra.mxu0 0.0
        %3600 = vmatprep.subr.mxu0 0.0
        %3601 = vmatpush1.msra.mxu0 0.0
        %3602 = vmatprep.subr.mxu0 0.0
        %3603 = vmatpush1.msra.mxu0 0.0
        %3604 = vmatprep.subr.mxu0 0.0
        %3605 = vmatpush1.msra.mxu0 0.0
        %3606 = vmatprep.subr.mxu0 0.0
        %3607 = vmatpush1.msra.mxu0 0.0
        %3608 = vmatprep.subr.mxu0 0.0
        %3609 = vmatpush1.msra.mxu0 0.0
        %3610 = vmatprep.subr.mxu0 0.0
        %3611 = vmatpush1.msra.mxu0 0.0
        %3612 = vmatprep.subr.mxu0 0.0
        %3613 = vmatpush1.msra.mxu0 0.0
        %3614 = vmatprep.subr.mxu0 0.0
        %3615 = vmatpush1.msra.mxu0 0.0
        %3616 = vmatprep.subr.mxu0 0.0
        %3617 = vmatpush1.msra.mxu0 0.0
        %3618 = vmatprep.subr.mxu0 0.0
        %3619 = vmatpush1.msra.mxu0 0.0
        %3620 = vmatprep.subr.mxu0 0.0
        %3621 = vmatpush1.msra.mxu0 0.0
        %3622 = vmatprep.subr.mxu0 0.0
        %3623 = vmatpush1.msra.mxu0 0.0
        %3624 = vmatprep.subr.mxu0 0.0
        %3625 = vmatpush1.msra.mxu0 0.0
        %3626 = vmatprep.subr.mxu0 0.0
        %3627 = vmatpush1.msra.mxu0 0.0
        %3628 = vmatprep.subr.mxu0 0.0
        %3629 = vmatpush1.msra.mxu0 0.0
        %3630 = vmatprep.subr.mxu0 0.0
        %3631 = vmatpush1.msra.mxu0 0.0
        %3632 = vmatprep.subr.mxu0 0.0
        %3633 = vmatpush1.msra.mxu0 0.0
        %3634 = vmatprep.mubr.f32.mxu0 0.0
        %3635 = vmatmul.mubr.f32.gmra.mrb[0].mxu0 %v3475
        %v3636 = vpop.f32.mrb[0].mxu0
        %v3637 = vadd.f32 0.0, %v3636
        %v3638 = vpop.f32.mrb[0].mxu0
        %3639 = vmatprep.mubr.f32.mxu0 0.0
        %3640 = vmatmul.mubr.f32.gmra.mrb[0].mxu0 %v3478
        %v3641 = vpop.f32.mrb[0].mxu0
        %v3642 = vadd.f32 0.0, %v3641
        %v3643 = vpop.f32.mrb[0].mxu0
        %3644 = vmatprep.mubr.f32.mxu0 0.0
        %3645 = vmatmul.mubr.f32.gmra.mrb[0].mxu0 %v3481
        %v3646 = vpop.f32.mrb[0].mxu0
        %v3647 = vadd.f32 0.0, %v3646
        %v3648 = vpop.f32.mrb[0].mxu0
        %3649 = vmatprep.mubr.f32.mxu0 0.0
        %3650 = vmatmul.mubr.f32.gmra.mrb[0].mxu0 %v3484
        %v3651 = vpop.f32.mrb[0].mxu0
        %v3652 = vadd.f32 0.0, %v3651
        %v3653 = vpop.f32.mrb[0].mxu0
        %3654 = vmatprep.mubr.f32.mxu0 0.0
        %3655 = vmatmul.mubr.f32.gmra.mrb[0].mxu0 %v3487
        %v3656 = vpop.f32.mrb[0].mxu0
        %v3657 = vadd.f32 0.0, %v3656
        %v3658 = vpop.f32.mrb[0].mxu0
        %3659 = vmatprep.mubr.f32.mxu0 0.0
        %3660 = vmatmul.mubr.f32.gmra.mrb[0].mxu0 %v3490
        %v3661 = vpop.f32.mrb[0].mxu0
        %v3662 = vadd.f32 0.0, %v3661
        %v3663 = vpop.f32.mrb[0].mxu0
        %3664 = vmatprep.mubr.f32.mxu0 0.0
        %3665 = vmatmul.mubr.f32.gmra.mrb[0].mxu0 %v3493
        %v3666 = vpop.f32.mrb[0].mxu0
        %v3667 = vadd.f32 0.0, %v3666
        %v3668 = vpop.f32.mrb[0].mxu0
        %3669 = vmatprep.mubr.f32.mxu0 0.0
        %3670 = vmatmul.mubr.f32.gmra.mrb[0].mxu0 %v3496
        %v3671 = vpop.f32.mrb[0].mxu0
        %v3672 = vadd.f32 0.0, %v3671
        %v3673 = vpop.f32.mrb[0].mxu0
        %3674 = vmatprep.mubr.f32.mxu0 0.0
        %3675 = vmatmul.mubr.f32.gmra.mrb[0].mxu0 %v3499
        %v3676 = vpop.f32.mrb[0].mxu0
        %v3677 = vadd.f32 0.0, %v3676
        %v3678 = vpop.f32.mrb[0].mxu0
        %3679 = vmatprep.mubr.f32.mxu0 0.0
        %3680 = vmatmul.mubr.f32.gmra.mrb[0].mxu0 %v3502
        %v3681 = vpop.f32.mrb[0].mxu0
        %v3682 = vadd.f32 0.0, %v3681
        %v3683 = vpop.f32.mrb[0].mxu0
        %3684 = vmatprep.mubr.f32.mxu0 0.0
        %3685 = vmatmul.mubr.f32.gmra.mrb[0].mxu0 %v3505
        %v3686 = vpop.f32.mrb[0].mxu0
        %v3687 = vadd.f32 0.0, %v3686
        %v3688 = vpop.f32.mrb[0].mxu0
        %3689 = vmatprep.mubr.f32.mxu0 0.0
        %3690 = vmatmul.mubr.f32.gmra.mrb[0].mxu0 %v3508
        %v3691 = vpop.f32.mrb[0].mxu0
        %v3692 = vadd.f32 0.0, %v3691
        %v3693 = vpop.f32.mrb[0].mxu0
        %3694 = vmatprep.mubr.f32.mxu0 0.0
        %3695 = vmatmul.mubr.f32.gmra.mrb[0].mxu0 %v3511
        %v3696 = vpop.f32.mrb[0].mxu0
        %v3697 = vadd.f32 0.0, %v3696
        %v3698 = vpop.f32.mrb[0].mxu0
        %3699 = vmatprep.mubr.f32.mxu0 0.0
        %3700 = vmatmul.mubr.f32.gmra.mrb[0].mxu0 %v3514
        %v3701 = vpop.f32.mrb[0].mxu0
        %v3702 = vadd.f32 0.0, %v3701
        %v3703 = vpop.f32.mrb[0].mxu0
        %3704 = vmatprep.mubr.f32.mxu0 0.0
        %3705 = vmatmul.mubr.f32.gmra.mrb[0].mxu0 %v3517
        %v3706 = vpop.f32.mrb[0].mxu0
        %v3707 = vadd.f32 0.0, %v3706
        %v3708 = vpop.f32.mrb[0].mxu0
        %3709 = vmatprep.mubr.f32.mxu0 0.0
        %3710 = vmatmul.mubr.f32.gmra.mrb[0].mxu0 %v3520
        %v3711 = vpop.f32.mrb[0].mxu0
        %v3712 = vadd.f32 0.0, %v3711
        %v3713 = vpop.f32.mrb[0].mxu0
        %3714 = vmatprep.mubr.f32.mxu0 0.0
        %3715 = vmatmul.mubr.f32.gmra.mrb[0].mxu0 %v3523
        %v3716 = vpop.f32.mrb[0].mxu0
        %v3717 = vadd.f32 0.0, %v3716
        %v3718 = vpop.f32.mrb[0].mxu0
        %3719 = vmatprep.mubr.f32.mxu0 0.0
        %3720 = vmatmul.mubr.f32.gmra.mrb[0].mxu0 %v3526
        %v3721 = vpop.f32.mrb[0].mxu0
        %v3722 = vadd.f32 0.0, %v3721
        %v3723 = vpop.f32.mrb[0].mxu0
        %3724 = vmatprep.mubr.f32.mxu0 0.0
        %3725 = vmatmul.mubr.f32.gmra.mrb[0].mxu0 %v3529
        %v3726 = vpop.f32.mrb[0].mxu0
        %v3727 = vadd.f32 0.0, %v3726
        %v3728 = vpop.f32.mrb[0].mxu0
        %3729 = vmatprep.mubr.f32.mxu0 0.0
        %3730 = vmatmul.mubr.f32.gmra.mrb[0].mxu0 %v3532
        %v3731 = vpop.f32.mrb[0].mxu0
        %v3732 = vadd.f32 0.0, %v3731
        %v3733 = vpop.f32.mrb[0].mxu0
        %3734 = vmatprep.mubr.f32.mxu0 0.0
        %3735 = vmatmul.mubr.f32.gmra.mrb[0].mxu0 %v3535
        %v3736 = vpop.f32.mrb[0].mxu0
        %v3737 = vadd.f32 0.0, %v3736
        %v3738 = vpop.f32.mrb[0].mxu0
        %3739 = vmatprep.mubr.f32.mxu0 0.0
        %3740 = vmatmul.mubr.f32.gmra.mrb[0].mxu0 %v3538
        %v3741 = vpop.f32.mrb[0].mxu0
        %v3742 = vadd.f32 0.0, %v3741
        %v3743 = vpop.f32.mrb[0].mxu0
        %3744 = vmatprep.mubr.f32.mxu0 0.0
        %3745 = vmatmul.mubr.f32.gmra.mrb[0].mxu0 %v3541
        %v3746 = vpop.f32.mrb[0].mxu0
        %v3747 = vadd.f32 0.0, %v3746
        %v3748 = vpop.f32.mrb[0].mxu0
        %3749 = vmatprep.mubr.f32.mxu0 0.0
        %3750 = vmatmul.mubr.f32.gmra.mrb[0].mxu0 %v3544
        %v3751 = vpop.f32.mrb[0].mxu0
        %v3752 = vadd.f32 0.0, %v3751
        %v3753 = vpop.f32.mrb[0].mxu0
        %3754 = vmatprep.mubr.f32.mxu0 0.0
        %3755 = vmatmul.mubr.f32.gmra.mrb[0].mxu0 %v3547
        %v3756 = vpop.f32.mrb[0].mxu0
        %v3757 = vadd.f32 0.0, %v3756
        %v3758 = vpop.f32.mrb[0].mxu0
        %3759 = vmatprep.mubr.f32.mxu0 0.0
        %3760 = vmatmul.mubr.f32.gmra.mrb[0].mxu0 %v3550
        %v3761 = vpop.f32.mrb[0].mxu0
        %v3762 = vadd.f32 0.0, %v3761
        %v3763 = vpop.f32.mrb[0].mxu0
        %3764 = vmatprep.mubr.f32.mxu0 0.0
        %3765 = vmatmul.mubr.f32.gmra.mrb[0].mxu0 %v3553
        %v3766 = vpop.f32.mrb[0].mxu0
        %v3767 = vadd.f32 0.0, %v3766
        %v3768 = vpop.f32.mrb[0].mxu0
        %3769 = vmatprep.mubr.f32.mxu0 0.0
        %3770 = vmatmul.mubr.f32.gmra.mrb[0].mxu0 %v3556
        %v3771 = vpop.f32.mrb[0].mxu0
        %v3772 = vadd.f32 0.0, %v3771
        %v3773 = vpop.f32.mrb[0].mxu0
        %3774 = vmatprep.mubr.f32.mxu0 0.0
        %3775 = vmatmul.mubr.f32.gmra.mrb[0].mxu0 %v3559
        %v3776 = vpop.f32.mrb[0].mxu0
        %v3777 = vadd.f32 0.0, %v3776
        %v3778 = vpop.f32.mrb[0].mxu0
        %3779 = vmatprep.mubr.f32.mxu0 0.0
        %3780 = vmatmul.mubr.f32.gmra.mrb[0].mxu0 %v3562
        %v3781 = vpop.f32.mrb[0].mxu0
        %v3782 = vadd.f32 0.0, %v3781
        %v3783 = vpop.f32.mrb[0].mxu0
        %3784 = vmatprep.mubr.f32.mxu0 0.0
        %3785 = vmatmul.mubr.f32.gmra.mrb[0].mxu0 %v3565
        %v3786 = vpop.f32.mrb[0].mxu0
        %v3787 = vadd.f32 0.0, %v3786
        %v3788 = vpop.f32.mrb[0].mxu0
        %3789 = vmatprep.mubr.f32.mxu0 0.0
        %3790 = vmatmul.mubr.f32.gmra.mrb[0].mxu0 %v3568
        %v3791 = vpop.f32.mrb[0].mxu0
        %v3792 = vadd.f32 0.0, %v3791
        %v3793 = vpop.f32.mrb[0].mxu0
        %3794 = vdwg.mxu0
        %v3796 = vsel %vm1103, %v3220, 0
        %v3799 = vsel %vm1103, %v3223, 0
        %v3802 = vsel %vm1103, %v3228, 0
        %v3805 = vsel %vm1103, %v3231, 0
        %v3808 = vsel %vm1103, %v3236, 0
        %v3811 = vsel %vm1103, %v3239, 0
        %v3814 = vsel %vm1103, %v3244, 0
        %v3817 = vsel %vm1103, %v3247, 0
        %v3820 = vsel %vm1103, %v3252, 0
        %v3823 = vsel %vm1103, %v3255, 0
        %v3826 = vsel %vm1103, %v3260, 0
        %v3829 = vsel %vm1103, %v3263, 0
        %v3832 = vsel %vm1103, %v3268, 0
        %v3835 = vsel %vm1103, %v3271, 0
        %v3838 = vsel %vm1103, %v3276, 0
        %v3841 = vsel %vm1103, %v3279, 0
        %v3844 = vsel %vm1103, %v3284, 0
        %v3847 = vsel %vm1103, %v3287, 0
        %v3850 = vsel %vm1103, %v3292, 0
        %v3853 = vsel %vm1103, %v3295, 0
        %v3856 = vsel %vm1103, %v3300, 0
        %v3859 = vsel %vm1103, %v3303, 0
        %v3862 = vsel %vm1103, %v3308, 0
        %v3865 = vsel %vm1103, %v3311, 0
        %v3868 = vsel %vm1103, %v3316, 0
        %v3871 = vsel %vm1103, %v3319, 0
        %v3874 = vsel %vm1103, %v3324, 0
        %v3877 = vsel %vm1103, %v3327, 0
        %v3880 = vsel %vm1103, %v3332, 0
        %v3883 = vsel %vm1103, %v3335, 0
        %v3886 = vsel %vm1103, %v3340, 0
        %v3889 = vsel %vm1103, %v3343, 0
        %3891 = vmatprep.subr.mxu0 0.0
        %3892 = vmatpush1.msra.mxu0 %v3168
        %3893 = vmatprep.subr.mxu0 0.0
        %3894 = vmatpush1.msra.mxu0 %v3169
        %3895 = vmatprep.subr.mxu0 0.0
        %3896 = vmatpush1.msra.mxu0 %v3170
        %3897 = vmatprep.subr.mxu0 0.0
        %3898 = vmatpush1.msra.mxu0 %v3171
        %3899 = vmatprep.subr.mxu0 0.0
        %3900 = vmatpush1.msra.mxu0 0.0
        %3901 = vmatprep.subr.mxu0 0.0
        %3902 = vmatpush1.msra.mxu0 0.0
        %3903 = vmatprep.subr.mxu0 0.0
        %3904 = vmatpush1.msra.mxu0 0.0
        %3905 = vmatprep.subr.mxu0 0.0
        %3906 = vmatpush1.msra.mxu0 0.0
        %3907 = vmatprep.subr.mxu0 0.0
        %3908 = vmatpush1.msra.mxu0 0.0
        %3909 = vmatprep.subr.mxu0 0.0
        %3910 = vmatpush1.msra.mxu0 0.0
        %3911 = vmatprep.subr.mxu0 0.0
        %3912 = vmatpush1.msra.mxu0 0.0
        %3913 = vmatprep.subr.mxu0 0.0
        %3914 = vmatpush1.msra.mxu0 0.0
        %3915 = vmatprep.subr.mxu0 0.0
        %3916 = vmatpush1.msra.mxu0 0.0
        %3917 = vmatprep.subr.mxu0 0.0
        %3918 = vmatpush1.msra.mxu0 0.0
        %3919 = vmatprep.subr.mxu0 0.0
        %3920 = vmatpush1.msra.mxu0 0.0
        %3921 = vmatprep.subr.mxu0 0.0
        %3922 = vmatpush1.msra.mxu0 0.0
        %3923 = vmatprep.subr.mxu0 0.0
        %3924 = vmatpush1.msra.mxu0 0.0
        %3925 = vmatprep.subr.mxu0 0.0
        %3926 = vmatpush1.msra.mxu0 0.0
        %3927 = vmatprep.subr.mxu0 0.0
        %3928 = vmatpush1.msra.mxu0 0.0
        %3929 = vmatprep.subr.mxu0 0.0
        %3930 = vmatpush1.msra.mxu0 0.0
        %3931 = vmatprep.subr.mxu0 0.0
        %3932 = vmatpush1.msra.mxu0 0.0
        %3933 = vmatprep.subr.mxu0 0.0
        %3934 = vmatpush1.msra.mxu0 0.0
        %3935 = vmatprep.subr.mxu0 0.0
        %3936 = vmatpush1.msra.mxu0 0.0
        %3937 = vmatprep.subr.mxu0 0.0
        %3938 = vmatpush1.msra.mxu0 0.0
        %3939 = vmatprep.subr.mxu0 0.0
        %3940 = vmatpush1.msra.mxu0 0.0
        %3941 = vmatprep.subr.mxu0 0.0
        %3942 = vmatpush1.msra.mxu0 0.0
        %3943 = vmatprep.subr.mxu0 0.0
        %3944 = vmatpush1.msra.mxu0 0.0
        %3945 = vmatprep.subr.mxu0 0.0
        %3946 = vmatpush1.msra.mxu0 0.0
        %3947 = vmatprep.subr.mxu0 0.0
        %3948 = vmatpush1.msra.mxu0 0.0
        %3949 = vmatprep.subr.mxu0 0.0
        %3950 = vmatpush1.msra.mxu0 0.0
        %3951 = vmatprep.subr.mxu0 0.0
        %3952 = vmatpush1.msra.mxu0 0.0
        %3953 = vmatprep.subr.mxu0 0.0
        %3954 = vmatpush1.msra.mxu0 0.0
        %3955 = vmatprep.mubr.f32.mxu0 0.0
        %3956 = vmatmul.mubr.f32.gmra.mrb[0].mxu0 %v3796
        %v3957 = vpop.f32.mrb[0].mxu0
        %v3958 = vadd.f32 %v3637, %v3957
        %v3959 = vpop.f32.mrb[0].mxu0
        %3960 = vmatprep.mubr.f32.mxu0 0.0
        %3961 = vmatmul.mubr.f32.gmra.mrb[0].mxu0 %v3799
        %v3962 = vpop.f32.mrb[0].mxu0
        %v3963 = vadd.f32 %v3642, %v3962
        %v3964 = vpop.f32.mrb[0].mxu0
        %3965 = vmatprep.mubr.f32.mxu0 0.0
        %3966 = vmatmul.mubr.f32.gmra.mrb[0].mxu0 %v3802
        %v3967 = vpop.f32.mrb[0].mxu0
        %v3968 = vadd.f32 %v3647, %v3967
        %v3969 = vpop.f32.mrb[0].mxu0
        %3970 = vmatprep.mubr.f32.mxu0 0.0
        %3971 = vmatmul.mubr.f32.gmra.mrb[0].mxu0 %v3805
        %v3972 = vpop.f32.mrb[0].mxu0
        %v3973 = vadd.f32 %v3652, %v3972
        %v3974 = vpop.f32.mrb[0].mxu0
        %3975 = vmatprep.mubr.f32.mxu0 0.0
        %3976 = vmatmul.mubr.f32.gmra.mrb[0].mxu0 %v3808
        %v3977 = vpop.f32.mrb[0].mxu0
        %v3978 = vadd.f32 %v3657, %v3977
        %v3979 = vpop.f32.mrb[0].mxu0
        %3980 = vmatprep.mubr.f32.mxu0 0.0
        %3981 = vmatmul.mubr.f32.gmra.mrb[0].mxu0 %v3811
        %v3982 = vpop.f32.mrb[0].mxu0
        %v3983 = vadd.f32 %v3662, %v3982
        %v3984 = vpop.f32.mrb[0].mxu0
        %3985 = vmatprep.mubr.f32.mxu0 0.0
        %3986 = vmatmul.mubr.f32.gmra.mrb[0].mxu0 %v3814
        %v3987 = vpop.f32.mrb[0].mxu0
        %v3988 = vadd.f32 %v3667, %v3987
        %v3989 = vpop.f32.mrb[0].mxu0
        %3990 = vmatprep.mubr.f32.mxu0 0.0
        %3991 = vmatmul.mubr.f32.gmra.mrb[0].mxu0 %v3817
        %v3992 = vpop.f32.mrb[0].mxu0
        %v3993 = vadd.f32 %v3672, %v3992
        %v3994 = vpop.f32.mrb[0].mxu0
        %3995 = vmatprep.mubr.f32.mxu0 0.0
        %3996 = vmatmul.mubr.f32.gmra.mrb[0].mxu0 %v3820
        %v3997 = vpop.f32.mrb[0].mxu0
        %v3998 = vadd.f32 %v3677, %v3997
        %v3999 = vpop.f32.mrb[0].mxu0
        %4000 = vmatprep.mubr.f32.mxu0 0.0
        %4001 = vmatmul.mubr.f32.gmra.mrb[0].mxu0 %v3823
        %v4002 = vpop.f32.mrb[0].mxu0
        %v4003 = vadd.f32 %v3682, %v4002
        %v4004 = vpop.f32.mrb[0].mxu0
        %4005 = vmatprep.mubr.f32.mxu0 0.0
        %4006 = vmatmul.mubr.f32.gmra.mrb[0].mxu0 %v3826
        %v4007 = vpop.f32.mrb[0].mxu0
        %v4008 = vadd.f32 %v3687, %v4007
        %v4009 = vpop.f32.mrb[0].mxu0
        %4010 = vmatprep.mubr.f32.mxu0 0.0
        %4011 = vmatmul.mubr.f32.gmra.mrb[0].mxu0 %v3829
        %v4012 = vpop.f32.mrb[0].mxu0
        %v4013 = vadd.f32 %v3692, %v4012
        %v4014 = vpop.f32.mrb[0].mxu0
        %4015 = vmatprep.mubr.f32.mxu0 0.0
        %4016 = vmatmul.mubr.f32.gmra.mrb[0].mxu0 %v3832
        %v4017 = vpop.f32.mrb[0].mxu0
        %v4018 = vadd.f32 %v3697, %v4017
        %v4019 = vpop.f32.mrb[0].mxu0
        %4020 = vmatprep.mubr.f32.mxu0 0.0
        %4021 = vmatmul.mubr.f32.gmra.mrb[0].mxu0 %v3835
        %v4022 = vpop.f32.mrb[0].mxu0
        %v4023 = vadd.f32 %v3702, %v4022
        %v4024 = vpop.f32.mrb[0].mxu0
        %4025 = vmatprep.mubr.f32.mxu0 0.0
        %4026 = vmatmul.mubr.f32.gmra.mrb[0].mxu0 %v3838
        %v4027 = vpop.f32.mrb[0].mxu0
        %v4028 = vadd.f32 %v3707, %v4027
        %v4029 = vpop.f32.mrb[0].mxu0
        %4030 = vmatprep.mubr.f32.mxu0 0.0
        %4031 = vmatmul.mubr.f32.gmra.mrb[0].mxu0 %v3841
        %v4032 = vpop.f32.mrb[0].mxu0
        %v4033 = vadd.f32 %v3712, %v4032
        %v4034 = vpop.f32.mrb[0].mxu0
        %4035 = vmatprep.mubr.f32.mxu0 0.0
        %4036 = vmatmul.mubr.f32.gmra.mrb[0].mxu0 %v3844
        %v4037 = vpop.f32.mrb[0].mxu0
        %v4038 = vadd.f32 %v3717, %v4037
        %v4039 = vpop.f32.mrb[0].mxu0
        %4040 = vmatprep.mubr.f32.mxu0 0.0
        %4041 = vmatmul.mubr.f32.gmra.mrb[0].mxu0 %v3847
        %v4042 = vpop.f32.mrb[0].mxu0
        %v4043 = vadd.f32 %v3722, %v4042
        %v4044 = vpop.f32.mrb[0].mxu0
        %4045 = vmatprep.mubr.f32.mxu0 0.0
        %4046 = vmatmul.mubr.f32.gmra.mrb[0].mxu0 %v3850
        %v4047 = vpop.f32.mrb[0].mxu0
        %v4048 = vadd.f32 %v3727, %v4047
        %v4049 = vpop.f32.mrb[0].mxu0
        %4050 = vmatprep.mubr.f32.mxu0 0.0
        %4051 = vmatmul.mubr.f32.gmra.mrb[0].mxu0 %v3853
        %v4052 = vpop.f32.mrb[0].mxu0
        %v4053 = vadd.f32 %v3732, %v4052
        %v4054 = vpop.f32.mrb[0].mxu0
        %4055 = vmatprep.mubr.f32.mxu0 0.0
        %4056 = vmatmul.mubr.f32.gmra.mrb[0].mxu0 %v3856
        %v4057 = vpop.f32.mrb[0].mxu0
        %v4058 = vadd.f32 %v3737, %v4057
        %v4059 = vpop.f32.mrb[0].mxu0
        %4060 = vmatprep.mubr.f32.mxu0 0.0
        %4061 = vmatmul.mubr.f32.gmra.mrb[0].mxu0 %v3859
        %v4062 = vpop.f32.mrb[0].mxu0
        %v4063 = vadd.f32 %v3742, %v4062
        %v4064 = vpop.f32.mrb[0].mxu0
        %4065 = vmatprep.mubr.f32.mxu0 0.0
        %4066 = vmatmul.mubr.f32.gmra.mrb[0].mxu0 %v3862
        %v4067 = vpop.f32.mrb[0].mxu0
        %v4068 = vadd.f32 %v3747, %v4067
        %v4069 = vpop.f32.mrb[0].mxu0
        %4070 = vmatprep.mubr.f32.mxu0 0.0
        %4071 = vmatmul.mubr.f32.gmra.mrb[0].mxu0 %v3865
        %v4072 = vpop.f32.mrb[0].mxu0
        %v4073 = vadd.f32 %v3752, %v4072
        %v4074 = vpop.f32.mrb[0].mxu0
        %4075 = vmatprep.mubr.f32.mxu0 0.0
        %4076 = vmatmul.mubr.f32.gmra.mrb[0].mxu0 %v3868
        %v4077 = vpop.f32.mrb[0].mxu0
        %v4078 = vadd.f32 %v3757, %v4077
        %v4079 = vpop.f32.mrb[0].mxu0
        %4080 = vmatprep.mubr.f32.mxu0 0.0
        %4081 = vmatmul.mubr.f32.gmra.mrb[0].mxu0 %v3871
        %v4082 = vpop.f32.mrb[0].mxu0
        %v4083 = vadd.f32 %v3762, %v4082
        %v4084 = vpop.f32.mrb[0].mxu0
        %4085 = vmatprep.mubr.f32.mxu0 0.0
        %4086 = vmatmul.mubr.f32.gmra.mrb[0].mxu0 %v3874
        %v4087 = vpop.f32.mrb[0].mxu0
        %v4088 = vadd.f32 %v3767, %v4087
        %v4089 = vpop.f32.mrb[0].mxu0
        %4090 = vmatprep.mubr.f32.mxu0 0.0
        %4091 = vmatmul.mubr.f32.gmra.mrb[0].mxu0 %v3877
        %v4092 = vpop.f32.mrb[0].mxu0
        %v4093 = vadd.f32 %v3772, %v4092
        %v4094 = vpop.f32.mrb[0].mxu0
        %4095 = vmatprep.mubr.f32.mxu0 0.0
        %4096 = vmatmul.mubr.f32.gmra.mrb[0].mxu0 %v3880
        %v4097 = vpop.f32.mrb[0].mxu0
        %v4098 = vadd.f32 %v3777, %v4097
        %v4099 = vpop.f32.mrb[0].mxu0
        %4100 = vmatprep.mubr.f32.mxu0 0.0
        %4101 = vmatmul.mubr.f32.gmra.mrb[0].mxu0 %v3883
        %v4102 = vpop.f32.mrb[0].mxu0
        %v4103 = vadd.f32 %v3782, %v4102
        %v4104 = vpop.f32.mrb[0].mxu0
        %4105 = vmatprep.mubr.f32.mxu0 0.0
        %4106 = vmatmul.mubr.f32.gmra.mrb[0].mxu0 %v3886
        %v4107 = vpop.f32.mrb[0].mxu0
        %v4108 = vadd.f32 %v3787, %v4107
        %v4109 = vpop.f32.mrb[0].mxu0
        %4110 = vmatprep.mubr.f32.mxu0 0.0
        %4111 = vmatmul.mubr.f32.gmra.mrb[0].mxu0 %v3889
        %v4112 = vpop.f32.mrb[0].mxu0
        %v4113 = vadd.f32 %v3792, %v4112
        %v4114 = vpop.f32.mrb[0].mxu0
        %4115 = vdwg.mxu0
        %v4116 = vlaneseq
        %v4117 = vshrl.u32 %v4116, 7
        %v4118 = vsub.s32 0, %v4117
        %v4119 = vrot.slane %v3176, %v4118
        %v4120 = vadd.f32 %v3958, %v4119
        %v4121 = vadd.f32 %v3963, %v4119
        %v4122 = vadd.f32 %v3968, %v4119
        %v4123 = vadd.f32 %v3973, %v4119
        %v4124 = vadd.f32 %v3978, %v4119
        %v4125 = vadd.f32 %v3983, %v4119
        %v4126 = vadd.f32 %v3988, %v4119
        %v4127 = vadd.f32 %v3993, %v4119
        %v4128 = vadd.f32 %v3998, %v4119
        %v4129 = vadd.f32 %v4003, %v4119
        %v4130 = vadd.f32 %v4008, %v4119
        %v4131 = vadd.f32 %v4013, %v4119
        %v4132 = vadd.f32 %v4018, %v4119
        %v4133 = vadd.f32 %v4023, %v4119
        %v4134 = vadd.f32 %v4028, %v4119
        %v4135 = vadd.f32 %v4033, %v4119
        %v4136 = vadd.f32 %v4038, %v4119
        %v4137 = vadd.f32 %v4043, %v4119
        %v4138 = vadd.f32 %v4048, %v4119
        %v4139 = vadd.f32 %v4053, %v4119
        %v4140 = vadd.f32 %v4058, %v4119
        %v4141 = vadd.f32 %v4063, %v4119
        %v4142 = vadd.f32 %v4068, %v4119
        %v4143 = vadd.f32 %v4073, %v4119
        %v4144 = vadd.f32 %v4078, %v4119
        %v4145 = vadd.f32 %v4083, %v4119
        %v4146 = vadd.f32 %v4088, %v4119
        %v4147 = vadd.f32 %v4093, %v4119
        %v4148 = vadd.f32 %v4098, %v4119
        %v4149 = vadd.f32 %v4103, %v4119
        %v4150 = vadd.f32 %v4108, %v4119
        %v4151 = vadd.f32 %v4113, %v4119
        %v4152 = vmax.f32 %v4120, 0.0
        %v4153 = vmax.f32 %v4121, 0.0
        %v4154 = vmax.f32 %v4122, 0.0
        %v4155 = vmax.f32 %v4123, 0.0
        %v4156 = vmax.f32 %v4124, 0.0
        %v4157 = vmax.f32 %v4125, 0.0
        %v4158 = vmax.f32 %v4126, 0.0
        %v4159 = vmax.f32 %v4127, 0.0
        %v4160 = vmax.f32 %v4128, 0.0
        %v4161 = vmax.f32 %v4129, 0.0
        %v4162 = vmax.f32 %v4130, 0.0
        %v4163 = vmax.f32 %v4131, 0.0
        %v4164 = vmax.f32 %v4132, 0.0
        %v4165 = vmax.f32 %v4133, 0.0
        %v4166 = vmax.f32 %v4134, 0.0
        %v4167 = vmax.f32 %v4135, 0.0
        %v4168 = vmax.f32 %v4136, 0.0
        %v4169 = vmax.f32 %v4137, 0.0
        %v4170 = vmax.f32 %v4138, 0.0
        %v4171 = vmax.f32 %v4139, 0.0
        %v4172 = vmax.f32 %v4140, 0.0
        %v4173 = vmax.f32 %v4141, 0.0
        %v4174 = vmax.f32 %v4142, 0.0
        %v4175 = vmax.f32 %v4143, 0.0
        %v4176 = vmax.f32 %v4144, 0.0
        %v4177 = vmax.f32 %v4145, 0.0
        %v4178 = vmax.f32 %v4146, 0.0
        %v4179 = vmax.f32 %v4147, 0.0
        %v4180 = vmax.f32 %v4148, 0.0
        %v4181 = vmax.f32 %v4149, 0.0
        %v4182 = vmax.f32 %v4150, 0.0
        %v4183 = vmax.f32 %v4151, 0.0
        %v4184 = vpack.c.bf16 %v4153, %v4152
        %v4185 = vpack.c.bf16 %v4155, %v4154
        %v4186 = vpack.c.bf16 %v4157, %v4156
        %v4187 = vpack.c.bf16 %v4159, %v4158
        %v4188 = vpack.c.bf16 %v4161, %v4160
        %v4189 = vpack.c.bf16 %v4163, %v4162
        %v4190 = vpack.c.bf16 %v4165, %v4164
        %v4191 = vpack.c.bf16 %v4167, %v4166
        %v4192 = vpack.c.bf16 %v4169, %v4168
        %v4193 = vpack.c.bf16 %v4171, %v4170
        %v4194 = vpack.c.bf16 %v4173, %v4172
        %v4195 = vpack.c.bf16 %v4175, %v4174
        %v4196 = vpack.c.bf16 %v4177, %v4176
        %v4197 = vpack.c.bf16 %v4179, %v4178
        %v4198 = vpack.c.bf16 %v4181, %v4180
        %v4199 = vpack.c.bf16 %v4183, %v4182
        %4200 = vmatprep.subr.bf16.mxu0 0
        %4201 = vmatpush1.bf16.msra.mxu0 %v4184
        %4202 = vmatprep.subr.bf16.mxu0 0
        %4203 = vmatpush1.bf16.msra.mxu0 %v4185
        %4204 = vmatprep.subr.bf16.mxu0 0
        %4205 = vmatpush1.bf16.msra.mxu0 %v4186
        %4206 = vmatprep.subr.bf16.mxu0 0
        %4207 = vmatpush1.bf16.msra.mxu0 %v4187
        %4208 = vmatprep.subr.bf16.mxu0 0
        %4209 = vmatpush1.bf16.msra.mxu0 %v4188
        %4210 = vmatprep.subr.bf16.mxu0 0
        %4211 = vmatpush1.bf16.msra.mxu0 %v4189
        %4212 = vmatprep.subr.bf16.mxu0 0
        %4213 = vmatpush1.bf16.msra.mxu0 %v4190
        %4214 = vmatprep.subr.bf16.mxu0 0
        %4215 = vmatpush1.bf16.msra.mxu0 %v4191
        %4216 = vmatprep.subr.bf16.mxu0 0
        %4217 = vmatpush1.bf16.msra.mxu0 %v4192
        %4218 = vmatprep.subr.bf16.mxu0 0
        %4219 = vmatpush1.bf16.msra.mxu0 %v4193
        %4220 = vmatprep.subr.bf16.mxu0 0
        %4221 = vmatpush1.bf16.msra.mxu0 %v4194
        %4222 = vmatprep.subr.bf16.mxu0 0
        %4223 = vmatpush1.bf16.msra.mxu0 %v4195
        %4224 = vmatprep.subr.bf16.mxu0 0
        %4225 = vmatpush1.bf16.msra.mxu0 %v4196
        %4226 = vmatprep.subr.bf16.mxu0 0
        %4227 = vmatpush1.bf16.msra.mxu0 %v4197
        %4228 = vmatprep.subr.bf16.mxu0 0
        %4229 = vmatpush1.bf16.msra.mxu0 %v4198
        %4230 = vmatprep.subr.bf16.mxu0 0
        %4231 = vmatpush1.bf16.msra.mxu0 %v4199
        %4232 = vmatprep.mubr.bf16.mxu0 %v1879
        %4233 = vmatmul.mubr.bf16.gmra.mrb[0].mxu0 %v1878
        %v4234 = vpop.f32.mrb[0].mxu0
        %v4235 = vadd.f32 0.0, %v4234
        %v4236 = vpop.f32.mrb[0].mxu0
        %v4237 = vpop.f32.mrb[0].mxu0
        %v4238 = vadd.f32 0.0, %v4237
        %v4239 = vpop.f32.mrb[0].mxu0
        %4240 = vmatprep.mubr.bf16.mxu0 %v1881
        %4241 = vmatmul.mubr.bf16.gmra.mrb[0].mxu0 %v1880
        %v4242 = vpop.f32.mrb[0].mxu0
        %v4243 = vadd.f32 0.0, %v4242
        %v4244 = vpop.f32.mrb[0].mxu0
        %v4245 = vpop.f32.mrb[0].mxu0
        %v4246 = vadd.f32 0.0, %v4245
        %v4247 = vpop.f32.mrb[0].mxu0
        %4248 = vmatprep.mubr.bf16.mxu0 %v1883
        %4249 = vmatmul.mubr.bf16.gmra.mrb[0].mxu0 %v1882
        %v4250 = vpop.f32.mrb[0].mxu0
        %v4251 = vadd.f32 0.0, %v4250
        %v4252 = vpop.f32.mrb[0].mxu0
        %v4253 = vpop.f32.mrb[0].mxu0
        %v4254 = vadd.f32 0.0, %v4253
        %v4255 = vpop.f32.mrb[0].mxu0
        %4256 = vmatprep.mubr.bf16.mxu0 %v1885
        %4257 = vmatmul.mubr.bf16.gmra.mrb[0].mxu0 %v1884
        %v4258 = vpop.f32.mrb[0].mxu0
        %v4259 = vadd.f32 0.0, %v4258
        %v4260 = vpop.f32.mrb[0].mxu0
        %v4261 = vpop.f32.mrb[0].mxu0
        %v4262 = vadd.f32 0.0, %v4261
        %v4263 = vpop.f32.mrb[0].mxu0
        %4264 = vmatprep.mubr.bf16.mxu0 %v1887
        %4265 = vmatmul.mubr.bf16.gmra.mrb[0].mxu0 %v1886
        %v4266 = vpop.f32.mrb[0].mxu0
        %v4267 = vadd.f32 0.0, %v4266
        %v4268 = vpop.f32.mrb[0].mxu0
        %v4269 = vpop.f32.mrb[0].mxu0
        %v4270 = vadd.f32 0.0, %v4269
        %v4271 = vpop.f32.mrb[0].mxu0
        %4272 = vmatprep.mubr.bf16.mxu0 %v1889
        %4273 = vmatmul.mubr.bf16.gmra.mrb[0].mxu0 %v1888
        %v4274 = vpop.f32.mrb[0].mxu0
        %v4275 = vadd.f32 0.0, %v4274
        %v4276 = vpop.f32.mrb[0].mxu0
        %v4277 = vpop.f32.mrb[0].mxu0
        %v4278 = vadd.f32 0.0, %v4277
        %v4279 = vpop.f32.mrb[0].mxu0
        %4280 = vmatprep.mubr.bf16.mxu0 %v1891
        %4281 = vmatmul.mubr.bf16.gmra.mrb[0].mxu0 %v1890
        %v4282 = vpop.f32.mrb[0].mxu0
        %v4283 = vadd.f32 0.0, %v4282
        %v4284 = vpop.f32.mrb[0].mxu0
        %v4285 = vpop.f32.mrb[0].mxu0
        %v4286 = vadd.f32 0.0, %v4285
        %v4287 = vpop.f32.mrb[0].mxu0
        %4288 = vmatprep.mubr.bf16.mxu0 %v1893
        %4289 = vmatmul.mubr.bf16.gmra.mrb[0].mxu0 %v1892
        %v4290 = vpop.f32.mrb[0].mxu0
        %v4291 = vadd.f32 0.0, %v4290
        %v4292 = vpop.f32.mrb[0].mxu0
        %v4293 = vpop.f32.mrb[0].mxu0
        %v4294 = vadd.f32 0.0, %v4293
        %v4295 = vpop.f32.mrb[0].mxu0
        %4296 = vdwg.mxu0
        %v4297 = vadd.f32 %v3152, %v4235
        %v4298 = vadd.f32 %v3153, %v4238
        %v4299 = vadd.f32 %v3154, %v4243
        %v4300 = vadd.f32 %v3155, %v4246
        %v4301 = vadd.f32 %v3156, %v4251
        %v4302 = vadd.f32 %v3157, %v4254
        %v4303 = vadd.f32 %v3158, %v4259
        %v4304 = vadd.f32 %v3159, %v4262
        %v4305 = vadd.f32 %v3160, %v4267
        %v4306 = vadd.f32 %v3161, %v4270
        %v4307 = vadd.f32 %v3162, %v4275
        %v4308 = vadd.f32 %v3163, %v4278
        %v4309 = vadd.f32 %v3164, %v4283
        %v4310 = vadd.f32 %v3165, %v4286
        %v4311 = vadd.f32 %v3166, %v4291
        %v4312 = vadd.f32 %v3167, %v4294
        %4313 = vst.msk [vmem:[%s290] sm:$0xff] %vm1103, %v4297
        %4314 = vst.msk [vmem:[%s290 + $0x8] sm:$0xff] %vm1103, %v4298
        %4315 = vst.msk [vmem:[%s290 + $0x10] sm:$0xff] %vm1103, %v4299
        %4316 = vst.msk [vmem:[%s290 + $0x18] sm:$0xff] %vm1103, %v4300
        %4317 = vst.msk [vmem:[%s290 + $0x20] sm:$0xff] %vm1103, %v4301
        %4318 = vst.msk [vmem:[%s290 + $0x28] sm:$0xff] %vm1103, %v4302
        %4319 = vst.msk [vmem:[%s290 + $0x30] sm:$0xff] %vm1103, %v4303
        %4320 = vst.msk [vmem:[%s290 + $0x38] sm:$0xff] %vm1103, %v4304
        %4321 = vst.msk [vmem:[%s290 + $0x40] sm:$0xff] %vm1103, %v4305
        %4322 = vst.msk [vmem:[%s290 + $0x48] sm:$0xff] %vm1103, %v4306
        %4323 = vst.msk [vmem:[%s290 + $0x50] sm:$0xff] %vm1103, %v4307
        %4324 = vst.msk [vmem:[%s290 + $0x58] sm:$0xff] %vm1103, %v4308
        %4325 = vst.msk [vmem:[%s290 + $0x60] sm:$0xff] %vm1103, %v4309
        %4326 = vst.msk [vmem:[%s290 + $0x68] sm:$0xff] %vm1103, %v4310
        %4327 = vst.msk [vmem:[%s290 + $0x70] sm:$0xff] %vm1103, %v4311
        %4328 = vst.msk [vmem:[%s290 + $0x78] sm:$0xff] %vm1103, %v4312
        %s4329 = smul.u32 16, %s19
        %p4330 = scmp.lt.s32.totalorder %s4329, 31
        %s4331 = scalar_select %p4330, %s4329, 31
        %s4332 = smul.addr %s4331, 8
        %s4333 = scalar_lea.vmem %s5, %s4332
        // Predicated region
        $region45: #{tpu_custom_call.1} parent=39 // pred_check
          %p4334 = pneg %p157
        $region46: #{tpu_custom_call.1} parent=39 // pred_check_branch
          %4336 = sbr.rel (%p4334) target = $region48
        $region47: #{tpu_custom_call.1} parent=39 // pred_region
          %s4337 = smul.u32 16, %s19
        $region48: #{tpu_custom_call.1} parent=39 // pred_fallthru
          _
      $region40: #{tpu_custom_call.1} parent=5 // pred_fallthru
        _
      %p4338 = scmp.le.s32.totalorder 2, %s14
      // Predicated region
      $region49: #{tpu_custom_call.1} parent=5 // pred_check
        %p4339 = pneg %p4338
      $region50: #{tpu_custom_call.1} parent=5 // pred_check_branch
        %4341 = sbr.rel (%p4339) target = $region52
      $region51: #{tpu_custom_call.1} parent=5 // pred_region
        %s4342 = ssub.s32 %s14, 2
        // Predicated region
        $region53: #{tpu_custom_call.1} parent=51 // pred_check
          %p4343 = pneg %p163
        $region54: #{tpu_custom_call.1} parent=51 // pred_check_branch
          %4345 = sbr.rel (%p4343) target = $region56
        $region55: #{tpu_custom_call.1} parent=51 // pred_region
          %s4346 = smul.u32 16, %s20
          %p4347 = scmp.lt.s32.totalorder %s4346, 31
          %s4348 = scalar_select %p4347, %s4346, 31
          %s4349 = smul.addr %s4348, 8
          %s4350 = scalar_lea.vmem %s5, %s4349
        $region56: #{tpu_custom_call.1} parent=51 // pred_fallthru
          _
      $region52: #{tpu_custom_call.1} parent=5 // pred_fallthru
        _
    $region6: #{tpu_custom_call.1} parent=1 // loop_footer
      %s18 = sadd.s32 1, %s14
    $region7: #{tpu_custom_call.1} parent=1 // loop_footer_branch
      %13 = sbr.rel target = $region3
    $region8: #{tpu_custom_call.1} parent=1 // loop_exit
      _
    %4351 = vsyncpa [#allocation3], 1
    %s4352 = scalar_lea.sflag [#allocation3], 1
    %4353 = vsyncpa %s4352, 1

</llo_original>
